<compile_context>
chip_gen: v6e
topology: v6e:2x2x1
jax: 0.10.0
libtpu: 0.0.40
codegen_flags: <defaults>
</compile_context>

<pallas_src>
import functools

import jax
import jax.numpy as jnp
from jax.experimental import pallas as pl
from jax.experimental.pallas import tpu as pltpu

D_IN = 500          # per-half feature width (sys / ref)
DP = 512            # 500 padded up to lane-aligned 512
DIM2 = 10           # hidden dim of li_1
TB = 256            # batch tile: multiple of 256 (v6e/v7x MXU) and of 128 (v5e MXU)
NEG_BIG = -1e30     # bias of padded mask columns -> exp underflows to exactly 0


def masked_model1_kernel(xs_ref, xr_ref, wm_ref, bm_ref,
                         w1_ref, b1_ref, wo_ref, bo_ref, out_ref):
    x_sys = xs_ref[...]                                   # (TB, 512) f32, cols 500:512 are 0
    x_ref = xr_ref[...]                                   # (TB, 512) f32, cols 500:512 are 0

    # mask projection: bf16 operands on the MXU, f32 accumulation
    proj = jnp.dot(x_ref.astype(jnp.bfloat16), wm_ref[...],
                   preferred_element_type=jnp.float32) + bm_ref[...]   # (TB, 512) f32

    # softmax over the feature axis; padded cols carry -1e30 -> exp == 0, so this equals
    # the original 500-wide softmax. Elementwise math stays f32 (v5e has no bf16 VPU/EUP).
    m = proj - jnp.max(proj, axis=-1, keepdims=True)
    e = jnp.exp(m)
    denom = jnp.sum(e, axis=-1, keepdims=True)
    mask = e * pl.reciprocal(denom, approx=True)          # EUP vrcp (free slot)

    masked_sys = mask * x_sys                             # (TB, 512); padded cols stay 0

    # h = tanh(masked @ W1^T + b1)  (W1 rows 500:512 are zero -> padding is transparent)
    h = jnp.tanh(jnp.dot(masked_sys, w1_ref[...],
                         preferred_element_type=jnp.float32) + b1_ref[...])   # (TB, 10)

    # final 10 -> 1 projection on VPU/XLU instead of an N=1 MXU pass
    out = jnp.sum(h * wo_ref[...], axis=-1, keepdims=True) + bo_ref[...]      # (TB, 1)
    out_ref[...] = out.astype(out_ref.dtype)


def stage_params(params):
    """One-time staging: pad contraction dims to 512, cast the big weight to bf16."""
    wm_t, bm, w1_t, b1, wo_t, bo = params
    wm_p = (jnp.zeros((DP, DP), jnp.float32)
            .at[:D_IN, :D_IN].set(wm_t).astype(jnp.bfloat16))          # (512, 512) bf16
    bm_p = jnp.full((1, DP), NEG_BIG, jnp.float32).at[:, :D_IN].set(bm)  # (1, 512)
    w1_p = jnp.zeros((DP, DIM2), jnp.float32).at[:D_IN, :].set(w1_t)     # (512, 10)
    wo_row = wo_t.reshape(1, DIM2)                                       # (1, 10)
    return wm_p, bm_p, w1_p, b1, wo_row, bo


@functools.partial(jax.jit, static_argnames=("tb",))
def masked_model1_forward(x, staged, tb=TB):
    """x: (B, 1000) f32 -> (B, 1) f32."""
    B = x.shape[0]
    assert x.shape[1] == 2 * D_IN
    g = pl.cdiv(B, tb)
    b_pad = g * tb

    # stage input once, 512-aligned: sys in cols [0:512), ref in cols [512:1024)
    x_sys = jnp.pad(x[:, :D_IN], ((0, b_pad - B), (0, DP - D_IN)))
    x_ref = jnp.pad(x[:, D_IN:], ((0, b_pad - B), (0, DP - D_IN)))
    xp = jnp.concatenate([x_sys, x_ref], axis=1)           # (b_pad, 1024)

    wm_p, bm_p, w1_p, b1, wo_row, bo = staged

    cost = pl.CostEstimate(
        flops=2 * b_pad * (DP * DP + DP * DIM2 + DIM2),
        transcendentals=b_pad * (DP + DIM2),
        bytes_accessed=b_pad * 2 * DP * 4 + DP * DP * 2 + b_pad * 4,
    )

    out = pl.pallas_call(
        masked_model1_kernel,
        out_shape=jax.ShapeDtypeStruct((b_pad, 1), jnp.float32),
        grid=(g,),
        in_specs=[
            pl.BlockSpec((tb, DP), lambda i: (i, 0)),      # sys half of the staged input
            pl.BlockSpec((tb, DP), lambda i: (i, 1)),      # ref half of the staged input
            pl.BlockSpec((DP, DP), lambda i: (0, 0)),      # wm (bf16), VMEM-resident
            pl.BlockSpec((1, DP), lambda i: (0, 0)),       # bm (padded cols = -1e30)
            pl.BlockSpec((DP, DIM2), lambda i: (0, 0)),    # w1
            pl.BlockSpec((1, DIM2), lambda i: (0, 0)),     # b1
            pl.BlockSpec((1, DIM2), lambda i: (0, 0)),     # wo row
            pl.BlockSpec((1, 1), lambda i: (0, 0)),        # bo
        ],
        out_specs=pl.BlockSpec((tb, 1), lambda i: (i, 0)),
        compiler_params=pltpu.CompilerParams(
            dimension_semantics=("parallel",),             # megacore sharding on v7x
            vmem_limit_bytes=32 * 1024 * 1024,             # safe on v5e/v6e/v7x; ~6 MiB used
        ),
        cost_estimate=cost,
    )(xp, xp, wm_p, bm_p, w1_p, b1, wo_row, bo)

    return out[:B]


def init_params(key):
    """PyTorch-style Linear init; weights returned pre-transposed (in, out), biases (1, out)."""
    k = jax.random.split(key, 6)

    def lin(kw, kb, fan_in, fan_out):
        bound = 1.0 / jnp.sqrt(fan_in)
        w = jax.random.uniform(kw, (fan_out, fan_in), jnp.float32, -bound, bound)
        b = jax.random.uniform(kb, (fan_out,), jnp.float32, -bound, bound)
        return w, b

    wm, bm = lin(k[0], k[1], D_IN, D_IN)     # li_mask: Linear(500, 500)
    w1, b1 = lin(k[2], k[3], D_IN, DIM2)     # li_1:    Linear(500, 10)
    wo, bo = lin(k[4], k[5], DIM2, 1)        # li_out:  Linear(10, 1)
    return (wm.T, bm[None, :], w1.T, b1[None, :], wo.T, bo[None, :])


def reference_forward(x, params):
    wm_t, bm, w1_t, b1, wo_t, bo = params
    x_sys, x_ref = x[:, :D_IN], x[:, D_IN:]
    proj = x_ref @ wm_t + bm
    mask = jax.nn.softmax(proj, axis=-1)
    masked = mask * x_sys
    h = jnp.tanh(masked @ w1_t + b1)
    return h @ wo_t + bo


if __name__ == "__main__":
    key = jax.random.PRNGKey(0)
    kx, kp = jax.random.split(key)

    B = 600  # not a multiple of TB -> exercises batch padding and a 3-step pipelined grid
    x = jax.random.normal(kx, (B, 2 * D_IN), dtype=jnp.float32)
    params = init_params(kp)
    staged = stage_params(params)

    out = masked_model1_forward(x, staged)
    out = jax.block_until_ready(out)

    ref = reference_forward(x, params)
    assert out.shape == (B, 1)
    # bf16 operands on the dominant matmul (f32 accumulation) -> ~1e-3-level deviation
    assert jnp.allclose(out, ref, atol=1e-2, rtol=1e-2), float(jnp.max(jnp.abs(out - ref)))

    print("KERNEL_OK")
</pallas_src>

<mosaic_0001>
module attributes {stable_mosaic.version = 11 : i64} {
  func.func @masked_model1_kernel(%arg0: i32, %arg1: memref<256x512xf32, #tpu.memory_space<vmem>>, %arg2: memref<256x512xf32, #tpu.memory_space<vmem>>, %arg3: memref<512x512xbf16, #tpu.memory_space<vmem>>, %arg4: memref<1x512xf32, #tpu.memory_space<vmem>>, %arg5: memref<512x10xf32, #tpu.memory_space<vmem>>, %arg6: memref<1x10xf32, #tpu.memory_space<vmem>>, %arg7: memref<1x10xf32, #tpu.memory_space<vmem>>, %arg8: memref<1x1xf32, #tpu.memory_space<vmem>>, %arg9: memref<256x1xf32, #tpu.memory_space<vmem>>) attributes {dimension_semantics = [#tpu.dimension_semantics<parallel>], iteration_bounds = array<i64: 3>, scalar_prefetch = 0 : i64, scratch_operands = 0 : i64, tpu.core_type = #tpu.core_type<tc>, window_params = [{transform_indices = @transform_0, window_bounds = array<i64: 256, 512>}, {transform_indices = @transform_1, window_bounds = array<i64: 256, 512>}, {pipeline_mode = #tpu.pipeline_mode<synchronous>, transform_indices = @transform_2, window_bounds = array<i64: 512, 512>}, {pipeline_mode = #tpu.pipeline_mode<synchronous>, transform_indices = @transform_3, window_bounds = array<i64: 1, 512>}, {pipeline_mode = #tpu.pipeline_mode<synchronous>, transform_indices = @transform_4, window_bounds = array<i64: 512, 10>}, {pipeline_mode = #tpu.pipeline_mode<synchronous>, transform_indices = @transform_5, window_bounds = array<i64: 1, 10>}, {pipeline_mode = #tpu.pipeline_mode<synchronous>, transform_indices = @transform_6, window_bounds = array<i64: 1, 10>}, {pipeline_mode = #tpu.pipeline_mode<synchronous>, transform_indices = @transform_7, window_bounds = array<i64: 1, 1>}, {transform_indices = @transform_8, window_bounds = array<i64: 256, 1>}]} {
    %c0 = arith.constant 0 : index
    %c0_0 = arith.constant 0 : index
    %0 = vector.load %arg1[%c0, %c0_0] : memref<256x512xf32, #tpu.memory_space<vmem>>, vector<256x512xf32>
    %c0_1 = arith.constant 0 : index
    %c0_2 = arith.constant 0 : index
    %1 = vector.load %arg2[%c0_1, %c0_2] : memref<256x512xf32, #tpu.memory_space<vmem>>, vector<256x512xf32>
    %2 = arith.truncf %1 : vector<256x512xf32> to vector<256x512xbf16>
    %c0_3 = arith.constant 0 : index
    %c0_4 = arith.constant 0 : index
    %3 = vector.load %arg3[%c0_3, %c0_4] : memref<512x512xbf16, #tpu.memory_space<vmem>>, vector<512x512xbf16>
    %cst = arith.constant dense<0.000000e+00> : vector<256x512xf32>
    %4 = tpu.matmul %2, %3, %cst {dimension_numbers = #tpu.dot_dimension_numbers<[1], [0], [0], [1], [0, 0, 1, 1], [], []>} : vector<256x512xbf16>, vector<512x512xbf16>, vector<256x512xf32> -> vector<256x512xf32>
    %c0_5 = arith.constant 0 : index
    %c0_6 = arith.constant 0 : index
    %5 = vector.load %arg4[%c0_5, %c0_6] : memref<1x512xf32, #tpu.memory_space<vmem>>, vector<1x512xf32>
    %6 = vector.broadcast %5 : vector<1x512xf32> to vector<256x512xf32>
    %7 = arith.addf %4, %6 : vector<256x512xf32>
    %cst_7 = arith.constant dense<0xFF800000> : vector<256xf32>
    %8 = vector.multi_reduction <maximumf>, %7, %cst_7 [1] : vector<256x512xf32> to vector<256xf32>
    %9 = vector.shape_cast %8 : vector<256xf32> to vector<256x1xf32>
    %10 = vector.broadcast %9 : vector<256x1xf32> to vector<256x512xf32>
    %11 = arith.subf %7, %10 : vector<256x512xf32>
    %12 = math.exp %11 : vector<256x512xf32>
    %cst_8 = arith.constant dense<0.000000e+00> : vector<256xf32>
    %13 = vector.multi_reduction <add>, %12, %cst_8 [1] : vector<256x512xf32> to vector<256xf32>
    %14 = vector.shape_cast %13 : vector<256xf32> to vector<256x1xf32>
    %15 = tpu.reciprocal %14 {approx = true} : vector<256x1xf32> -> vector<256x1xf32>
    %16 = vector.broadcast %15 : vector<256x1xf32> to vector<256x512xf32>
    %17 = arith.mulf %12, %16 : vector<256x512xf32>
    %18 = arith.mulf %17, %0 : vector<256x512xf32>
    %c0_9 = arith.constant 0 : index
    %c0_10 = arith.constant 0 : index
    %19 = vector.load %arg5[%c0_9, %c0_10] : memref<512x10xf32, #tpu.memory_space<vmem>>, vector<512x10xf32>
    %cst_11 = arith.constant dense<0.000000e+00> : vector<256x10xf32>
    %20 = tpu.matmul %18, %19, %cst_11 {dimension_numbers = #tpu.dot_dimension_numbers<[1], [0], [0], [1], [0, 0, 1, 1], [], []>} : vector<256x512xf32>, vector<512x10xf32>, vector<256x10xf32> -> vector<256x10xf32>
    %c0_12 = arith.constant 0 : index
    %c0_13 = arith.constant 0 : index
    %21 = vector.load %arg6[%c0_12, %c0_13] : memref<1x10xf32, #tpu.memory_space<vmem>>, vector<1x10xf32>
    %22 = vector.broadcast %21 : vector<1x10xf32> to vector<256x10xf32>
    %23 = arith.addf %20, %22 : vector<256x10xf32>
    %24 = math.tanh %23 : vector<256x10xf32>
    %c0_14 = arith.constant 0 : index
    %c0_15 = arith.constant 0 : index
    %25 = vector.load %arg7[%c0_14, %c0_15] : memref<1x10xf32, #tpu.memory_space<vmem>>, vector<1x10xf32>
    %26 = vector.broadcast %25 : vector<1x10xf32> to vector<256x10xf32>
    %27 = arith.mulf %24, %26 : vector<256x10xf32>
    %cst_16 = arith.constant dense<0.000000e+00> : vector<256xf32>
    %28 = vector.multi_reduction <add>, %27, %cst_16 [1] : vector<256x10xf32> to vector<256xf32>
    %29 = vector.shape_cast %28 : vector<256xf32> to vector<256x1xf32>
    %c0_17 = arith.constant 0 : index
    %c0_18 = arith.constant 0 : index
    %30 = vector.load %arg8[%c0_17, %c0_18] : memref<1x1xf32, #tpu.memory_space<vmem>>, vector<1x1xf32>
    %31 = vector.broadcast %30 : vector<1x1xf32> to vector<256x1xf32>
    %32 = arith.addf %29, %31 : vector<256x1xf32>
    %c0_19 = arith.constant 0 : index
    %c0_20 = arith.constant 0 : index
    %33 = vector.load %arg9[%c0_19, %c0_20] : memref<256x1xf32, #tpu.memory_space<vmem>>, vector<256x1xf32>
    tpu.vector_store %arg9[%c0_19, %c0_20], %32 {strides = array<i32>} : memref<256x1xf32, #tpu.memory_space<vmem>>, vector<256x1xf32>,
    return
  }
  func.func @transform_0(%arg0: i32) -> (i32, i32) {
    %c0_i32 = arith.constant 0 : i32
    %c0_i32_0 = arith.constant 0 : i32
    return %arg0, %c0_i32 : i32, i32
  }
  func.func @transform_1(%arg0: i32) -> (i32, i32) {
    %c1_i32 = arith.constant 1 : i32
    %c0_i32 = arith.constant 0 : i32
    return %arg0, %c1_i32 : i32, i32
  }
  func.func @transform_2(%arg0: i32) -> (i32, i32) {
    %c0_i32 = arith.constant 0 : i32
    %c0_i32_0 = arith.constant 0 : i32
    %c0_i32_1 = arith.constant 0 : i32
    return %c0_i32, %c0_i32_0 : i32, i32
  }
  func.func @transform_3(%arg0: i32) -> (i32, i32) {
    %c0_i32 = arith.constant 0 : i32
    %c0_i32_0 = arith.constant 0 : i32
    %c0_i32_1 = arith.constant 0 : i32
    return %c0_i32, %c0_i32_0 : i32, i32
  }
  func.func @transform_4(%arg0: i32) -> (i32, i32) {
    %c0_i32 = arith.constant 0 : i32
    %c0_i32_0 = arith.constant 0 : i32
    %c0_i32_1 = arith.constant 0 : i32
    return %c0_i32, %c0_i32_0 : i32, i32
  }
  func.func @transform_5(%arg0: i32) -> (i32, i32) {
    %c0_i32 = arith.constant 0 : i32
    %c0_i32_0 = arith.constant 0 : i32
    %c0_i32_1 = arith.constant 0 : i32
    return %c0_i32, %c0_i32_0 : i32, i32
  }
  func.func @transform_6(%arg0: i32) -> (i32, i32) {
    %c0_i32 = arith.constant 0 : i32
    %c0_i32_0 = arith.constant 0 : i32
    %c0_i32_1 = arith.constant 0 : i32
    return %c0_i32, %c0_i32_0 : i32, i32
  }
  func.func @transform_7(%arg0: i32) -> (i32, i32) {
    %c0_i32 = arith.constant 0 : i32
    %c0_i32_0 = arith.constant 0 : i32
    %c0_i32_1 = arith.constant 0 : i32
    return %c0_i32, %c0_i32_0 : i32, i32
  }
  func.func @transform_8(%arg0: i32) -> (i32, i32) {
    %c0_i32 = arith.constant 0 : i32
    %c0_i32_0 = arith.constant 0 : i32
    return %arg0, %c0_i32 : i32, i32
  }
}

</mosaic_0001>

<llo_original>
// kernel: masked_model1_forward.1
$region0: #{masked_model1_forward.1}
  #allocation0 [shape = 'u32[]', space=smem, size = 0x4, offset = 0x4, fixed_abs, tag = 'smem constant byte address 0x4 - core index']
  #allocation1 [shape = 'u32[144,128]{1,0:T(1,128)}', space=vmem, size = 0x12000, scoped, tag = 'internal scratch']
  #allocation2 [shape = 'f32[1,1]{1,0:T(1,128)S(1)}', space=vmem, size = 0x200, scoped, tag = 'scoped memory for masked_model1_forward.1']
  %s0 = inlined_call_operand.vmem [shape: f32[768,1024], index: 0, kind: input, shape index: {}, may-alias: {0,1}]
  %s1 = inlined_call_operand.vmem [shape: f32[768,1024], index: 1, kind: input, shape index: {}, may-alias: {0,1}]
  %s2 = inlined_call_operand.vmem [shape: bf16[512,512], index: 2, kind: input, shape index: {}]
  %s3 = inlined_call_operand.vmem [shape: f32[1,512], index: 3, kind: input, shape index: {}]
  %s4 = inlined_call_operand.vmem [shape: f32[512,10], index: 4, kind: input, shape index: {}]
  %s5 = inlined_call_operand.vmem [shape: f32[1,10], index: 5, kind: input, shape index: {}]
  %s6 = inlined_call_operand.vmem [shape: f32[1,10], index: 6, kind: input, shape index: {}]
  %s7 = inlined_call_operand.<no memory space> [shape: f32[1,1], index: 7, kind: input, shape index: {}]
  %s8 = inlined_call_operand.vmem [shape: f32[768,1], index: 8, kind: output, shape index: {}]
  %s9 = sld [smem:[#allocation0]]
  $region111: #{masked_model1_forward.1} parent=0
    _
  %s11 = ssub.s32 1, %s9
  %s12 = scalar_select 0, %s11, %s9
  %v13 = vstv %s7
  %14 = vst [vmem:[#allocation2] sm:$0x1] %v13
  $region1: #{masked_model1_forward.1} parent=0
    #allocation3 [shape = 'u8[1048576]{0}', space=vmem, size = 0x100000, scoped, tag = 'input window, operand 0']
    #allocation4 [shape = 'u8[1048576]{0}', space=vmem, size = 0x100000, scoped, tag = 'input window, operand 1']
    loop: start=0, step=1, limit=5
    $region2: #{masked_model1_forward.1} parent=1 // loop_pre_header
      _
    $region3: #{masked_model1_forward.1} parent=1 // loop_header
      %s16 = sphi 0, %s20
      %p17 = scmp.ge.s32.totalorder %s16, 5
      %s26 = sphi 0, %s28
      %s29 = sphi 0, %s26
      %s30 = sphi 0, %s29
      %s46 = sphi 0, %s30
      %s52 = sphi 0, %s54
      %s55 = sphi 0, %s52
      %s56 = sphi 0, %s55
      %s72 = sphi 0, %s56
      %s76 = sphi 0, %s76
      %s78 = sphi 0, %s76
      %s79 = sphi 0, %s78
      %s93 = sphi 0, %s79
      %s97 = sphi 0, %s97
      %s99 = sphi 0, %s97
      %s100 = sphi 0, %s99
      %s114 = sphi 0, %s100
      %s118 = sphi 0, %s118
      %s120 = sphi 0, %s118
      %s121 = sphi 0, %s120
      %s135 = sphi 0, %s121
      %s139 = sphi 0, %s139
      %s141 = sphi 0, %s139
      %s142 = sphi 0, %s141
      %s156 = sphi 0, %s142
      %s160 = sphi 0, %s160
      %s162 = sphi 0, %s160
      %s163 = sphi 0, %s162
      %s177 = sphi 0, %s163
      %s181 = sphi 0, %s181
      %s183 = sphi 0, %s181
      %s184 = sphi 0, %s183
      %s198 = sphi 0, %s184
      %s204 = sphi 0, %s206
      %s207 = sphi 0, %s204
      %s208 = sphi 0, %s207
      %s224 = sphi 0, %s208
    $region4: #{masked_model1_forward.1} parent=1 // loop_header_branch
      %19 = sbr.rel (%p17) target = $region8
    $region5: #{masked_model1_forward.1} parent=1 // loop_body
      %s21 = ssub.s32 %s16, 1
      %s22 = ssub.s32 %s16, 2
      %s23 = sadd.s32 %s16, 1
      %s24 = ssub.s32 %s16, %s23
      %p25 = scmp.eq.s32.totalorder %s24, 0
      %s27 = sadd.s32 %s26, 1
      %s28 = scalar_select %p25, %s26, %s27
      %p31 = pneg %p25
      %p32 = scmp.eq.s32.totalorder %s16, 2
      %p33 = por %p31, %p32
      %p34 = scmp.ne.s32.totalorder %s26, %s29
      %p35 = scmp.eq.s32.totalorder %s16, 0
      %p36 = por %p34, %p35
      %p37 = scmp.ne.s32.totalorder %s26, %s29
      %p38 = scmp.eq.s32.totalorder %s21, 2
      %p39 = por %p37, %p38
      %p40 = scmp.ne.s32.totalorder %s29, %s30
      %p41 = scmp.eq.s32.totalorder %s21, 0
      %p42 = por %p40, %p41
      %p43 = scmp.ne.s32.totalorder %s29, %s30
      %p44 = scmp.eq.s32.totalorder %s22, 2
      %p45 = por %p43, %p44
      %p47 = scmp.ne.s32.totalorder %s30, %s46
      %p48 = scmp.eq.s32.totalorder %s22, 0
      %p49 = por %p47, %p48
      %s50 = ssub.s32 %s16, %s23
      %p51 = scmp.eq.s32.totalorder %s50, 0
      %s53 = sadd.s32 %s52, 1
      %s54 = scalar_select %p51, %s52, %s53
      %p57 = pneg %p51
      %p58 = scmp.eq.s32.totalorder %s16, 2
      %p59 = por %p57, %p58
      %p60 = scmp.ne.s32.totalorder %s52, %s55
      %p61 = scmp.eq.s32.totalorder %s16, 0
      %p62 = por %p60, %p61
      %p63 = scmp.ne.s32.totalorder %s52, %s55
      %p64 = scmp.eq.s32.totalorder %s21, 2
      %p65 = por %p63, %p64
      %p66 = scmp.ne.s32.totalorder %s55, %s56
      %p67 = scmp.eq.s32.totalorder %s21, 0
      %p68 = por %p66, %p67
      %p69 = scmp.ne.s32.totalorder %s55, %s56
      %p70 = scmp.eq.s32.totalorder %s22, 2
      %p71 = por %p69, %p70
      %p73 = scmp.ne.s32.totalorder %s56, %s72
      %p74 = scmp.eq.s32.totalorder %s22, 0
      %p75 = por %p73, %p74
      %s77 = sadd.s32 %s76, 1
      %p80 = scmp.eq.s32.totalorder %s16, 2
      %p81 = scmp.ne.s32.totalorder %s76, %s78
      %p82 = scmp.eq.s32.totalorder %s16, 0
      %p83 = por %p81, %p82
      %p84 = scmp.ne.s32.totalorder %s76, %s78
      %p85 = scmp.eq.s32.totalorder %s21, 2
      %p86 = por %p84, %p85
      %p87 = scmp.ne.s32.totalorder %s78, %s79
      %p88 = scmp.eq.s32.totalorder %s21, 0
      %p89 = por %p87, %p88
      %p90 = scmp.ne.s32.totalorder %s78, %s79
      %p91 = scmp.eq.s32.totalorder %s22, 2
      %p92 = por %p90, %p91
      %p94 = scmp.ne.s32.totalorder %s79, %s93
      %p95 = scmp.eq.s32.totalorder %s22, 0
      %p96 = por %p94, %p95
      %s98 = sadd.s32 %s97, 1
      %p101 = scmp.eq.s32.totalorder %s16, 2
      %p102 = scmp.ne.s32.totalorder %s97, %s99
      %p103 = scmp.eq.s32.totalorder %s16, 0
      %p104 = por %p102, %p103
      %p105 = scmp.ne.s32.totalorder %s97, %s99
      %p106 = scmp.eq.s32.totalorder %s21, 2
      %p107 = por %p105, %p106
      %p108 = scmp.ne.s32.totalorder %s99, %s100
      %p109 = scmp.eq.s32.totalorder %s21, 0
      %p110 = por %p108, %p109
      %p111 = scmp.ne.s32.totalorder %s99, %s100
      %p112 = scmp.eq.s32.totalorder %s22, 2
      %p113 = por %p111, %p112
      %p115 = scmp.ne.s32.totalorder %s100, %s114
      %p116 = scmp.eq.s32.totalorder %s22, 0
      %p117 = por %p115, %p116
      %s119 = sadd.s32 %s118, 1
      %p122 = scmp.eq.s32.totalorder %s16, 2
      %p123 = scmp.ne.s32.totalorder %s118, %s120
      %p124 = scmp.eq.s32.totalorder %s16, 0
      %p125 = por %p123, %p124
      %p126 = scmp.ne.s32.totalorder %s118, %s120
      %p127 = scmp.eq.s32.totalorder %s21, 2
      %p128 = por %p126, %p127
      %p129 = scmp.ne.s32.totalorder %s120, %s121
      %p130 = scmp.eq.s32.totalorder %s21, 0
      %p131 = por %p129, %p130
      %p132 = scmp.ne.s32.totalorder %s120, %s121
      %p133 = scmp.eq.s32.totalorder %s22, 2
      %p134 = por %p132, %p133
      %p136 = scmp.ne.s32.totalorder %s121, %s135
      %p137 = scmp.eq.s32.totalorder %s22, 0
      %p138 = por %p136, %p137
      %s140 = sadd.s32 %s139, 1
      %p143 = scmp.eq.s32.totalorder %s16, 2
      %p144 = scmp.ne.s32.totalorder %s139, %s141
      %p145 = scmp.eq.s32.totalorder %s16, 0
      %p146 = por %p144, %p145
      %p147 = scmp.ne.s32.totalorder %s139, %s141
      %p148 = scmp.eq.s32.totalorder %s21, 2
      %p149 = por %p147, %p148
      %p150 = scmp.ne.s32.totalorder %s141, %s142
      %p151 = scmp.eq.s32.totalorder %s21, 0
      %p152 = por %p150, %p151
      %p153 = scmp.ne.s32.totalorder %s141, %s142
      %p154 = scmp.eq.s32.totalorder %s22, 2
      %p155 = por %p153, %p154
      %p157 = scmp.ne.s32.totalorder %s142, %s156
      %p158 = scmp.eq.s32.totalorder %s22, 0
      %p159 = por %p157, %p158
      %s161 = sadd.s32 %s160, 1
      %p164 = scmp.eq.s32.totalorder %s16, 2
      %p165 = scmp.ne.s32.totalorder %s160, %s162
      %p166 = scmp.eq.s32.totalorder %s16, 0
      %p167 = por %p165, %p166
      %p168 = scmp.ne.s32.totalorder %s160, %s162
      %p169 = scmp.eq.s32.totalorder %s21, 2
      %p170 = por %p168, %p169
      %p171 = scmp.ne.s32.totalorder %s162, %s163
      %p172 = scmp.eq.s32.totalorder %s21, 0
      %p173 = por %p171, %p172
      %p174 = scmp.ne.s32.totalorder %s162, %s163
      %p175 = scmp.eq.s32.totalorder %s22, 2
      %p176 = por %p174, %p175
      %p178 = scmp.ne.s32.totalorder %s163, %s177
      %p179 = scmp.eq.s32.totalorder %s22, 0
      %p180 = por %p178, %p179
      %s182 = sadd.s32 %s181, 1
      %p185 = scmp.eq.s32.totalorder %s16, 2
      %p186 = scmp.ne.s32.totalorder %s181, %s183
      %p187 = scmp.eq.s32.totalorder %s16, 0
      %p188 = por %p186, %p187
      %p189 = scmp.ne.s32.totalorder %s181, %s183
      %p190 = scmp.eq.s32.totalorder %s21, 2
      %p191 = por %p189, %p190
      %p192 = scmp.ne.s32.totalorder %s183, %s184
      %p193 = scmp.eq.s32.totalorder %s21, 0
      %p194 = por %p192, %p193
      %p195 = scmp.ne.s32.totalorder %s183, %s184
      %p196 = scmp.eq.s32.totalorder %s22, 2
      %p197 = por %p195, %p196
      %p199 = scmp.ne.s32.totalorder %s184, %s198
      %p200 = scmp.eq.s32.totalorder %s22, 0
      %p201 = por %p199, %p200
      %s202 = ssub.s32 %s16, %s23
      %p203 = scmp.eq.s32.totalorder %s202, 0
      %s205 = sadd.s32 %s204, 1
      %s206 = scalar_select %p203, %s204, %s205
      %p209 = pneg %p203
      %p210 = scmp.eq.s32.totalorder %s16, 2
      %p211 = por %p209, %p210
      %p212 = scmp.ne.s32.totalorder %s204, %s207
      %p213 = scmp.eq.s32.totalorder %s16, 0
      %p214 = por %p212, %p213
      %p215 = scmp.ne.s32.totalorder %s204, %s207
      %p216 = scmp.eq.s32.totalorder %s21, 2
      %p217 = por %p215, %p216
      %p218 = scmp.ne.s32.totalorder %s207, %s208
      %p219 = scmp.eq.s32.totalorder %s21, 0
      %p220 = por %p218, %p219
      %p221 = scmp.ne.s32.totalorder %s207, %s208
      %p222 = scmp.eq.s32.totalorder %s22, 2
      %p223 = por %p221, %p222
      %p225 = scmp.ne.s32.totalorder %s208, %s224
      %p226 = scmp.eq.s32.totalorder %s22, 0
      %p227 = por %p225, %p226
      %p228 = scmp.le.s32.totalorder 1, %s16
      %p229 = scmp.lt.s32.totalorder %s16, 4
      %p230 = pnand %p228, %p229
      %p231 = pneg %p230
      // Predicated region
      $region9: #{masked_model1_forward.1} parent=5 // pred_check
        _
      $region10: #{masked_model1_forward.1} parent=5 // pred_check_branch
        %233 = sbr.rel (%p230) target = $region12
      $region11: #{masked_model1_forward.1} parent=5 // pred_region
        %s234 = ssub.s32 %s16, 1
        // Predicated region
        $region13: #{masked_model1_forward.1} parent=11 // pred_check
          %p235 = pneg %p89
        $region14: #{masked_model1_forward.1} parent=11 // pred_check_branch
          %237 = sbr.rel (%p235) target = $region16
        $region15: #{masked_model1_forward.1} parent=11 // pred_region
          _
        $region16: #{masked_model1_forward.1} parent=11 // pred_fallthru
          _
        // Predicated region
        $region17: #{masked_model1_forward.1} parent=11 // pred_check
          %p238 = pneg %p110
        $region18: #{masked_model1_forward.1} parent=11 // pred_check_branch
          %240 = sbr.rel (%p238) target = $region20
        $region19: #{masked_model1_forward.1} parent=11 // pred_region
          _
        $region20: #{masked_model1_forward.1} parent=11 // pred_fallthru
          _
        // Predicated region
        $region21: #{masked_model1_forward.1} parent=11 // pred_check
          %p241 = pneg %p131
        $region22: #{masked_model1_forward.1} parent=11 // pred_check_branch
          %243 = sbr.rel (%p241) target = $region24
        $region23: #{masked_model1_forward.1} parent=11 // pred_region
          _
        $region24: #{masked_model1_forward.1} parent=11 // pred_fallthru
          _
        // Predicated region
        $region25: #{masked_model1_forward.1} parent=11 // pred_check
          %p244 = pneg %p152
        $region26: #{masked_model1_forward.1} parent=11 // pred_check_branch
          %246 = sbr.rel (%p244) target = $region28
        $region27: #{masked_model1_forward.1} parent=11 // pred_region
          _
        $region28: #{masked_model1_forward.1} parent=11 // pred_fallthru
          _
        // Predicated region
        $region29: #{masked_model1_forward.1} parent=11 // pred_check
          %p247 = pneg %p173
        $region30: #{masked_model1_forward.1} parent=11 // pred_check_branch
          %249 = sbr.rel (%p247) target = $region32
        $region31: #{masked_model1_forward.1} parent=11 // pred_region
          _
        $region32: #{masked_model1_forward.1} parent=11 // pred_fallthru
          _
        // Predicated region
        $region33: #{masked_model1_forward.1} parent=11 // pred_check
          %p250 = pneg %p194
        $region34: #{masked_model1_forward.1} parent=11 // pred_check_branch
          %252 = sbr.rel (%p250) target = $region36
        $region35: #{masked_model1_forward.1} parent=11 // pred_region
          _
        $region36: #{masked_model1_forward.1} parent=11 // pred_fallthru
          _
      $region12: #{masked_model1_forward.1} parent=5 // pred_fallthru
        _
      %p253 = scmp.lt.s32.totalorder %s16, 3
      // Predicated region
      $region37: #{masked_model1_forward.1} parent=5 // pred_check
        %p254 = pneg %p253
      $region38: #{masked_model1_forward.1} parent=5 // pred_check_branch
        %256 = sbr.rel (%p254) target = $region40
      $region39: #{masked_model1_forward.1} parent=5 // pred_region
        // Predicated region
        $region41: #{masked_model1_forward.1} parent=39 // pred_check
          %p257 = pneg %p36
        $region42: #{masked_model1_forward.1} parent=39 // pred_check_branch
          %259 = sbr.rel (%p257) target = $region44
        $region43: #{masked_model1_forward.1} parent=39 // pred_region
          %s260 = sand.u32 %s26, 1
          %s261 = sand.u32 %s26, 1
          %s262 = smul.addr %s261, 1024
          %s263 = scalar_lea.vmem [#allocation3], %s262
          %s264 = smul.u32 32, %s16
          %s265 = smul.addr %s264, 8
          %s266 = smul.addr %s265, 8
          %s267 = scalar_lea.vmem %s0, %s266
          // Predicated region
          $region45: #{masked_model1_forward.1} parent=43 // pred_check
            _
          $region46: #{masked_model1_forward.1} parent=43 // pred_check_branch
            %269 = sbr.rel (0) target = $region48
          $region47: #{masked_model1_forward.1} parent=43 // pred_region
            // Predicated region
            $region49: #{masked_model1_forward.1} parent=47 // pred_check
              _
            $region50: #{masked_model1_forward.1} parent=47 // pred_check_branch
              %271 = sbr.rel (0) target = $region52
            $region51: #{masked_model1_forward.1} parent=47 // pred_region
              loop: start=0, step=1, limit=1
              $region53: #{masked_model1_forward.1} parent=51 // loop_pre_header
                _
              $region54: #{masked_model1_forward.1} parent=51 // loop_header
                %s273 = sphi 0, %s277
                %p274 = scmp.ge.s32.totalorder %s273, 1
                %s278 = sphi %s267, %s267
                %s279 = sphi %s263, %s263
              $region55: #{masked_model1_forward.1} parent=51 // loop_header_branch
                %276 = sbr.rel (%p274) target = $region59
              $region56: #{masked_model1_forward.1} parent=51 // loop_body
                %v280 = vld [vmem:[%s278] sm:$0xff]
                %281 = vst [vmem:[%s279] sm:$0xff] %v280
                %v282 = vld [vmem:[%s278 + $0x8] sm:$0xff]
                %283 = vst [vmem:[%s279 + $0x8] sm:$0xff] %v282
                %v284 = vld [vmem:[%s278 + $0x10] sm:$0xff]
                %285 = vst [vmem:[%s279 + $0x10] sm:$0xff] %v284
                %v286 = vld [vmem:[%s278 + $0x18] sm:$0xff]
                %287 = vst [vmem:[%s279 + $0x18] sm:$0xff] %v286
                %v288 = vld [vmem:[%s278 + $0x40] sm:$0xff]
                %289 = vst [vmem:[%s279 + $0x20] sm:$0xff] %v288
                %v290 = vld [vmem:[%s278 + $0x48] sm:$0xff]
                %291 = vst [vmem:[%s279 + $0x28] sm:$0xff] %v290
                %v292 = vld [vmem:[%s278 + $0x50] sm:$0xff]
                %293 = vst [vmem:[%s279 + $0x30] sm:$0xff] %v292
                %v294 = vld [vmem:[%s278 + $0x58] sm:$0xff]
                %295 = vst [vmem:[%s279 + $0x38] sm:$0xff] %v294
                %v296 = vld [vmem:[%s278 + $0x80] sm:$0xff]
                %297 = vst [vmem:[%s279 + $0x40] sm:$0xff] %v296
                %v298 = vld [vmem:[%s278 + $0x88] sm:$0xff]
                %299 = vst [vmem:[%s279 + $0x48] sm:$0xff] %v298
                %v300 = vld [vmem:[%s278 + $0x90] sm:$0xff]
                %301 = vst [vmem:[%s279 + $0x50] sm:$0xff] %v300
                %v302 = vld [vmem:[%s278 + $0x98] sm:$0xff]
                %303 = vst [vmem:[%s279 + $0x58] sm:$0xff] %v302
                %v304 = vld [vmem:[%s278 + $0xc0] sm:$0xff]
                %305 = vst [vmem:[%s279 + $0x60] sm:$0xff] %v304
                %v306 = vld [vmem:[%s278 + $0xc8] sm:$0xff]
                %307 = vst [vmem:[%s279 + $0x68] sm:$0xff] %v306
                %v308 = vld [vmem:[%s278 + $0xd0] sm:$0xff]
                %309 = vst [vmem:[%s279 + $0x70] sm:$0xff] %v308
                %v310 = vld [vmem:[%s278 + $0xd8] sm:$0xff]
                %311 = vst [vmem:[%s279 + $0x78] sm:$0xff] %v310
                %v312 = vld [vmem:[%s278 + $0x100] sm:$0xff]
                %313 = vst [vmem:[%s279 + $0x80] sm:$0xff] %v312
                %v314 = vld [vmem:[%s278 + $0x108] sm:$0xff]
                %315 = vst [vmem:[%s279 + $0x88] sm:$0xff] %v314
                %v316 = vld [vmem:[%s278 + $0x110] sm:$0xff]
                %317 = vst [vmem:[%s279 + $0x90] sm:$0xff] %v316
                %v318 = vld [vmem:[%s278 + $0x118] sm:$0xff]
                %319 = vst [vmem:[%s279 + $0x98] sm:$0xff] %v318
                %v320 = vld [vmem:[%s278 + $0x140] sm:$0xff]
                %321 = vst [vmem:[%s279 + $0xa0] sm:$0xff] %v320
                %v322 = vld [vmem:[%s278 + $0x148] sm:$0xff]
                %323 = vst [vmem:[%s279 + $0xa8] sm:$0xff] %v322
                %v324 = vld [vmem:[%s278 + $0x150] sm:$0xff]
                %325 = vst [vmem:[%s279 + $0xb0] sm:$0xff] %v324
                %v326 = vld [vmem:[%s278 + $0x158] sm:$0xff]
                %327 = vst [vmem:[%s279 + $0xb8] sm:$0xff] %v326
                %v328 = vld [vmem:[%s278 + $0x180] sm:$0xff]
                %329 = vst [vmem:[%s279 + $0xc0] sm:$0xff] %v328
                %v330 = vld [vmem:[%s278 + $0x188] sm:$0xff]
                %331 = vst [vmem:[%s279 + $0xc8] sm:$0xff] %v330
                %v332 = vld [vmem:[%s278 + $0x190] sm:$0xff]
                %333 = vst [vmem:[%s279 + $0xd0] sm:$0xff] %v332
                %v334 = vld [vmem:[%s278 + $0x198] sm:$0xff]
                %335 = vst [vmem:[%s279 + $0xd8] sm:$0xff] %v334
                %v336 = vld [vmem:[%s278 + $0x1c0] sm:$0xff]
                %337 = vst [vmem:[%s279 + $0xe0] sm:$0xff] %v336
                %v338 = vld [vmem:[%s278 + $0x1c8] sm:$0xff]
                %339 = vst [vmem:[%s279 + $0xe8] sm:$0xff] %v338
                %v340 = vld [vmem:[%s278 + $0x1d0] sm:$0xff]
                %341 = vst [vmem:[%s279 + $0xf0] sm:$0xff] %v340
                %v342 = vld [vmem:[%s278 + $0x1d8] sm:$0xff]
                %343 = vst [vmem:[%s279 + $0xf8] sm:$0xff] %v342
                %v344 = vld [vmem:[%s278 + $0x200] sm:$0xff]
                %345 = vst [vmem:[%s279 + $0x100] sm:$0xff] %v344
                %v346 = vld [vmem:[%s278 + $0x208] sm:$0xff]
                %347 = vst [vmem:[%s279 + $0x108] sm:$0xff] %v346
                %v348 = vld [vmem:[%s278 + $0x210] sm:$0xff]
                %349 = vst [vmem:[%s279 + $0x110] sm:$0xff] %v348
                %v350 = vld [vmem:[%s278 + $0x218] sm:$0xff]
                %351 = vst [vmem:[%s279 + $0x118] sm:$0xff] %v350
                %v352 = vld [vmem:[%s278 + $0x240] sm:$0xff]
                %353 = vst [vmem:[%s279 + $0x120] sm:$0xff] %v352
                %v354 = vld [vmem:[%s278 + $0x248] sm:$0xff]
                %355 = vst [vmem:[%s279 + $0x128] sm:$0xff] %v354
                %v356 = vld [vmem:[%s278 + $0x250] sm:$0xff]
                %357 = vst [vmem:[%s279 + $0x130] sm:$0xff] %v356
                %v358 = vld [vmem:[%s278 + $0x258] sm:$0xff]
                %359 = vst [vmem:[%s279 + $0x138] sm:$0xff] %v358
                %v360 = vld [vmem:[%s278 + $0x280] sm:$0xff]
                %361 = vst [vmem:[%s279 + $0x140] sm:$0xff] %v360
                %v362 = vld [vmem:[%s278 + $0x288] sm:$0xff]
                %363 = vst [vmem:[%s279 + $0x148] sm:$0xff] %v362
                %v364 = vld [vmem:[%s278 + $0x290] sm:$0xff]
                %365 = vst [vmem:[%s279 + $0x150] sm:$0xff] %v364
                %v366 = vld [vmem:[%s278 + $0x298] sm:$0xff]
                %367 = vst [vmem:[%s279 + $0x158] sm:$0xff] %v366
                %v368 = vld [vmem:[%s278 + $0x2c0] sm:$0xff]
                %369 = vst [vmem:[%s279 + $0x160] sm:$0xff] %v368
                %v370 = vld [vmem:[%s278 + $0x2c8] sm:$0xff]
                %371 = vst [vmem:[%s279 + $0x168] sm:$0xff] %v370
                %v372 = vld [vmem:[%s278 + $0x2d0] sm:$0xff]
                %373 = vst [vmem:[%s279 + $0x170] sm:$0xff] %v372
                %v374 = vld [vmem:[%s278 + $0x2d8] sm:$0xff]
                %375 = vst [vmem:[%s279 + $0x178] sm:$0xff] %v374
                %v376 = vld [vmem:[%s278 + $0x300] sm:$0xff]
                %377 = vst [vmem:[%s279 + $0x180] sm:$0xff] %v376
                %v378 = vld [vmem:[%s278 + $0x308] sm:$0xff]
                %379 = vst [vmem:[%s279 + $0x188] sm:$0xff] %v378
                %v380 = vld [vmem:[%s278 + $0x310] sm:$0xff]
                %381 = vst [vmem:[%s279 + $0x190] sm:$0xff] %v380
                %v382 = vld [vmem:[%s278 + $0x318] sm:$0xff]
                %383 = vst [vmem:[%s279 + $0x198] sm:$0xff] %v382
                %v384 = vld [vmem:[%s278 + $0x340] sm:$0xff]
                %385 = vst [vmem:[%s279 + $0x1a0] sm:$0xff] %v384
                %v386 = vld [vmem:[%s278 + $0x348] sm:$0xff]
                %387 = vst [vmem:[%s279 + $0x1a8] sm:$0xff] %v386
                %v388 = vld [vmem:[%s278 + $0x350] sm:$0xff]
                %389 = vst [vmem:[%s279 + $0x1b0] sm:$0xff] %v388
                %v390 = vld [vmem:[%s278 + $0x358] sm:$0xff]
                %391 = vst [vmem:[%s279 + $0x1b8] sm:$0xff] %v390
                %v392 = vld [vmem:[%s278 + $0x380] sm:$0xff]
                %393 = vst [vmem:[%s279 + $0x1c0] sm:$0xff] %v392
                %v394 = vld [vmem:[%s278 + $0x388] sm:$0xff]
                %395 = vst [vmem:[%s279 + $0x1c8] sm:$0xff] %v394
                %v396 = vld [vmem:[%s278 + $0x390] sm:$0xff]
                %397 = vst [vmem:[%s279 + $0x1d0] sm:$0xff] %v396
                %v398 = vld [vmem:[%s278 + $0x398] sm:$0xff]
                %399 = vst [vmem:[%s279 + $0x1d8] sm:$0xff] %v398
                %v400 = vld [vmem:[%s278 + $0x3c0] sm:$0xff]
                %401 = vst [vmem:[%s279 + $0x1e0] sm:$0xff] %v400
                %v402 = vld [vmem:[%s278 + $0x3c8] sm:$0xff]
                %403 = vst [vmem:[%s279 + $0x1e8] sm:$0xff] %v402
                %v404 = vld [vmem:[%s278 + $0x3d0] sm:$0xff]
                %405 = vst [vmem:[%s279 + $0x1f0] sm:$0xff] %v404
                %v406 = vld [vmem:[%s278 + $0x3d8] sm:$0xff]
                %407 = vst [vmem:[%s279 + $0x1f8] sm:$0xff] %v406
                %v408 = vld [vmem:[%s278 + $0x400] sm:$0xff]
                %409 = vst [vmem:[%s279 + $0x200] sm:$0xff] %v408
                %v410 = vld [vmem:[%s278 + $0x408] sm:$0xff]
                %411 = vst [vmem:[%s279 + $0x208] sm:$0xff] %v410
                %v412 = vld [vmem:[%s278 + $0x410] sm:$0xff]
                %413 = vst [vmem:[%s279 + $0x210] sm:$0xff] %v412
                %v414 = vld [vmem:[%s278 + $0x418] sm:$0xff]
                %415 = vst [vmem:[%s279 + $0x218] sm:$0xff] %v414
                %v416 = vld [vmem:[%s278 + $0x440] sm:$0xff]
                %417 = vst [vmem:[%s279 + $0x220] sm:$0xff] %v416
                %v418 = vld [vmem:[%s278 + $0x448] sm:$0xff]
                %419 = vst [vmem:[%s279 + $0x228] sm:$0xff] %v418
                %v420 = vld [vmem:[%s278 + $0x450] sm:$0xff]
                %421 = vst [vmem:[%s279 + $0x230] sm:$0xff] %v420
                %v422 = vld [vmem:[%s278 + $0x458] sm:$0xff]
                %423 = vst [vmem:[%s279 + $0x238] sm:$0xff] %v422
                %v424 = vld [vmem:[%s278 + $0x480] sm:$0xff]
                %425 = vst [vmem:[%s279 + $0x240] sm:$0xff] %v424
                %v426 = vld [vmem:[%s278 + $0x488] sm:$0xff]
                %427 = vst [vmem:[%s279 + $0x248] sm:$0xff] %v426
                %v428 = vld [vmem:[%s278 + $0x490] sm:$0xff]
                %429 = vst [vmem:[%s279 + $0x250] sm:$0xff] %v428
                %v430 = vld [vmem:[%s278 + $0x498] sm:$0xff]
                %431 = vst [vmem:[%s279 + $0x258] sm:$0xff] %v430
                %v432 = vld [vmem:[%s278 + $0x4c0] sm:$0xff]
                %433 = vst [vmem:[%s279 + $0x260] sm:$0xff] %v432
                %v434 = vld [vmem:[%s278 + $0x4c8] sm:$0xff]
                %435 = vst [vmem:[%s279 + $0x268] sm:$0xff] %v434
                %v436 = vld [vmem:[%s278 + $0x4d0] sm:$0xff]
                %437 = vst [vmem:[%s279 + $0x270] sm:$0xff] %v436
                %v438 = vld [vmem:[%s278 + $0x4d8] sm:$0xff]
                %439 = vst [vmem:[%s279 + $0x278] sm:$0xff] %v438
                %v440 = vld [vmem:[%s278 + $0x500] sm:$0xff]
                %441 = vst [vmem:[%s279 + $0x280] sm:$0xff] %v440
                %v442 = vld [vmem:[%s278 + $0x508] sm:$0xff]
                %443 = vst [vmem:[%s279 + $0x288] sm:$0xff] %v442
                %v444 = vld [vmem:[%s278 + $0x510] sm:$0xff]
                %445 = vst [vmem:[%s279 + $0x290] sm:$0xff] %v444
                %v446 = vld [vmem:[%s278 + $0x518] sm:$0xff]
                %447 = vst [vmem:[%s279 + $0x298] sm:$0xff] %v446
                %v448 = vld [vmem:[%s278 + $0x540] sm:$0xff]
                %449 = vst [vmem:[%s279 + $0x2a0] sm:$0xff] %v448
                %v450 = vld [vmem:[%s278 + $0x548] sm:$0xff]
                %451 = vst [vmem:[%s279 + $0x2a8] sm:$0xff] %v450
                %v452 = vld [vmem:[%s278 + $0x550] sm:$0xff]
                %453 = vst [vmem:[%s279 + $0x2b0] sm:$0xff] %v452
                %v454 = vld [vmem:[%s278 + $0x558] sm:$0xff]
                %455 = vst [vmem:[%s279 + $0x2b8] sm:$0xff] %v454
                %v456 = vld [vmem:[%s278 + $0x580] sm:$0xff]
                %457 = vst [vmem:[%s279 + $0x2c0] sm:$0xff] %v456
                %v458 = vld [vmem:[%s278 + $0x588] sm:$0xff]
                %459 = vst [vmem:[%s279 + $0x2c8] sm:$0xff] %v458
                %v460 = vld [vmem:[%s278 + $0x590] sm:$0xff]
                %461 = vst [vmem:[%s279 + $0x2d0] sm:$0xff] %v460
                %v462 = vld [vmem:[%s278 + $0x598] sm:$0xff]
                %463 = vst [vmem:[%s279 + $0x2d8] sm:$0xff] %v462
                %v464 = vld [vmem:[%s278 + $0x5c0] sm:$0xff]
                %465 = vst [vmem:[%s279 + $0x2e0] sm:$0xff] %v464
                %v466 = vld [vmem:[%s278 + $0x5c8] sm:$0xff]
                %467 = vst [vmem:[%s279 + $0x2e8] sm:$0xff] %v466
                %v468 = vld [vmem:[%s278 + $0x5d0] sm:$0xff]
                %469 = vst [vmem:[%s279 + $0x2f0] sm:$0xff] %v468
                %v470 = vld [vmem:[%s278 + $0x5d8] sm:$0xff]
                %471 = vst [vmem:[%s279 + $0x2f8] sm:$0xff] %v470
                %v472 = vld [vmem:[%s278 + $0x600] sm:$0xff]
                %473 = vst [vmem:[%s279 + $0x300] sm:$0xff] %v472
                %v474 = vld [vmem:[%s278 + $0x608] sm:$0xff]
                %475 = vst [vmem:[%s279 + $0x308] sm:$0xff] %v474
                %v476 = vld [vmem:[%s278 + $0x610] sm:$0xff]
                %477 = vst [vmem:[%s279 + $0x310] sm:$0xff] %v476
                %v478 = vld [vmem:[%s278 + $0x618] sm:$0xff]
                %479 = vst [vmem:[%s279 + $0x318] sm:$0xff] %v478
                %v480 = vld [vmem:[%s278 + $0x640] sm:$0xff]
                %481 = vst [vmem:[%s279 + $0x320] sm:$0xff] %v480
                %v482 = vld [vmem:[%s278 + $0x648] sm:$0xff]
                %483 = vst [vmem:[%s279 + $0x328] sm:$0xff] %v482
                %v484 = vld [vmem:[%s278 + $0x650] sm:$0xff]
                %485 = vst [vmem:[%s279 + $0x330] sm:$0xff] %v484
                %v486 = vld [vmem:[%s278 + $0x658] sm:$0xff]
                %487 = vst [vmem:[%s279 + $0x338] sm:$0xff] %v486
                %v488 = vld [vmem:[%s278 + $0x680] sm:$0xff]
                %489 = vst [vmem:[%s279 + $0x340] sm:$0xff] %v488
                %v490 = vld [vmem:[%s278 + $0x688] sm:$0xff]
                %491 = vst [vmem:[%s279 + $0x348] sm:$0xff] %v490
                %v492 = vld [vmem:[%s278 + $0x690] sm:$0xff]
                %493 = vst [vmem:[%s279 + $0x350] sm:$0xff] %v492
                %v494 = vld [vmem:[%s278 + $0x698] sm:$0xff]
                %495 = vst [vmem:[%s279 + $0x358] sm:$0xff] %v494
                %v496 = vld [vmem:[%s278 + $0x6c0] sm:$0xff]
                %497 = vst [vmem:[%s279 + $0x360] sm:$0xff] %v496
                %v498 = vld [vmem:[%s278 + $0x6c8] sm:$0xff]
                %499 = vst [vmem:[%s279 + $0x368] sm:$0xff] %v498
                %v500 = vld [vmem:[%s278 + $0x6d0] sm:$0xff]
                %501 = vst [vmem:[%s279 + $0x370] sm:$0xff] %v500
                %v502 = vld [vmem:[%s278 + $0x6d8] sm:$0xff]
                %503 = vst [vmem:[%s279 + $0x378] sm:$0xff] %v502
                %v504 = vld [vmem:[%s278 + $0x700] sm:$0xff]
                %505 = vst [vmem:[%s279 + $0x380] sm:$0xff] %v504
                %v506 = vld [vmem:[%s278 + $0x708] sm:$0xff]
                %507 = vst [vmem:[%s279 + $0x388] sm:$0xff] %v506
                %v508 = vld [vmem:[%s278 + $0x710] sm:$0xff]
                %509 = vst [vmem:[%s279 + $0x390] sm:$0xff] %v508
                %v510 = vld [vmem:[%s278 + $0x718] sm:$0xff]
                %511 = vst [vmem:[%s279 + $0x398] sm:$0xff] %v510
                %v512 = vld [vmem:[%s278 + $0x740] sm:$0xff]
                %513 = vst [vmem:[%s279 + $0x3a0] sm:$0xff] %v512
                %v514 = vld [vmem:[%s278 + $0x748] sm:$0xff]
                %515 = vst [vmem:[%s279 + $0x3a8] sm:$0xff] %v514
                %v516 = vld [vmem:[%s278 + $0x750] sm:$0xff]
                %517 = vst [vmem:[%s279 + $0x3b0] sm:$0xff] %v516
                %v518 = vld [vmem:[%s278 + $0x758] sm:$0xff]
                %519 = vst [vmem:[%s279 + $0x3b8] sm:$0xff] %v518
                %v520 = vld [vmem:[%s278 + $0x780] sm:$0xff]
                %521 = vst [vmem:[%s279 + $0x3c0] sm:$0xff] %v520
                %v522 = vld [vmem:[%s278 + $0x788] sm:$0xff]
                %523 = vst [vmem:[%s279 + $0x3c8] sm:$0xff] %v522
                %v524 = vld [vmem:[%s278 + $0x790] sm:$0xff]
                %525 = vst [vmem:[%s279 + $0x3d0] sm:$0xff] %v524
                %v526 = vld [vmem:[%s278 + $0x798] sm:$0xff]
                %527 = vst [vmem:[%s279 + $0x3d8] sm:$0xff] %v526
                %v528 = vld [vmem:[%s278 + $0x7c0] sm:$0xff]
                %529 = vst [vmem:[%s279 + $0x3e0] sm:$0xff] %v528
                %v530 = vld [vmem:[%s278 + $0x7c8] sm:$0xff]
                %531 = vst [vmem:[%s279 + $0x3e8] sm:$0xff] %v530
                %v532 = vld [vmem:[%s278 + $0x7d0] sm:$0xff]
                %533 = vst [vmem:[%s279 + $0x3f0] sm:$0xff] %v532
                %v534 = vld [vmem:[%s278 + $0x7d8] sm:$0xff]
                %535 = vst [vmem:[%s279 + $0x3f8] sm:$0xff] %v534
              $region57: #{masked_model1_forward.1} parent=51 // loop_footer
                %s277 = sadd.s32 1, %s273
              $region58: #{masked_model1_forward.1} parent=51 // loop_footer_branch
                %272 = sbr.rel target = $region54
              $region59: #{masked_model1_forward.1} parent=51 // loop_exit
                _
            $region52: #{masked_model1_forward.1} parent=47 // pred_fallthru
              _
            // Predicated region
            $region60: #{masked_model1_forward.1} parent=47 // pred_check
              _
            $region61: #{masked_model1_forward.1} parent=47 // pred_check_branch
              %537 = sbr.rel target = $region63
            $region62: #{masked_model1_forward.1} parent=47 // pred_region
              _
            $region63: #{masked_model1_forward.1} parent=47 // pred_fallthru
              _
          $region48: #{masked_model1_forward.1} parent=43 // pred_fallthru
            _
          %538 = vnop
        $region44: #{masked_model1_forward.1} parent=39 // pred_fallthru
          _
        // Predicated region
        $region64: #{masked_model1_forward.1} parent=39 // pred_check
          %p539 = pneg %p62
        $region65: #{masked_model1_forward.1} parent=39 // pred_check_branch
          %541 = sbr.rel (%p539) target = $region67
        $region66: #{masked_model1_forward.1} parent=39 // pred_region
          %s542 = sand.u32 %s52, 1
          %s543 = sand.u32 %s52, 1
          %s544 = smul.addr %s543, 1024
          %s545 = scalar_lea.vmem [#allocation4], %s544
          %s546 = smul.u32 32, %s16
          %s547 = smul.addr %s546, 8
          %s548 = sadd.s32 4, %s547
          %s549 = smul.addr %s548, 8
          %s550 = scalar_lea.vmem %s1, %s549
          // Predicated region
          $region68: #{masked_model1_forward.1} parent=66 // pred_check
            _
          $region69: #{masked_model1_forward.1} parent=66 // pred_check_branch
            %552 = sbr.rel (0) target = $region71
          $region70: #{masked_model1_forward.1} parent=66 // pred_region
            // Predicated region
            $region72: #{masked_model1_forward.1} parent=70 // pred_check
              _
            $region73: #{masked_model1_forward.1} parent=70 // pred_check_branch
              %554 = sbr.rel (0) target = $region75
            $region74: #{masked_model1_forward.1} parent=70 // pred_region
              loop: start=0, step=1, limit=1
              $region76: #{masked_model1_forward.1} parent=74 // loop_pre_header
                _
              $region77: #{masked_model1_forward.1} parent=74 // loop_header
                %s556 = sphi 0, %s560
                %p557 = scmp.ge.s32.totalorder %s556, 1
                %s561 = sphi %s550, %s550
                %s562 = sphi %s545, %s545
              $region78: #{masked_model1_forward.1} parent=74 // loop_header_branch
                %559 = sbr.rel (%p557) target = $region82
              $region79: #{masked_model1_forward.1} parent=74 // loop_body
                %v563 = vld [vmem:[%s561] sm:$0xff]
                %564 = vst [vmem:[%s562] sm:$0xff] %v563
                %v565 = vld [vmem:[%s561 + $0x8] sm:$0xff]
                %566 = vst [vmem:[%s562 + $0x8] sm:$0xff] %v565
                %v567 = vld [vmem:[%s561 + $0x10] sm:$0xff]
                %568 = vst [vmem:[%s562 + $0x10] sm:$0xff] %v567
                %v569 = vld [vmem:[%s561 + $0x18] sm:$0xff]
                %570 = vst [vmem:[%s562 + $0x18] sm:$0xff] %v569
                %v571 = vld [vmem:[%s561 + $0x40] sm:$0xff]
                %572 = vst [vmem:[%s562 + $0x20] sm:$0xff] %v571
                %v573 = vld [vmem:[%s561 + $0x48] sm:$0xff]
                %574 = vst [vmem:[%s562 + $0x28] sm:$0xff] %v573
                %v575 = vld [vmem:[%s561 + $0x50] sm:$0xff]
                %576 = vst [vmem:[%s562 + $0x30] sm:$0xff] %v575
                %v577 = vld [vmem:[%s561 + $0x58] sm:$0xff]
                %578 = vst [vmem:[%s562 + $0x38] sm:$0xff] %v577
                %v579 = vld [vmem:[%s561 + $0x80] sm:$0xff]
                %580 = vst [vmem:[%s562 + $0x40] sm:$0xff] %v579
                %v581 = vld [vmem:[%s561 + $0x88] sm:$0xff]
                %582 = vst [vmem:[%s562 + $0x48] sm:$0xff] %v581
                %v583 = vld [vmem:[%s561 + $0x90] sm:$0xff]
                %584 = vst [vmem:[%s562 + $0x50] sm:$0xff] %v583
                %v585 = vld [vmem:[%s561 + $0x98] sm:$0xff]
                %586 = vst [vmem:[%s562 + $0x58] sm:$0xff] %v585
                %v587 = vld [vmem:[%s561 + $0xc0] sm:$0xff]
                %588 = vst [vmem:[%s562 + $0x60] sm:$0xff] %v587
                %v589 = vld [vmem:[%s561 + $0xc8] sm:$0xff]
                %590 = vst [vmem:[%s562 + $0x68] sm:$0xff] %v589
                %v591 = vld [vmem:[%s561 + $0xd0] sm:$0xff]
                %592 = vst [vmem:[%s562 + $0x70] sm:$0xff] %v591
                %v593 = vld [vmem:[%s561 + $0xd8] sm:$0xff]
                %594 = vst [vmem:[%s562 + $0x78] sm:$0xff] %v593
                %v595 = vld [vmem:[%s561 + $0x100] sm:$0xff]
                %596 = vst [vmem:[%s562 + $0x80] sm:$0xff] %v595
                %v597 = vld [vmem:[%s561 + $0x108] sm:$0xff]
                %598 = vst [vmem:[%s562 + $0x88] sm:$0xff] %v597
                %v599 = vld [vmem:[%s561 + $0x110] sm:$0xff]
                %600 = vst [vmem:[%s562 + $0x90] sm:$0xff] %v599
                %v601 = vld [vmem:[%s561 + $0x118] sm:$0xff]
                %602 = vst [vmem:[%s562 + $0x98] sm:$0xff] %v601
                %v603 = vld [vmem:[%s561 + $0x140] sm:$0xff]
                %604 = vst [vmem:[%s562 + $0xa0] sm:$0xff] %v603
                %v605 = vld [vmem:[%s561 + $0x148] sm:$0xff]
                %606 = vst [vmem:[%s562 + $0xa8] sm:$0xff] %v605
                %v607 = vld [vmem:[%s561 + $0x150] sm:$0xff]
                %608 = vst [vmem:[%s562 + $0xb0] sm:$0xff] %v607
                %v609 = vld [vmem:[%s561 + $0x158] sm:$0xff]
                %610 = vst [vmem:[%s562 + $0xb8] sm:$0xff] %v609
                %v611 = vld [vmem:[%s561 + $0x180] sm:$0xff]
                %612 = vst [vmem:[%s562 + $0xc0] sm:$0xff] %v611
                %v613 = vld [vmem:[%s561 + $0x188] sm:$0xff]
                %614 = vst [vmem:[%s562 + $0xc8] sm:$0xff] %v613
                %v615 = vld [vmem:[%s561 + $0x190] sm:$0xff]
                %616 = vst [vmem:[%s562 + $0xd0] sm:$0xff] %v615
                %v617 = vld [vmem:[%s561 + $0x198] sm:$0xff]
                %618 = vst [vmem:[%s562 + $0xd8] sm:$0xff] %v617
                %v619 = vld [vmem:[%s561 + $0x1c0] sm:$0xff]
                %620 = vst [vmem:[%s562 + $0xe0] sm:$0xff] %v619
                %v621 = vld [vmem:[%s561 + $0x1c8] sm:$0xff]
                %622 = vst [vmem:[%s562 + $0xe8] sm:$0xff] %v621
                %v623 = vld [vmem:[%s561 + $0x1d0] sm:$0xff]
                %624 = vst [vmem:[%s562 + $0xf0] sm:$0xff] %v623
                %v625 = vld [vmem:[%s561 + $0x1d8] sm:$0xff]
                %626 = vst [vmem:[%s562 + $0xf8] sm:$0xff] %v625
                %v627 = vld [vmem:[%s561 + $0x200] sm:$0xff]
                %628 = vst [vmem:[%s562 + $0x100] sm:$0xff] %v627
                %v629 = vld [vmem:[%s561 + $0x208] sm:$0xff]
                %630 = vst [vmem:[%s562 + $0x108] sm:$0xff] %v629
                %v631 = vld [vmem:[%s561 + $0x210] sm:$0xff]
                %632 = vst [vmem:[%s562 + $0x110] sm:$0xff] %v631
                %v633 = vld [vmem:[%s561 + $0x218] sm:$0xff]
                %634 = vst [vmem:[%s562 + $0x118] sm:$0xff] %v633
                %v635 = vld [vmem:[%s561 + $0x240] sm:$0xff]
                %636 = vst [vmem:[%s562 + $0x120] sm:$0xff] %v635
                %v637 = vld [vmem:[%s561 + $0x248] sm:$0xff]
                %638 = vst [vmem:[%s562 + $0x128] sm:$0xff] %v637
                %v639 = vld [vmem:[%s561 + $0x250] sm:$0xff]
                %640 = vst [vmem:[%s562 + $0x130] sm:$0xff] %v639
                %v641 = vld [vmem:[%s561 + $0x258] sm:$0xff]
                %642 = vst [vmem:[%s562 + $0x138] sm:$0xff] %v641
                %v643 = vld [vmem:[%s561 + $0x280] sm:$0xff]
                %644 = vst [vmem:[%s562 + $0x140] sm:$0xff] %v643
                %v645 = vld [vmem:[%s561 + $0x288] sm:$0xff]
                %646 = vst [vmem:[%s562 + $0x148] sm:$0xff] %v645
                %v647 = vld [vmem:[%s561 + $0x290] sm:$0xff]
                %648 = vst [vmem:[%s562 + $0x150] sm:$0xff] %v647
                %v649 = vld [vmem:[%s561 + $0x298] sm:$0xff]
                %650 = vst [vmem:[%s562 + $0x158] sm:$0xff] %v649
                %v651 = vld [vmem:[%s561 + $0x2c0] sm:$0xff]
                %652 = vst [vmem:[%s562 + $0x160] sm:$0xff] %v651
                %v653 = vld [vmem:[%s561 + $0x2c8] sm:$0xff]
                %654 = vst [vmem:[%s562 + $0x168] sm:$0xff] %v653
                %v655 = vld [vmem:[%s561 + $0x2d0] sm:$0xff]
                %656 = vst [vmem:[%s562 + $0x170] sm:$0xff] %v655
                %v657 = vld [vmem:[%s561 + $0x2d8] sm:$0xff]
                %658 = vst [vmem:[%s562 + $0x178] sm:$0xff] %v657
                %v659 = vld [vmem:[%s561 + $0x300] sm:$0xff]
                %660 = vst [vmem:[%s562 + $0x180] sm:$0xff] %v659
                %v661 = vld [vmem:[%s561 + $0x308] sm:$0xff]
                %662 = vst [vmem:[%s562 + $0x188] sm:$0xff] %v661
                %v663 = vld [vmem:[%s561 + $0x310] sm:$0xff]
                %664 = vst [vmem:[%s562 + $0x190] sm:$0xff] %v663
                %v665 = vld [vmem:[%s561 + $0x318] sm:$0xff]
                %666 = vst [vmem:[%s562 + $0x198] sm:$0xff] %v665
                %v667 = vld [vmem:[%s561 + $0x340] sm:$0xff]
                %668 = vst [vmem:[%s562 + $0x1a0] sm:$0xff] %v667
                %v669 = vld [vmem:[%s561 + $0x348] sm:$0xff]
                %670 = vst [vmem:[%s562 + $0x1a8] sm:$0xff] %v669
                %v671 = vld [vmem:[%s561 + $0x350] sm:$0xff]
                %672 = vst [vmem:[%s562 + $0x1b0] sm:$0xff] %v671
                %v673 = vld [vmem:[%s561 + $0x358] sm:$0xff]
                %674 = vst [vmem:[%s562 + $0x1b8] sm:$0xff] %v673
                %v675 = vld [vmem:[%s561 + $0x380] sm:$0xff]
                %676 = vst [vmem:[%s562 + $0x1c0] sm:$0xff] %v675
                %v677 = vld [vmem:[%s561 + $0x388] sm:$0xff]
                %678 = vst [vmem:[%s562 + $0x1c8] sm:$0xff] %v677
                %v679 = vld [vmem:[%s561 + $0x390] sm:$0xff]
                %680 = vst [vmem:[%s562 + $0x1d0] sm:$0xff] %v679
                %v681 = vld [vmem:[%s561 + $0x398] sm:$0xff]
                %682 = vst [vmem:[%s562 + $0x1d8] sm:$0xff] %v681
                %v683 = vld [vmem:[%s561 + $0x3c0] sm:$0xff]
                %684 = vst [vmem:[%s562 + $0x1e0] sm:$0xff] %v683
                %v685 = vld [vmem:[%s561 + $0x3c8] sm:$0xff]
                %686 = vst [vmem:[%s562 + $0x1e8] sm:$0xff] %v685
                %v687 = vld [vmem:[%s561 + $0x3d0] sm:$0xff]
                %688 = vst [vmem:[%s562 + $0x1f0] sm:$0xff] %v687
                %v689 = vld [vmem:[%s561 + $0x3d8] sm:$0xff]
                %690 = vst [vmem:[%s562 + $0x1f8] sm:$0xff] %v689
                %v691 = vld [vmem:[%s561 + $0x400] sm:$0xff]
                %692 = vst [vmem:[%s562 + $0x200] sm:$0xff] %v691
                %v693 = vld [vmem:[%s561 + $0x408] sm:$0xff]
                %694 = vst [vmem:[%s562 + $0x208] sm:$0xff] %v693
                %v695 = vld [vmem:[%s561 + $0x410] sm:$0xff]
                %696 = vst [vmem:[%s562 + $0x210] sm:$0xff] %v695
                %v697 = vld [vmem:[%s561 + $0x418] sm:$0xff]
                %698 = vst [vmem:[%s562 + $0x218] sm:$0xff] %v697
                %v699 = vld [vmem:[%s561 + $0x440] sm:$0xff]
                %700 = vst [vmem:[%s562 + $0x220] sm:$0xff] %v699
                %v701 = vld [vmem:[%s561 + $0x448] sm:$0xff]
                %702 = vst [vmem:[%s562 + $0x228] sm:$0xff] %v701
                %v703 = vld [vmem:[%s561 + $0x450] sm:$0xff]
                %704 = vst [vmem:[%s562 + $0x230] sm:$0xff] %v703
                %v705 = vld [vmem:[%s561 + $0x458] sm:$0xff]
                %706 = vst [vmem:[%s562 + $0x238] sm:$0xff] %v705
                %v707 = vld [vmem:[%s561 + $0x480] sm:$0xff]
                %708 = vst [vmem:[%s562 + $0x240] sm:$0xff] %v707
                %v709 = vld [vmem:[%s561 + $0x488] sm:$0xff]
                %710 = vst [vmem:[%s562 + $0x248] sm:$0xff] %v709
                %v711 = vld [vmem:[%s561 + $0x490] sm:$0xff]
                %712 = vst [vmem:[%s562 + $0x250] sm:$0xff] %v711
                %v713 = vld [vmem:[%s561 + $0x498] sm:$0xff]
                %714 = vst [vmem:[%s562 + $0x258] sm:$0xff] %v713
                %v715 = vld [vmem:[%s561 + $0x4c0] sm:$0xff]
                %716 = vst [vmem:[%s562 + $0x260] sm:$0xff] %v715
                %v717 = vld [vmem:[%s561 + $0x4c8] sm:$0xff]
                %718 = vst [vmem:[%s562 + $0x268] sm:$0xff] %v717
                %v719 = vld [vmem:[%s561 + $0x4d0] sm:$0xff]
                %720 = vst [vmem:[%s562 + $0x270] sm:$0xff] %v719
                %v721 = vld [vmem:[%s561 + $0x4d8] sm:$0xff]
                %722 = vst [vmem:[%s562 + $0x278] sm:$0xff] %v721
                %v723 = vld [vmem:[%s561 + $0x500] sm:$0xff]
                %724 = vst [vmem:[%s562 + $0x280] sm:$0xff] %v723
                %v725 = vld [vmem:[%s561 + $0x508] sm:$0xff]
                %726 = vst [vmem:[%s562 + $0x288] sm:$0xff] %v725
                %v727 = vld [vmem:[%s561 + $0x510] sm:$0xff]
                %728 = vst [vmem:[%s562 + $0x290] sm:$0xff] %v727
                %v729 = vld [vmem:[%s561 + $0x518] sm:$0xff]
                %730 = vst [vmem:[%s562 + $0x298] sm:$0xff] %v729
                %v731 = vld [vmem:[%s561 + $0x540] sm:$0xff]
                %732 = vst [vmem:[%s562 + $0x2a0] sm:$0xff] %v731
                %v733 = vld [vmem:[%s561 + $0x548] sm:$0xff]
                %734 = vst [vmem:[%s562 + $0x2a8] sm:$0xff] %v733
                %v735 = vld [vmem:[%s561 + $0x550] sm:$0xff]
                %736 = vst [vmem:[%s562 + $0x2b0] sm:$0xff] %v735
                %v737 = vld [vmem:[%s561 + $0x558] sm:$0xff]
                %738 = vst [vmem:[%s562 + $0x2b8] sm:$0xff] %v737
                %v739 = vld [vmem:[%s561 + $0x580] sm:$0xff]
                %740 = vst [vmem:[%s562 + $0x2c0] sm:$0xff] %v739
                %v741 = vld [vmem:[%s561 + $0x588] sm:$0xff]
                %742 = vst [vmem:[%s562 + $0x2c8] sm:$0xff] %v741
                %v743 = vld [vmem:[%s561 + $0x590] sm:$0xff]
                %744 = vst [vmem:[%s562 + $0x2d0] sm:$0xff] %v743
                %v745 = vld [vmem:[%s561 + $0x598] sm:$0xff]
                %746 = vst [vmem:[%s562 + $0x2d8] sm:$0xff] %v745
                %v747 = vld [vmem:[%s561 + $0x5c0] sm:$0xff]
                %748 = vst [vmem:[%s562 + $0x2e0] sm:$0xff] %v747
                %v749 = vld [vmem:[%s561 + $0x5c8] sm:$0xff]
                %750 = vst [vmem:[%s562 + $0x2e8] sm:$0xff] %v749
                %v751 = vld [vmem:[%s561 + $0x5d0] sm:$0xff]
                %752 = vst [vmem:[%s562 + $0x2f0] sm:$0xff] %v751
                %v753 = vld [vmem:[%s561 + $0x5d8] sm:$0xff]
                %754 = vst [vmem:[%s562 + $0x2f8] sm:$0xff] %v753
                %v755 = vld [vmem:[%s561 + $0x600] sm:$0xff]
                %756 = vst [vmem:[%s562 + $0x300] sm:$0xff] %v755
                %v757 = vld [vmem:[%s561 + $0x608] sm:$0xff]
                %758 = vst [vmem:[%s562 + $0x308] sm:$0xff] %v757
                %v759 = vld [vmem:[%s561 + $0x610] sm:$0xff]
                %760 = vst [vmem:[%s562 + $0x310] sm:$0xff] %v759
                %v761 = vld [vmem:[%s561 + $0x618] sm:$0xff]
                %762 = vst [vmem:[%s562 + $0x318] sm:$0xff] %v761
                %v763 = vld [vmem:[%s561 + $0x640] sm:$0xff]
                %764 = vst [vmem:[%s562 + $0x320] sm:$0xff] %v763
                %v765 = vld [vmem:[%s561 + $0x648] sm:$0xff]
                %766 = vst [vmem:[%s562 + $0x328] sm:$0xff] %v765
                %v767 = vld [vmem:[%s561 + $0x650] sm:$0xff]
                %768 = vst [vmem:[%s562 + $0x330] sm:$0xff] %v767
                %v769 = vld [vmem:[%s561 + $0x658] sm:$0xff]
                %770 = vst [vmem:[%s562 + $0x338] sm:$0xff] %v769
                %v771 = vld [vmem:[%s561 + $0x680] sm:$0xff]
                %772 = vst [vmem:[%s562 + $0x340] sm:$0xff] %v771
                %v773 = vld [vmem:[%s561 + $0x688] sm:$0xff]
                %774 = vst [vmem:[%s562 + $0x348] sm:$0xff] %v773
                %v775 = vld [vmem:[%s561 + $0x690] sm:$0xff]
                %776 = vst [vmem:[%s562 + $0x350] sm:$0xff] %v775
                %v777 = vld [vmem:[%s561 + $0x698] sm:$0xff]
                %778 = vst [vmem:[%s562 + $0x358] sm:$0xff] %v777
                %v779 = vld [vmem:[%s561 + $0x6c0] sm:$0xff]
                %780 = vst [vmem:[%s562 + $0x360] sm:$0xff] %v779
                %v781 = vld [vmem:[%s561 + $0x6c8] sm:$0xff]
                %782 = vst [vmem:[%s562 + $0x368] sm:$0xff] %v781
                %v783 = vld [vmem:[%s561 + $0x6d0] sm:$0xff]
                %784 = vst [vmem:[%s562 + $0x370] sm:$0xff] %v783
                %v785 = vld [vmem:[%s561 + $0x6d8] sm:$0xff]
                %786 = vst [vmem:[%s562 + $0x378] sm:$0xff] %v785
                %v787 = vld [vmem:[%s561 + $0x700] sm:$0xff]
                %788 = vst [vmem:[%s562 + $0x380] sm:$0xff] %v787
                %v789 = vld [vmem:[%s561 + $0x708] sm:$0xff]
                %790 = vst [vmem:[%s562 + $0x388] sm:$0xff] %v789
                %v791 = vld [vmem:[%s561 + $0x710] sm:$0xff]
                %792 = vst [vmem:[%s562 + $0x390] sm:$0xff] %v791
                %v793 = vld [vmem:[%s561 + $0x718] sm:$0xff]
                %794 = vst [vmem:[%s562 + $0x398] sm:$0xff] %v793
                %v795 = vld [vmem:[%s561 + $0x740] sm:$0xff]
                %796 = vst [vmem:[%s562 + $0x3a0] sm:$0xff] %v795
                %v797 = vld [vmem:[%s561 + $0x748] sm:$0xff]
                %798 = vst [vmem:[%s562 + $0x3a8] sm:$0xff] %v797
                %v799 = vld [vmem:[%s561 + $0x750] sm:$0xff]
                %800 = vst [vmem:[%s562 + $0x3b0] sm:$0xff] %v799
                %v801 = vld [vmem:[%s561 + $0x758] sm:$0xff]
                %802 = vst [vmem:[%s562 + $0x3b8] sm:$0xff] %v801
                %v803 = vld [vmem:[%s561 + $0x780] sm:$0xff]
                %804 = vst [vmem:[%s562 + $0x3c0] sm:$0xff] %v803
                %v805 = vld [vmem:[%s561 + $0x788] sm:$0xff]
                %806 = vst [vmem:[%s562 + $0x3c8] sm:$0xff] %v805
                %v807 = vld [vmem:[%s561 + $0x790] sm:$0xff]
                %808 = vst [vmem:[%s562 + $0x3d0] sm:$0xff] %v807
                %v809 = vld [vmem:[%s561 + $0x798] sm:$0xff]
                %810 = vst [vmem:[%s562 + $0x3d8] sm:$0xff] %v809
                %v811 = vld [vmem:[%s561 + $0x7c0] sm:$0xff]
                %812 = vst [vmem:[%s562 + $0x3e0] sm:$0xff] %v811
                %v813 = vld [vmem:[%s561 + $0x7c8] sm:$0xff]
                %814 = vst [vmem:[%s562 + $0x3e8] sm:$0xff] %v813
                %v815 = vld [vmem:[%s561 + $0x7d0] sm:$0xff]
                %816 = vst [vmem:[%s562 + $0x3f0] sm:$0xff] %v815
                %v817 = vld [vmem:[%s561 + $0x7d8] sm:$0xff]
                %818 = vst [vmem:[%s562 + $0x3f8] sm:$0xff] %v817
              $region80: #{masked_model1_forward.1} parent=74 // loop_footer
                %s560 = sadd.s32 1, %s556
              $region81: #{masked_model1_forward.1} parent=74 // loop_footer_branch
                %555 = sbr.rel target = $region77
              $region82: #{masked_model1_forward.1} parent=74 // loop_exit
                _
            $region75: #{masked_model1_forward.1} parent=70 // pred_fallthru
              _
            // Predicated region
            $region83: #{masked_model1_forward.1} parent=70 // pred_check
              _
            $region84: #{masked_model1_forward.1} parent=70 // pred_check_branch
              %820 = sbr.rel target = $region86
            $region85: #{masked_model1_forward.1} parent=70 // pred_region
              _
            $region86: #{masked_model1_forward.1} parent=70 // pred_fallthru
              _
          $region71: #{masked_model1_forward.1} parent=66 // pred_fallthru
            _
          %821 = vnop
        $region67: #{masked_model1_forward.1} parent=39 // pred_fallthru
          _
      $region40: #{masked_model1_forward.1} parent=5 // pred_fallthru
        _
      %p822 = scmp.le.s32.totalorder 1, %s16
      %p823 = scmp.lt.s32.totalorder %s16, 4
      %p824 = pnand %p822, %p823
      %p825 = pneg %p824
      // Predicated region
      $region87: #{masked_model1_forward.1} parent=5 // pred_check
        _
      $region88: #{masked_model1_forward.1} parent=5 // pred_check_branch
        %827 = sbr.rel (%p824) target = $region90
      $region89: #{masked_model1_forward.1} parent=5 // pred_region
        %s828 = ssub.s32 %s16, 1
        %s829 = sand.u32 %s29, 1
        %s830 = sand.u32 %s29, 1
        %s831 = smul.addr %s830, 1024
        %s832 = scalar_lea.vmem [#allocation3], %s831
        // Predicated region
        $region91: #{masked_model1_forward.1} parent=89 // pred_check
          %p833 = pneg %p42
        $region92: #{masked_model1_forward.1} parent=89 // pred_check_branch
          %835 = sbr.rel (%p833) target = $region94
        $region93: #{masked_model1_forward.1} parent=89 // pred_region
          _
        $region94: #{masked_model1_forward.1} parent=89 // pred_fallthru
          _
        %s836 = sand.u32 %s55, 1
        %s837 = sand.u32 %s55, 1
        %s838 = smul.addr %s837, 1024
        %s839 = scalar_lea.vmem [#allocation4], %s838
        // Predicated region
        $region95: #{masked_model1_forward.1} parent=89 // pred_check
          %p840 = pneg %p68
        $region96: #{masked_model1_forward.1} parent=89 // pred_check_branch
          %842 = sbr.rel (%p840) target = $region98
        $region97: #{masked_model1_forward.1} parent=89 // pred_region
          _
        $region98: #{masked_model1_forward.1} parent=89 // pred_fallthru
          _
        %s843 = sand.u32 %s29, 1
        %s844 = sand.u32 %s29, 1
        %s845 = smul.addr %s844, 1024
        %s846 = scalar_lea.vmem [#allocation3], %s845
        %p847 = pneg %p42
        %p848 = pneg %p39
        %s849 = sand.u32 %s55, 1
        %s850 = sand.u32 %s55, 1
        %s851 = smul.addr %s850, 1024
        %s852 = scalar_lea.vmem [#allocation4], %s851
        %p853 = pneg %p68
        %p854 = pneg %p65
        %p855 = pneg %p89
        %p856 = pneg %p86
        %p857 = pneg %p110
        %p858 = pneg %p107
        %p859 = pneg %p131
        %p860 = pneg %p128
        %p861 = pneg %p152
        %p862 = pneg %p149
        %p863 = pneg %p173
        %p864 = pneg %p170
        %p865 = pneg %p194
        %p866 = pneg %p191
        %p867 = pneg %p220
        %p868 = pneg %p217
        %s869 = smul.u32 32, %s21
        %p870 = scmp.lt.s32.totalorder %s869, 95
        %s871 = scalar_select %p870, %s869, 95
        %s872 = smul.addr %s871, 8
        %s873 = scalar_lea.vmem %s8, %s872
        %s874 = smul.u32 32, %s21
        %s875 = smul.u32 32, %s21
        %s876 = smul.u32 32, %s21
        %p877 = scmp.lt.s32.totalorder %s876, 95
        %s878 = scalar_select %p877, %s876, 95
        %s879 = smul.addr %s878, 8
        %s880 = scalar_lea.vmem %s8, %s879
        %s881 = smul.u32 32, %s21
        %v882 = vld [vmem:[%s832] sm:$0xff]
        %v883 = vld [vmem:[%s832 + $0x8] sm:$0xff]
        %v884 = vld [vmem:[%s832 + $0x10] sm:$0xff]
        %v885 = vld [vmem:[%s832 + $0x18] sm:$0xff]
        %v886 = vld [vmem:[%s832 + $0x20] sm:$0xff]
        %v887 = vld [vmem:[%s832 + $0x28] sm:$0xff]
        %v888 = vld [vmem:[%s832 + $0x30] sm:$0xff]
        %v889 = vld [vmem:[%s832 + $0x38] sm:$0xff]
        %v890 = vld [vmem:[%s832 + $0x40] sm:$0xff]
        %v891 = vld [vmem:[%s832 + $0x48] sm:$0xff]
        %v892 = vld [vmem:[%s832 + $0x50] sm:$0xff]
        %v893 = vld [vmem:[%s832 + $0x58] sm:$0xff]
        %v894 = vld [vmem:[%s832 + $0x60] sm:$0xff]
        %v895 = vld [vmem:[%s832 + $0x68] sm:$0xff]
        %v896 = vld [vmem:[%s832 + $0x70] sm:$0xff]
        %v897 = vld [vmem:[%s832 + $0x78] sm:$0xff]
        %v898 = vld [vmem:[%s832 + $0x80] sm:$0xff]
        %v899 = vld [vmem:[%s832 + $0x88] sm:$0xff]
        %v900 = vld [vmem:[%s832 + $0x90] sm:$0xff]
        %v901 = vld [vmem:[%s832 + $0x98] sm:$0xff]
        %v902 = vld [vmem:[%s832 + $0xa0] sm:$0xff]
        %v903 = vld [vmem:[%s832 + $0xa8] sm:$0xff]
        %v904 = vld [vmem:[%s832 + $0xb0] sm:$0xff]
        %v905 = vld [vmem:[%s832 + $0xb8] sm:$0xff]
        %v906 = vld [vmem:[%s832 + $0xc0] sm:$0xff]
        %v907 = vld [vmem:[%s832 + $0xc8] sm:$0xff]
        %v908 = vld [vmem:[%s832 + $0xd0] sm:$0xff]
        %v909 = vld [vmem:[%s832 + $0xd8] sm:$0xff]
        %v910 = vld [vmem:[%s832 + $0xe0] sm:$0xff]
        %v911 = vld [vmem:[%s832 + $0xe8] sm:$0xff]
        %v912 = vld [vmem:[%s832 + $0xf0] sm:$0xff]
        %v913 = vld [vmem:[%s832 + $0xf8] sm:$0xff]
        %v914 = vld [vmem:[%s832 + $0x100] sm:$0xff]
        %v915 = vld [vmem:[%s832 + $0x108] sm:$0xff]
        %v916 = vld [vmem:[%s832 + $0x110] sm:$0xff]
        %v917 = vld [vmem:[%s832 + $0x118] sm:$0xff]
        %v918 = vld [vmem:[%s832 + $0x120] sm:$0xff]
        %v919 = vld [vmem:[%s832 + $0x128] sm:$0xff]
        %v920 = vld [vmem:[%s832 + $0x130] sm:$0xff]
        %v921 = vld [vmem:[%s832 + $0x138] sm:$0xff]
        %v922 = vld [vmem:[%s832 + $0x140] sm:$0xff]
        %v923 = vld [vmem:[%s832 + $0x148] sm:$0xff]
        %v924 = vld [vmem:[%s832 + $0x150] sm:$0xff]
        %v925 = vld [vmem:[%s832 + $0x158] sm:$0xff]
        %v926 = vld [vmem:[%s832 + $0x160] sm:$0xff]
        %v927 = vld [vmem:[%s832 + $0x168] sm:$0xff]
        %v928 = vld [vmem:[%s832 + $0x170] sm:$0xff]
        %v929 = vld [vmem:[%s832 + $0x178] sm:$0xff]
        %v930 = vld [vmem:[%s832 + $0x180] sm:$0xff]
        %v931 = vld [vmem:[%s832 + $0x188] sm:$0xff]
        %v932 = vld [vmem:[%s832 + $0x190] sm:$0xff]
        %v933 = vld [vmem:[%s832 + $0x198] sm:$0xff]
        %v934 = vld [vmem:[%s832 + $0x1a0] sm:$0xff]
        %v935 = vld [vmem:[%s832 + $0x1a8] sm:$0xff]
        %v936 = vld [vmem:[%s832 + $0x1b0] sm:$0xff]
        %v937 = vld [vmem:[%s832 + $0x1b8] sm:$0xff]
        %v938 = vld [vmem:[%s832 + $0x1c0] sm:$0xff]
        %v939 = vld [vmem:[%s832 + $0x1c8] sm:$0xff]
        %v940 = vld [vmem:[%s832 + $0x1d0] sm:$0xff]
        %v941 = vld [vmem:[%s832 + $0x1d8] sm:$0xff]
        %v942 = vld [vmem:[%s832 + $0x1e0] sm:$0xff]
        %v943 = vld [vmem:[%s832 + $0x1e8] sm:$0xff]
        %v944 = vld [vmem:[%s832 + $0x1f0] sm:$0xff]
        %v945 = vld [vmem:[%s832 + $0x1f8] sm:$0xff]
        %v946 = vld [vmem:[%s832 + $0x200] sm:$0xff]
        %v947 = vld [vmem:[%s832 + $0x208] sm:$0xff]
        %v948 = vld [vmem:[%s832 + $0x210] sm:$0xff]
        %v949 = vld [vmem:[%s832 + $0x218] sm:$0xff]
        %v950 = vld [vmem:[%s832 + $0x220] sm:$0xff]
        %v951 = vld [vmem:[%s832 + $0x228] sm:$0xff]
        %v952 = vld [vmem:[%s832 + $0x230] sm:$0xff]
        %v953 = vld [vmem:[%s832 + $0x238] sm:$0xff]
        %v954 = vld [vmem:[%s832 + $0x240] sm:$0xff]
        %v955 = vld [vmem:[%s832 + $0x248] sm:$0xff]
        %v956 = vld [vmem:[%s832 + $0x250] sm:$0xff]
        %v957 = vld [vmem:[%s832 + $0x258] sm:$0xff]
        %v958 = vld [vmem:[%s832 + $0x260] sm:$0xff]
        %v959 = vld [vmem:[%s832 + $0x268] sm:$0xff]
        %v960 = vld [vmem:[%s832 + $0x270] sm:$0xff]
        %v961 = vld [vmem:[%s832 + $0x278] sm:$0xff]
        %v962 = vld [vmem:[%s832 + $0x280] sm:$0xff]
        %v963 = vld [vmem:[%s832 + $0x288] sm:$0xff]
        %v964 = vld [vmem:[%s832 + $0x290] sm:$0xff]
        %v965 = vld [vmem:[%s832 + $0x298] sm:$0xff]
        %v966 = vld [vmem:[%s832 + $0x2a0] sm:$0xff]
        %v967 = vld [vmem:[%s832 + $0x2a8] sm:$0xff]
        %v968 = vld [vmem:[%s832 + $0x2b0] sm:$0xff]
        %v969 = vld [vmem:[%s832 + $0x2b8] sm:$0xff]
        %v970 = vld [vmem:[%s832 + $0x2c0] sm:$0xff]
        %v971 = vld [vmem:[%s832 + $0x2c8] sm:$0xff]
        %v972 = vld [vmem:[%s832 + $0x2d0] sm:$0xff]
        %v973 = vld [vmem:[%s832 + $0x2d8] sm:$0xff]
        %v974 = vld [vmem:[%s832 + $0x2e0] sm:$0xff]
        %v975 = vld [vmem:[%s832 + $0x2e8] sm:$0xff]
        %v976 = vld [vmem:[%s832 + $0x2f0] sm:$0xff]
        %v977 = vld [vmem:[%s832 + $0x2f8] sm:$0xff]
        %v978 = vld [vmem:[%s832 + $0x300] sm:$0xff]
        %v979 = vld [vmem:[%s832 + $0x308] sm:$0xff]
        %v980 = vld [vmem:[%s832 + $0x310] sm:$0xff]
        %v981 = vld [vmem:[%s832 + $0x318] sm:$0xff]
        %v982 = vld [vmem:[%s832 + $0x320] sm:$0xff]
        %v983 = vld [vmem:[%s832 + $0x328] sm:$0xff]
        %v984 = vld [vmem:[%s832 + $0x330] sm:$0xff]
        %v985 = vld [vmem:[%s832 + $0x338] sm:$0xff]
        %v986 = vld [vmem:[%s832 + $0x340] sm:$0xff]
        %v987 = vld [vmem:[%s832 + $0x348] sm:$0xff]
        %v988 = vld [vmem:[%s832 + $0x350] sm:$0xff]
        %v989 = vld [vmem:[%s832 + $0x358] sm:$0xff]
        %v990 = vld [vmem:[%s832 + $0x360] sm:$0xff]
        %v991 = vld [vmem:[%s832 + $0x368] sm:$0xff]
        %v992 = vld [vmem:[%s832 + $0x370] sm:$0xff]
        %v993 = vld [vmem:[%s832 + $0x378] sm:$0xff]
        %v994 = vld [vmem:[%s832 + $0x380] sm:$0xff]
        %v995 = vld [vmem:[%s832 + $0x388] sm:$0xff]
        %v996 = vld [vmem:[%s832 + $0x390] sm:$0xff]
        %v997 = vld [vmem:[%s832 + $0x398] sm:$0xff]
        %v998 = vld [vmem:[%s832 + $0x3a0] sm:$0xff]
        %v999 = vld [vmem:[%s832 + $0x3a8] sm:$0xff]
        %v1000 = vld [vmem:[%s832 + $0x3b0] sm:$0xff]
        %v1001 = vld [vmem:[%s832 + $0x3b8] sm:$0xff]
        %v1002 = vld [vmem:[%s832 + $0x3c0] sm:$0xff]
        %v1003 = vld [vmem:[%s832 + $0x3c8] sm:$0xff]
        %v1004 = vld [vmem:[%s832 + $0x3d0] sm:$0xff]
        %v1005 = vld [vmem:[%s832 + $0x3d8] sm:$0xff]
        %v1006 = vld [vmem:[%s832 + $0x3e0] sm:$0xff]
        %v1007 = vld [vmem:[%s832 + $0x3e8] sm:$0xff]
        %v1008 = vld [vmem:[%s832 + $0x3f0] sm:$0xff]
        %v1009 = vld [vmem:[%s832 + $0x3f8] sm:$0xff]
        %v1010 = vld [vmem:[%s839] sm:$0xff]
        %v1011 = vld [vmem:[%s839 + $0x8] sm:$0xff]
        %v1012 = vld [vmem:[%s839 + $0x10] sm:$0xff]
        %v1013 = vld [vmem:[%s839 + $0x18] sm:$0xff]
        %v1014 = vld [vmem:[%s839 + $0x20] sm:$0xff]
        %v1015 = vld [vmem:[%s839 + $0x28] sm:$0xff]
        %v1016 = vld [vmem:[%s839 + $0x30] sm:$0xff]
        %v1017 = vld [vmem:[%s839 + $0x38] sm:$0xff]
        %v1018 = vld [vmem:[%s839 + $0x40] sm:$0xff]
        %v1019 = vld [vmem:[%s839 + $0x48] sm:$0xff]
        %v1020 = vld [vmem:[%s839 + $0x50] sm:$0xff]
        %v1021 = vld [vmem:[%s839 + $0x58] sm:$0xff]
        %v1022 = vld [vmem:[%s839 + $0x60] sm:$0xff]
        %v1023 = vld [vmem:[%s839 + $0x68] sm:$0xff]
        %v1024 = vld [vmem:[%s839 + $0x70] sm:$0xff]
        %v1025 = vld [vmem:[%s839 + $0x78] sm:$0xff]
        %v1026 = vld [vmem:[%s839 + $0x80] sm:$0xff]
        %v1027 = vld [vmem:[%s839 + $0x88] sm:$0xff]
        %v1028 = vld [vmem:[%s839 + $0x90] sm:$0xff]
        %v1029 = vld [vmem:[%s839 + $0x98] sm:$0xff]
        %v1030 = vld [vmem:[%s839 + $0xa0] sm:$0xff]
        %v1031 = vld [vmem:[%s839 + $0xa8] sm:$0xff]
        %v1032 = vld [vmem:[%s839 + $0xb0] sm:$0xff]
        %v1033 = vld [vmem:[%s839 + $0xb8] sm:$0xff]
        %v1034 = vld [vmem:[%s839 + $0xc0] sm:$0xff]
        %v1035 = vld [vmem:[%s839 + $0xc8] sm:$0xff]
        %v1036 = vld [vmem:[%s839 + $0xd0] sm:$0xff]
        %v1037 = vld [vmem:[%s839 + $0xd8] sm:$0xff]
        %v1038 = vld [vmem:[%s839 + $0xe0] sm:$0xff]
        %v1039 = vld [vmem:[%s839 + $0xe8] sm:$0xff]
        %v1040 = vld [vmem:[%s839 + $0xf0] sm:$0xff]
        %v1041 = vld [vmem:[%s839 + $0xf8] sm:$0xff]
        %v1042 = vld [vmem:[%s839 + $0x100] sm:$0xff]
        %v1043 = vld [vmem:[%s839 + $0x108] sm:$0xff]
        %v1044 = vld [vmem:[%s839 + $0x110] sm:$0xff]
        %v1045 = vld [vmem:[%s839 + $0x118] sm:$0xff]
        %v1046 = vld [vmem:[%s839 + $0x120] sm:$0xff]
        %v1047 = vld [vmem:[%s839 + $0x128] sm:$0xff]
        %v1048 = vld [vmem:[%s839 + $0x130] sm:$0xff]
        %v1049 = vld [vmem:[%s839 + $0x138] sm:$0xff]
        %v1050 = vld [vmem:[%s839 + $0x140] sm:$0xff]
        %v1051 = vld [vmem:[%s839 + $0x148] sm:$0xff]
        %v1052 = vld [vmem:[%s839 + $0x150] sm:$0xff]
        %v1053 = vld [vmem:[%s839 + $0x158] sm:$0xff]
        %v1054 = vld [vmem:[%s839 + $0x160] sm:$0xff]
        %v1055 = vld [vmem:[%s839 + $0x168] sm:$0xff]
        %v1056 = vld [vmem:[%s839 + $0x170] sm:$0xff]
        %v1057 = vld [vmem:[%s839 + $0x178] sm:$0xff]
        %v1058 = vld [vmem:[%s839 + $0x180] sm:$0xff]
        %v1059 = vld [vmem:[%s839 + $0x188] sm:$0xff]
        %v1060 = vld [vmem:[%s839 + $0x190] sm:$0xff]
        %v1061 = vld [vmem:[%s839 + $0x198] sm:$0xff]
        %v1062 = vld [vmem:[%s839 + $0x1a0] sm:$0xff]
        %v1063 = vld [vmem:[%s839 + $0x1a8] sm:$0xff]
        %v1064 = vld [vmem:[%s839 + $0x1b0] sm:$0xff]
        %v1065 = vld [vmem:[%s839 + $0x1b8] sm:$0xff]
        %v1066 = vld [vmem:[%s839 + $0x1c0] sm:$0xff]
        %v1067 = vld [vmem:[%s839 + $0x1c8] sm:$0xff]
        %v1068 = vld [vmem:[%s839 + $0x1d0] sm:$0xff]
        %v1069 = vld [vmem:[%s839 + $0x1d8] sm:$0xff]
        %v1070 = vld [vmem:[%s839 + $0x1e0] sm:$0xff]
        %v1071 = vld [vmem:[%s839 + $0x1e8] sm:$0xff]
        %v1072 = vld [vmem:[%s839 + $0x1f0] sm:$0xff]
        %v1073 = vld [vmem:[%s839 + $0x1f8] sm:$0xff]
        %v1074 = vld [vmem:[%s839 + $0x200] sm:$0xff]
        %v1075 = vld [vmem:[%s839 + $0x208] sm:$0xff]
        %v1076 = vld [vmem:[%s839 + $0x210] sm:$0xff]
        %v1077 = vld [vmem:[%s839 + $0x218] sm:$0xff]
        %v1078 = vld [vmem:[%s839 + $0x220] sm:$0xff]
        %v1079 = vld [vmem:[%s839 + $0x228] sm:$0xff]
        %v1080 = vld [vmem:[%s839 + $0x230] sm:$0xff]
        %v1081 = vld [vmem:[%s839 + $0x238] sm:$0xff]
        %v1082 = vld [vmem:[%s839 + $0x240] sm:$0xff]
        %v1083 = vld [vmem:[%s839 + $0x248] sm:$0xff]
        %v1084 = vld [vmem:[%s839 + $0x250] sm:$0xff]
        %v1085 = vld [vmem:[%s839 + $0x258] sm:$0xff]
        %v1086 = vld [vmem:[%s839 + $0x260] sm:$0xff]
        %v1087 = vld [vmem:[%s839 + $0x268] sm:$0xff]
        %v1088 = vld [vmem:[%s839 + $0x270] sm:$0xff]
        %v1089 = vld [vmem:[%s839 + $0x278] sm:$0xff]
        %v1090 = vld [vmem:[%s839 + $0x280] sm:$0xff]
        %v1091 = vld [vmem:[%s839 + $0x288] sm:$0xff]
        %v1092 = vld [vmem:[%s839 + $0x290] sm:$0xff]
        %v1093 = vld [vmem:[%s839 + $0x298] sm:$0xff]
        %v1094 = vld [vmem:[%s839 + $0x2a0] sm:$0xff]
        %v1095 = vld [vmem:[%s839 + $0x2a8] sm:$0xff]
        %v1096 = vld [vmem:[%s839 + $0x2b0] sm:$0xff]
        %v1097 = vld [vmem:[%s839 + $0x2b8] sm:$0xff]
        %v1098 = vld [vmem:[%s839 + $0x2c0] sm:$0xff]
        %v1099 = vld [vmem:[%s839 + $0x2c8] sm:$0xff]
        %v1100 = vld [vmem:[%s839 + $0x2d0] sm:$0xff]
        %v1101 = vld [vmem:[%s839 + $0x2d8] sm:$0xff]
        %v1102 = vld [vmem:[%s839 + $0x2e0] sm:$0xff]
        %v1103 = vld [vmem:[%s839 + $0x2e8] sm:$0xff]
        %v1104 = vld [vmem:[%s839 + $0x2f0] sm:$0xff]
        %v1105 = vld [vmem:[%s839 + $0x2f8] sm:$0xff]
        %v1106 = vld [vmem:[%s839 + $0x300] sm:$0xff]
        %v1107 = vld [vmem:[%s839 + $0x308] sm:$0xff]
        %v1108 = vld [vmem:[%s839 + $0x310] sm:$0xff]
        %v1109 = vld [vmem:[%s839 + $0x318] sm:$0xff]
        %v1110 = vld [vmem:[%s839 + $0x320] sm:$0xff]
        %v1111 = vld [vmem:[%s839 + $0x328] sm:$0xff]
        %v1112 = vld [vmem:[%s839 + $0x330] sm:$0xff]
        %v1113 = vld [vmem:[%s839 + $0x338] sm:$0xff]
        %v1114 = vld [vmem:[%s839 + $0x340] sm:$0xff]
        %v1115 = vld [vmem:[%s839 + $0x348] sm:$0xff]
        %v1116 = vld [vmem:[%s839 + $0x350] sm:$0xff]
        %v1117 = vld [vmem:[%s839 + $0x358] sm:$0xff]
        %v1118 = vld [vmem:[%s839 + $0x360] sm:$0xff]
        %v1119 = vld [vmem:[%s839 + $0x368] sm:$0xff]
        %v1120 = vld [vmem:[%s839 + $0x370] sm:$0xff]
        %v1121 = vld [vmem:[%s839 + $0x378] sm:$0xff]
        %v1122 = vld [vmem:[%s839 + $0x380] sm:$0xff]
        %v1123 = vld [vmem:[%s839 + $0x388] sm:$0xff]
        %v1124 = vld [vmem:[%s839 + $0x390] sm:$0xff]
        %v1125 = vld [vmem:[%s839 + $0x398] sm:$0xff]
        %v1126 = vld [vmem:[%s839 + $0x3a0] sm:$0xff]
        %v1127 = vld [vmem:[%s839 + $0x3a8] sm:$0xff]
        %v1128 = vld [vmem:[%s839 + $0x3b0] sm:$0xff]
        %v1129 = vld [vmem:[%s839 + $0x3b8] sm:$0xff]
        %v1130 = vld [vmem:[%s839 + $0x3c0] sm:$0xff]
        %v1131 = vld [vmem:[%s839 + $0x3c8] sm:$0xff]
        %v1132 = vld [vmem:[%s839 + $0x3d0] sm:$0xff]
        %v1133 = vld [vmem:[%s839 + $0x3d8] sm:$0xff]
        %v1134 = vld [vmem:[%s839 + $0x3e0] sm:$0xff]
        %v1135 = vld [vmem:[%s839 + $0x3e8] sm:$0xff]
        %v1136 = vld [vmem:[%s839 + $0x3f0] sm:$0xff]
        %v1137 = vld [vmem:[%s839 + $0x3f8] sm:$0xff]
        %v1138 = vpack.c.bf16 %v1014, %v1010
        %v1139 = vpack.c.bf16 %v1015, %v1011
        %v1140 = vpack.c.bf16 %v1016, %v1012
        %v1141 = vpack.c.bf16 %v1017, %v1013
        %v1142 = vpack.c.bf16 %v1022, %v1018
        %v1143 = vpack.c.bf16 %v1023, %v1019
        %v1144 = vpack.c.bf16 %v1024, %v1020
        %v1145 = vpack.c.bf16 %v1025, %v1021
        %v1146 = vpack.c.bf16 %v1030, %v1026
        %v1147 = vpack.c.bf16 %v1031, %v1027
        %v1148 = vpack.c.bf16 %v1032, %v1028
        %v1149 = vpack.c.bf16 %v1033, %v1029
        %v1150 = vpack.c.bf16 %v1038, %v1034
        %v1151 = vpack.c.bf16 %v1039, %v1035
        %v1152 = vpack.c.bf16 %v1040, %v1036
        %v1153 = vpack.c.bf16 %v1041, %v1037
        %v1154 = vpack.c.bf16 %v1046, %v1042
        %v1155 = vpack.c.bf16 %v1047, %v1043
        %v1156 = vpack.c.bf16 %v1048, %v1044
        %v1157 = vpack.c.bf16 %v1049, %v1045
        %v1158 = vpack.c.bf16 %v1054, %v1050
        %v1159 = vpack.c.bf16 %v1055, %v1051
        %v1160 = vpack.c.bf16 %v1056, %v1052
        %v1161 = vpack.c.bf16 %v1057, %v1053
        %v1162 = vpack.c.bf16 %v1062, %v1058
        %v1163 = vpack.c.bf16 %v1063, %v1059
        %v1164 = vpack.c.bf16 %v1064, %v1060
        %v1165 = vpack.c.bf16 %v1065, %v1061
        %v1166 = vpack.c.bf16 %v1070, %v1066
        %v1167 = vpack.c.bf16 %v1071, %v1067
        %v1168 = vpack.c.bf16 %v1072, %v1068
        %v1169 = vpack.c.bf16 %v1073, %v1069
        %v1170 = vpack.c.bf16 %v1078, %v1074
        %v1171 = vpack.c.bf16 %v1079, %v1075
        %v1172 = vpack.c.bf16 %v1080, %v1076
        %v1173 = vpack.c.bf16 %v1081, %v1077
        %v1174 = vpack.c.bf16 %v1086, %v1082
        %v1175 = vpack.c.bf16 %v1087, %v1083
        %v1176 = vpack.c.bf16 %v1088, %v1084
        %v1177 = vpack.c.bf16 %v1089, %v1085
        %v1178 = vpack.c.bf16 %v1094, %v1090
        %v1179 = vpack.c.bf16 %v1095, %v1091
        %v1180 = vpack.c.bf16 %v1096, %v1092
        %v1181 = vpack.c.bf16 %v1097, %v1093
        %v1182 = vpack.c.bf16 %v1102, %v1098
        %v1183 = vpack.c.bf16 %v1103, %v1099
        %v1184 = vpack.c.bf16 %v1104, %v1100
        %v1185 = vpack.c.bf16 %v1105, %v1101
        %v1186 = vpack.c.bf16 %v1110, %v1106
        %v1187 = vpack.c.bf16 %v1111, %v1107
        %v1188 = vpack.c.bf16 %v1112, %v1108
        %v1189 = vpack.c.bf16 %v1113, %v1109
        %v1190 = vpack.c.bf16 %v1118, %v1114
        %v1191 = vpack.c.bf16 %v1119, %v1115
        %v1192 = vpack.c.bf16 %v1120, %v1116
        %v1193 = vpack.c.bf16 %v1121, %v1117
        %v1194 = vpack.c.bf16 %v1126, %v1122
        %v1195 = vpack.c.bf16 %v1127, %v1123
        %v1196 = vpack.c.bf16 %v1128, %v1124
        %v1197 = vpack.c.bf16 %v1129, %v1125
        %v1198 = vpack.c.bf16 %v1134, %v1130
        %v1199 = vpack.c.bf16 %v1135, %v1131
        %v1200 = vpack.c.bf16 %v1136, %v1132
        %v1201 = vpack.c.bf16 %v1137, %v1133
        %v1202 = vld [vmem:[%s2] sm:$0xff]
        %v1203 = vld [vmem:[%s2 + $0x8] sm:$0xff]
        %v1204 = vld [vmem:[%s2 + $0x10] sm:$0xff]
        %v1205 = vld [vmem:[%s2 + $0x18] sm:$0xff]
        %v1206 = vld [vmem:[%s2 + $0x20] sm:$0xff]
        %v1207 = vld [vmem:[%s2 + $0x28] sm:$0xff]
        %v1208 = vld [vmem:[%s2 + $0x30] sm:$0xff]
        %v1209 = vld [vmem:[%s2 + $0x38] sm:$0xff]
        %v1210 = vld [vmem:[%s2 + $0x40] sm:$0xff]
        %v1211 = vld [vmem:[%s2 + $0x48] sm:$0xff]
        %v1212 = vld [vmem:[%s2 + $0x50] sm:$0xff]
        %v1213 = vld [vmem:[%s2 + $0x58] sm:$0xff]
        %v1214 = vld [vmem:[%s2 + $0x60] sm:$0xff]
        %v1215 = vld [vmem:[%s2 + $0x68] sm:$0xff]
        %v1216 = vld [vmem:[%s2 + $0x70] sm:$0xff]
        %v1217 = vld [vmem:[%s2 + $0x78] sm:$0xff]
        %v1218 = vld [vmem:[%s2 + $0x80] sm:$0xff]
        %v1219 = vld [vmem:[%s2 + $0x88] sm:$0xff]
        %v1220 = vld [vmem:[%s2 + $0x90] sm:$0xff]
        %v1221 = vld [vmem:[%s2 + $0x98] sm:$0xff]
        %v1222 = vld [vmem:[%s2 + $0xa0] sm:$0xff]
        %v1223 = vld [vmem:[%s2 + $0xa8] sm:$0xff]
        %v1224 = vld [vmem:[%s2 + $0xb0] sm:$0xff]
        %v1225 = vld [vmem:[%s2 + $0xb8] sm:$0xff]
        %v1226 = vld [vmem:[%s2 + $0xc0] sm:$0xff]
        %v1227 = vld [vmem:[%s2 + $0xc8] sm:$0xff]
        %v1228 = vld [vmem:[%s2 + $0xd0] sm:$0xff]
        %v1229 = vld [vmem:[%s2 + $0xd8] sm:$0xff]
        %v1230 = vld [vmem:[%s2 + $0xe0] sm:$0xff]
        %v1231 = vld [vmem:[%s2 + $0xe8] sm:$0xff]
        %v1232 = vld [vmem:[%s2 + $0xf0] sm:$0xff]
        %v1233 = vld [vmem:[%s2 + $0xf8] sm:$0xff]
        %v1234 = vld [vmem:[%s2 + $0x100] sm:$0xff]
        %v1235 = vld [vmem:[%s2 + $0x108] sm:$0xff]
        %v1236 = vld [vmem:[%s2 + $0x110] sm:$0xff]
        %v1237 = vld [vmem:[%s2 + $0x118] sm:$0xff]
        %v1238 = vld [vmem:[%s2 + $0x120] sm:$0xff]
        %v1239 = vld [vmem:[%s2 + $0x128] sm:$0xff]
        %v1240 = vld [vmem:[%s2 + $0x130] sm:$0xff]
        %v1241 = vld [vmem:[%s2 + $0x138] sm:$0xff]
        %v1242 = vld [vmem:[%s2 + $0x140] sm:$0xff]
        %v1243 = vld [vmem:[%s2 + $0x148] sm:$0xff]
        %v1244 = vld [vmem:[%s2 + $0x150] sm:$0xff]
        %v1245 = vld [vmem:[%s2 + $0x158] sm:$0xff]
        %v1246 = vld [vmem:[%s2 + $0x160] sm:$0xff]
        %v1247 = vld [vmem:[%s2 + $0x168] sm:$0xff]
        %v1248 = vld [vmem:[%s2 + $0x170] sm:$0xff]
        %v1249 = vld [vmem:[%s2 + $0x178] sm:$0xff]
        %v1250 = vld [vmem:[%s2 + $0x180] sm:$0xff]
        %v1251 = vld [vmem:[%s2 + $0x188] sm:$0xff]
        %v1252 = vld [vmem:[%s2 + $0x190] sm:$0xff]
        %v1253 = vld [vmem:[%s2 + $0x198] sm:$0xff]
        %v1254 = vld [vmem:[%s2 + $0x1a0] sm:$0xff]
        %v1255 = vld [vmem:[%s2 + $0x1a8] sm:$0xff]
        %v1256 = vld [vmem:[%s2 + $0x1b0] sm:$0xff]
        %v1257 = vld [vmem:[%s2 + $0x1b8] sm:$0xff]
        %v1258 = vld [vmem:[%s2 + $0x1c0] sm:$0xff]
        %v1259 = vld [vmem:[%s2 + $0x1c8] sm:$0xff]
        %v1260 = vld [vmem:[%s2 + $0x1d0] sm:$0xff]
        %v1261 = vld [vmem:[%s2 + $0x1d8] sm:$0xff]
        %v1262 = vld [vmem:[%s2 + $0x1e0] sm:$0xff]
        %v1263 = vld [vmem:[%s2 + $0x1e8] sm:$0xff]
        %v1264 = vld [vmem:[%s2 + $0x1f0] sm:$0xff]
        %v1265 = vld [vmem:[%s2 + $0x1f8] sm:$0xff]
        %v1266 = vld [vmem:[%s2 + $0x200] sm:$0xff]
        %v1267 = vld [vmem:[%s2 + $0x208] sm:$0xff]
        %v1268 = vld [vmem:[%s2 + $0x210] sm:$0xff]
        %v1269 = vld [vmem:[%s2 + $0x218] sm:$0xff]
        %v1270 = vld [vmem:[%s2 + $0x220] sm:$0xff]
        %v1271 = vld [vmem:[%s2 + $0x228] sm:$0xff]
        %v1272 = vld [vmem:[%s2 + $0x230] sm:$0xff]
        %v1273 = vld [vmem:[%s2 + $0x238] sm:$0xff]
        %v1274 = vld [vmem:[%s2 + $0x240] sm:$0xff]
        %v1275 = vld [vmem:[%s2 + $0x248] sm:$0xff]
        %v1276 = vld [vmem:[%s2 + $0x250] sm:$0xff]
        %v1277 = vld [vmem:[%s2 + $0x258] sm:$0xff]
        %v1278 = vld [vmem:[%s2 + $0x260] sm:$0xff]
        %v1279 = vld [vmem:[%s2 + $0x268] sm:$0xff]
        %v1280 = vld [vmem:[%s2 + $0x270] sm:$0xff]
        %v1281 = vld [vmem:[%s2 + $0x278] sm:$0xff]
        %v1282 = vld [vmem:[%s2 + $0x280] sm:$0xff]
        %v1283 = vld [vmem:[%s2 + $0x288] sm:$0xff]
        %v1284 = vld [vmem:[%s2 + $0x290] sm:$0xff]
        %v1285 = vld [vmem:[%s2 + $0x298] sm:$0xff]
        %v1286 = vld [vmem:[%s2 + $0x2a0] sm:$0xff]
        %v1287 = vld [vmem:[%s2 + $0x2a8] sm:$0xff]
        %v1288 = vld [vmem:[%s2 + $0x2b0] sm:$0xff]
        %v1289 = vld [vmem:[%s2 + $0x2b8] sm:$0xff]
        %v1290 = vld [vmem:[%s2 + $0x2c0] sm:$0xff]
        %v1291 = vld [vmem:[%s2 + $0x2c8] sm:$0xff]
        %v1292 = vld [vmem:[%s2 + $0x2d0] sm:$0xff]
        %v1293 = vld [vmem:[%s2 + $0x2d8] sm:$0xff]
        %v1294 = vld [vmem:[%s2 + $0x2e0] sm:$0xff]
        %v1295 = vld [vmem:[%s2 + $0x2e8] sm:$0xff]
        %v1296 = vld [vmem:[%s2 + $0x2f0] sm:$0xff]
        %v1297 = vld [vmem:[%s2 + $0x2f8] sm:$0xff]
        %v1298 = vld [vmem:[%s2 + $0x300] sm:$0xff]
        %v1299 = vld [vmem:[%s2 + $0x308] sm:$0xff]
        %v1300 = vld [vmem:[%s2 + $0x310] sm:$0xff]
        %v1301 = vld [vmem:[%s2 + $0x318] sm:$0xff]
        %v1302 = vld [vmem:[%s2 + $0x320] sm:$0xff]
        %v1303 = vld [vmem:[%s2 + $0x328] sm:$0xff]
        %v1304 = vld [vmem:[%s2 + $0x330] sm:$0xff]
        %v1305 = vld [vmem:[%s2 + $0x338] sm:$0xff]
        %v1306 = vld [vmem:[%s2 + $0x340] sm:$0xff]
        %v1307 = vld [vmem:[%s2 + $0x348] sm:$0xff]
        %v1308 = vld [vmem:[%s2 + $0x350] sm:$0xff]
        %v1309 = vld [vmem:[%s2 + $0x358] sm:$0xff]
        %v1310 = vld [vmem:[%s2 + $0x360] sm:$0xff]
        %v1311 = vld [vmem:[%s2 + $0x368] sm:$0xff]
        %v1312 = vld [vmem:[%s2 + $0x370] sm:$0xff]
        %v1313 = vld [vmem:[%s2 + $0x378] sm:$0xff]
        %v1314 = vld [vmem:[%s2 + $0x380] sm:$0xff]
        %v1315 = vld [vmem:[%s2 + $0x388] sm:$0xff]
        %v1316 = vld [vmem:[%s2 + $0x390] sm:$0xff]
        %v1317 = vld [vmem:[%s2 + $0x398] sm:$0xff]
        %v1318 = vld [vmem:[%s2 + $0x3a0] sm:$0xff]
        %v1319 = vld [vmem:[%s2 + $0x3a8] sm:$0xff]
        %v1320 = vld [vmem:[%s2 + $0x3b0] sm:$0xff]
        %v1321 = vld [vmem:[%s2 + $0x3b8] sm:$0xff]
        %v1322 = vld [vmem:[%s2 + $0x3c0] sm:$0xff]
        %v1323 = vld [vmem:[%s2 + $0x3c8] sm:$0xff]
        %v1324 = vld [vmem:[%s2 + $0x3d0] sm:$0xff]
        %v1325 = vld [vmem:[%s2 + $0x3d8] sm:$0xff]
        %v1326 = vld [vmem:[%s2 + $0x3e0] sm:$0xff]
        %v1327 = vld [vmem:[%s2 + $0x3e8] sm:$0xff]
        %v1328 = vld [vmem:[%s2 + $0x3f0] sm:$0xff]
        %v1329 = vld [vmem:[%s2 + $0x3f8] sm:$0xff]
        %v1330 = vld [vmem:[%s3] sm:$0xf]
        %v1332 = vlaneseq
        %v1333 = vshrl.u32 %v1332, 7
        %v1334 = vsub.s32 0, %v1333
        %v1335 = vrot.slane %v1330, %v1334
        %v1336 = vlaneseq
        %v1337 = vshrl.u32 %v1336, 7
        %v1338 = vsub.s32 1, %v1337
        %v1339 = vrot.slane %v1330, %v1338
        %v1340 = vlaneseq
        %v1341 = vshrl.u32 %v1340, 7
        %v1342 = vsub.s32 2, %v1341
        %v1343 = vrot.slane %v1330, %v1342
        %v1344 = vlaneseq
        %v1345 = vshrl.u32 %v1344, 7
        %v1346 = vsub.s32 3, %v1345
        %v1347 = vrot.slane %v1330, %v1346
        %v1480 = vunpack.c.l.b16 %v1202
        %v1481 = vunpack.c.h.b16 %v1202
        %v1482 = vunpack.c.l.b16 %v1203
        %v1483 = vunpack.c.h.b16 %v1203
        %v1484 = vunpack.c.l.b16 %v1204
        %v1485 = vunpack.c.h.b16 %v1204
        %v1486 = vunpack.c.l.b16 %v1205
        %v1487 = vunpack.c.h.b16 %v1205
        %v1488 = vunpack.c.l.b16 %v1206
        %v1489 = vunpack.c.h.b16 %v1206
        %v1490 = vunpack.c.l.b16 %v1207
        %v1491 = vunpack.c.h.b16 %v1207
        %v1492 = vunpack.c.l.b16 %v1208
        %v1493 = vunpack.c.h.b16 %v1208
        %v1494 = vunpack.c.l.b16 %v1209
        %v1495 = vunpack.c.h.b16 %v1209
        %v1496 = vunpack.c.l.b16 %v1210
        %v1497 = vunpack.c.h.b16 %v1210
        %v1498 = vunpack.c.l.b16 %v1211
        %v1499 = vunpack.c.h.b16 %v1211
        %v1500 = vunpack.c.l.b16 %v1212
        %v1501 = vunpack.c.h.b16 %v1212
        %v1502 = vunpack.c.l.b16 %v1213
        %v1503 = vunpack.c.h.b16 %v1213
        %v1504 = vunpack.c.l.b16 %v1214
        %v1505 = vunpack.c.h.b16 %v1214
        %v1506 = vunpack.c.l.b16 %v1215
        %v1507 = vunpack.c.h.b16 %v1215
        %v1508 = vunpack.c.l.b16 %v1216
        %v1509 = vunpack.c.h.b16 %v1216
        %v1510 = vunpack.c.l.b16 %v1217
        %v1511 = vunpack.c.h.b16 %v1217
        %v1512 = vunpack.c.l.b16 %v1218
        %v1513 = vunpack.c.h.b16 %v1218
        %v1514 = vunpack.c.l.b16 %v1219
        %v1515 = vunpack.c.h.b16 %v1219
        %v1516 = vunpack.c.l.b16 %v1220
        %v1517 = vunpack.c.h.b16 %v1220
        %v1518 = vunpack.c.l.b16 %v1221
        %v1519 = vunpack.c.h.b16 %v1221
        %v1520 = vunpack.c.l.b16 %v1222
        %v1521 = vunpack.c.h.b16 %v1222
        %v1522 = vunpack.c.l.b16 %v1223
        %v1523 = vunpack.c.h.b16 %v1223
        %v1524 = vunpack.c.l.b16 %v1224
        %v1525 = vunpack.c.h.b16 %v1224
        %v1526 = vunpack.c.l.b16 %v1225
        %v1527 = vunpack.c.h.b16 %v1225
        %v1528 = vunpack.c.l.b16 %v1226
        %v1529 = vunpack.c.h.b16 %v1226
        %v1530 = vunpack.c.l.b16 %v1227
        %v1531 = vunpack.c.h.b16 %v1227
        %v1532 = vunpack.c.l.b16 %v1228
        %v1533 = vunpack.c.h.b16 %v1228
        %v1534 = vunpack.c.l.b16 %v1229
        %v1535 = vunpack.c.h.b16 %v1229
        %v1536 = vunpack.c.l.b16 %v1230
        %v1537 = vunpack.c.h.b16 %v1230
        %v1538 = vunpack.c.l.b16 %v1231
        %v1539 = vunpack.c.h.b16 %v1231
        %v1540 = vunpack.c.l.b16 %v1232
        %v1541 = vunpack.c.h.b16 %v1232
        %v1542 = vunpack.c.l.b16 %v1233
        %v1543 = vunpack.c.h.b16 %v1233
        %v1544 = vunpack.c.l.b16 %v1234
        %v1545 = vunpack.c.h.b16 %v1234
        %v1546 = vunpack.c.l.b16 %v1235
        %v1547 = vunpack.c.h.b16 %v1235
        %v1548 = vunpack.c.l.b16 %v1236
        %v1549 = vunpack.c.h.b16 %v1236
        %v1550 = vunpack.c.l.b16 %v1237
        %v1551 = vunpack.c.h.b16 %v1237
        %v1552 = vunpack.c.l.b16 %v1238
        %v1553 = vunpack.c.h.b16 %v1238
        %v1554 = vunpack.c.l.b16 %v1239
        %v1555 = vunpack.c.h.b16 %v1239
        %v1556 = vunpack.c.l.b16 %v1240
        %v1557 = vunpack.c.h.b16 %v1240
        %v1558 = vunpack.c.l.b16 %v1241
        %v1559 = vunpack.c.h.b16 %v1241
        %v1560 = vunpack.c.l.b16 %v1242
        %v1561 = vunpack.c.h.b16 %v1242
        %v1562 = vunpack.c.l.b16 %v1243
        %v1563 = vunpack.c.h.b16 %v1243
        %v1564 = vunpack.c.l.b16 %v1244
        %v1565 = vunpack.c.h.b16 %v1244
        %v1566 = vunpack.c.l.b16 %v1245
        %v1567 = vunpack.c.h.b16 %v1245
        %v1568 = vunpack.c.l.b16 %v1246
        %v1569 = vunpack.c.h.b16 %v1246
        %v1570 = vunpack.c.l.b16 %v1247
        %v1571 = vunpack.c.h.b16 %v1247
        %v1572 = vunpack.c.l.b16 %v1248
        %v1573 = vunpack.c.h.b16 %v1248
        %v1574 = vunpack.c.l.b16 %v1249
        %v1575 = vunpack.c.h.b16 %v1249
        %v1576 = vunpack.c.l.b16 %v1250
        %v1577 = vunpack.c.h.b16 %v1250
        %v1578 = vunpack.c.l.b16 %v1251
        %v1579 = vunpack.c.h.b16 %v1251
        %v1580 = vunpack.c.l.b16 %v1252
        %v1581 = vunpack.c.h.b16 %v1252
        %v1582 = vunpack.c.l.b16 %v1253
        %v1583 = vunpack.c.h.b16 %v1253
        %v1584 = vunpack.c.l.b16 %v1254
        %v1585 = vunpack.c.h.b16 %v1254
        %v1586 = vunpack.c.l.b16 %v1255
        %v1587 = vunpack.c.h.b16 %v1255
        %v1588 = vunpack.c.l.b16 %v1256
        %v1589 = vunpack.c.h.b16 %v1256
        %v1590 = vunpack.c.l.b16 %v1257
        %v1591 = vunpack.c.h.b16 %v1257
        %v1592 = vunpack.c.l.b16 %v1258
        %v1593 = vunpack.c.h.b16 %v1258
        %v1594 = vunpack.c.l.b16 %v1259
        %v1595 = vunpack.c.h.b16 %v1259
        %v1596 = vunpack.c.l.b16 %v1260
        %v1597 = vunpack.c.h.b16 %v1260
        %v1598 = vunpack.c.l.b16 %v1261
        %v1599 = vunpack.c.h.b16 %v1261
        %v1600 = vunpack.c.l.b16 %v1262
        %v1601 = vunpack.c.h.b16 %v1262
        %v1602 = vunpack.c.l.b16 %v1263
        %v1603 = vunpack.c.h.b16 %v1263
        %v1604 = vunpack.c.l.b16 %v1264
        %v1605 = vunpack.c.h.b16 %v1264
        %v1606 = vunpack.c.l.b16 %v1265
        %v1607 = vunpack.c.h.b16 %v1265
        %v1608 = vunpack.c.l.b16 %v1266
        %v1609 = vunpack.c.h.b16 %v1266
        %v1610 = vunpack.c.l.b16 %v1267
        %v1611 = vunpack.c.h.b16 %v1267
        %v1612 = vunpack.c.l.b16 %v1268
        %v1613 = vunpack.c.h.b16 %v1268
        %v1614 = vunpack.c.l.b16 %v1269
        %v1615 = vunpack.c.h.b16 %v1269
        %v1616 = vunpack.c.l.b16 %v1270
        %v1617 = vunpack.c.h.b16 %v1270
        %v1618 = vunpack.c.l.b16 %v1271
        %v1619 = vunpack.c.h.b16 %v1271
        %v1620 = vunpack.c.l.b16 %v1272
        %v1621 = vunpack.c.h.b16 %v1272
        %v1622 = vunpack.c.l.b16 %v1273
        %v1623 = vunpack.c.h.b16 %v1273
        %v1624 = vunpack.c.l.b16 %v1274
        %v1625 = vunpack.c.h.b16 %v1274
        %v1626 = vunpack.c.l.b16 %v1275
        %v1627 = vunpack.c.h.b16 %v1275
        %v1628 = vunpack.c.l.b16 %v1276
        %v1629 = vunpack.c.h.b16 %v1276
        %v1630 = vunpack.c.l.b16 %v1277
        %v1631 = vunpack.c.h.b16 %v1277
        %v1632 = vunpack.c.l.b16 %v1278
        %v1633 = vunpack.c.h.b16 %v1278
        %v1634 = vunpack.c.l.b16 %v1279
        %v1635 = vunpack.c.h.b16 %v1279
        %v1636 = vunpack.c.l.b16 %v1280
        %v1637 = vunpack.c.h.b16 %v1280
        %v1638 = vunpack.c.l.b16 %v1281
        %v1639 = vunpack.c.h.b16 %v1281
        %v1640 = vunpack.c.l.b16 %v1282
        %v1641 = vunpack.c.h.b16 %v1282
        %v1642 = vunpack.c.l.b16 %v1283
        %v1643 = vunpack.c.h.b16 %v1283
        %v1644 = vunpack.c.l.b16 %v1284
        %v1645 = vunpack.c.h.b16 %v1284
        %v1646 = vunpack.c.l.b16 %v1285
        %v1647 = vunpack.c.h.b16 %v1285
        %v1648 = vunpack.c.l.b16 %v1286
        %v1649 = vunpack.c.h.b16 %v1286
        %v1650 = vunpack.c.l.b16 %v1287
        %v1651 = vunpack.c.h.b16 %v1287
        %v1652 = vunpack.c.l.b16 %v1288
        %v1653 = vunpack.c.h.b16 %v1288
        %v1654 = vunpack.c.l.b16 %v1289
        %v1655 = vunpack.c.h.b16 %v1289
        %v1656 = vunpack.c.l.b16 %v1290
        %v1657 = vunpack.c.h.b16 %v1290
        %v1658 = vunpack.c.l.b16 %v1291
        %v1659 = vunpack.c.h.b16 %v1291
        %v1660 = vunpack.c.l.b16 %v1292
        %v1661 = vunpack.c.h.b16 %v1292
        %v1662 = vunpack.c.l.b16 %v1293
        %v1663 = vunpack.c.h.b16 %v1293
        %v1664 = vunpack.c.l.b16 %v1294
        %v1665 = vunpack.c.h.b16 %v1294
        %v1666 = vunpack.c.l.b16 %v1295
        %v1667 = vunpack.c.h.b16 %v1295
        %v1668 = vunpack.c.l.b16 %v1296
        %v1669 = vunpack.c.h.b16 %v1296
        %v1670 = vunpack.c.l.b16 %v1297
        %v1671 = vunpack.c.h.b16 %v1297
        %v1672 = vunpack.c.l.b16 %v1298
        %v1673 = vunpack.c.h.b16 %v1298
        %v1674 = vunpack.c.l.b16 %v1299
        %v1675 = vunpack.c.h.b16 %v1299
        %v1676 = vunpack.c.l.b16 %v1300
        %v1677 = vunpack.c.h.b16 %v1300
        %v1678 = vunpack.c.l.b16 %v1301
        %v1679 = vunpack.c.h.b16 %v1301
        %v1680 = vunpack.c.l.b16 %v1302
        %v1681 = vunpack.c.h.b16 %v1302
        %v1682 = vunpack.c.l.b16 %v1303
        %v1683 = vunpack.c.h.b16 %v1303
        %v1684 = vunpack.c.l.b16 %v1304
        %v1685 = vunpack.c.h.b16 %v1304
        %v1686 = vunpack.c.l.b16 %v1305
        %v1687 = vunpack.c.h.b16 %v1305
        %v1688 = vunpack.c.l.b16 %v1306
        %v1689 = vunpack.c.h.b16 %v1306
        %v1690 = vunpack.c.l.b16 %v1307
        %v1691 = vunpack.c.h.b16 %v1307
        %v1692 = vunpack.c.l.b16 %v1308
        %v1693 = vunpack.c.h.b16 %v1308
        %v1694 = vunpack.c.l.b16 %v1309
        %v1695 = vunpack.c.h.b16 %v1309
        %v1696 = vunpack.c.l.b16 %v1310
        %v1697 = vunpack.c.h.b16 %v1310
        %v1698 = vunpack.c.l.b16 %v1311
        %v1699 = vunpack.c.h.b16 %v1311
        %v1700 = vunpack.c.l.b16 %v1312
        %v1701 = vunpack.c.h.b16 %v1312
        %v1702 = vunpack.c.l.b16 %v1313
        %v1703 = vunpack.c.h.b16 %v1313
        %v1704 = vunpack.c.l.b16 %v1314
        %v1705 = vunpack.c.h.b16 %v1314
        %v1706 = vunpack.c.l.b16 %v1315
        %v1707 = vunpack.c.h.b16 %v1315
        %v1708 = vunpack.c.l.b16 %v1316
        %v1709 = vunpack.c.h.b16 %v1316
        %v1710 = vunpack.c.l.b16 %v1317
        %v1711 = vunpack.c.h.b16 %v1317
        %v1712 = vunpack.c.l.b16 %v1318
        %v1713 = vunpack.c.h.b16 %v1318
        %v1714 = vunpack.c.l.b16 %v1319
        %v1715 = vunpack.c.h.b16 %v1319
        %v1716 = vunpack.c.l.b16 %v1320
        %v1717 = vunpack.c.h.b16 %v1320
        %v1718 = vunpack.c.l.b16 %v1321
        %v1719 = vunpack.c.h.b16 %v1321
        %v1720 = vunpack.c.l.b16 %v1322
        %v1721 = vunpack.c.h.b16 %v1322
        %v1722 = vunpack.c.l.b16 %v1323
        %v1723 = vunpack.c.h.b16 %v1323
        %v1724 = vunpack.c.l.b16 %v1324
        %v1725 = vunpack.c.h.b16 %v1324
        %v1726 = vunpack.c.l.b16 %v1325
        %v1727 = vunpack.c.h.b16 %v1325
        %v1728 = vunpack.c.l.b16 %v1326
        %v1729 = vunpack.c.h.b16 %v1326
        %v1730 = vunpack.c.l.b16 %v1327
        %v1731 = vunpack.c.h.b16 %v1327
        %v1732 = vunpack.c.l.b16 %v1328
        %v1733 = vunpack.c.h.b16 %v1328
        %v1734 = vunpack.c.l.b16 %v1329
        %v1735 = vunpack.c.h.b16 %v1329
        %v1736 = vpack.c.b16 %v1484, %v1480
        %v1737 = vpack.c.b16 %v1485, %v1481
        %v1738 = vpack.c.b16 %v1486, %v1482
        %v1739 = vpack.c.b16 %v1487, %v1483
        %v1740 = vpack.c.b16 %v1492, %v1488
        %v1741 = vpack.c.b16 %v1493, %v1489
        %v1742 = vpack.c.b16 %v1494, %v1490
        %v1743 = vpack.c.b16 %v1495, %v1491
        %v1744 = vpack.c.b16 %v1500, %v1496
        %v1745 = vpack.c.b16 %v1501, %v1497
        %v1746 = vpack.c.b16 %v1502, %v1498
        %v1747 = vpack.c.b16 %v1503, %v1499
        %v1748 = vpack.c.b16 %v1508, %v1504
        %v1749 = vpack.c.b16 %v1509, %v1505
        %v1750 = vpack.c.b16 %v1510, %v1506
        %v1751 = vpack.c.b16 %v1511, %v1507
        %v1752 = vpack.c.b16 %v1516, %v1512
        %v1753 = vpack.c.b16 %v1517, %v1513
        %v1754 = vpack.c.b16 %v1518, %v1514
        %v1755 = vpack.c.b16 %v1519, %v1515
        %v1756 = vpack.c.b16 %v1524, %v1520
        %v1757 = vpack.c.b16 %v1525, %v1521
        %v1758 = vpack.c.b16 %v1526, %v1522
        %v1759 = vpack.c.b16 %v1527, %v1523
        %v1760 = vpack.c.b16 %v1532, %v1528
        %v1761 = vpack.c.b16 %v1533, %v1529
        %v1762 = vpack.c.b16 %v1534, %v1530
        %v1763 = vpack.c.b16 %v1535, %v1531
        %v1764 = vpack.c.b16 %v1540, %v1536
        %v1765 = vpack.c.b16 %v1541, %v1537
        %v1766 = vpack.c.b16 %v1542, %v1538
        %v1767 = vpack.c.b16 %v1543, %v1539
        %v1768 = vpack.c.b16 %v1548, %v1544
        %v1769 = vpack.c.b16 %v1549, %v1545
        %v1770 = vpack.c.b16 %v1550, %v1546
        %v1771 = vpack.c.b16 %v1551, %v1547
        %v1772 = vpack.c.b16 %v1556, %v1552
        %v1773 = vpack.c.b16 %v1557, %v1553
        %v1774 = vpack.c.b16 %v1558, %v1554
        %v1775 = vpack.c.b16 %v1559, %v1555
        %v1776 = vpack.c.b16 %v1564, %v1560
        %v1777 = vpack.c.b16 %v1565, %v1561
        %v1778 = vpack.c.b16 %v1566, %v1562
        %v1779 = vpack.c.b16 %v1567, %v1563
        %v1780 = vpack.c.b16 %v1572, %v1568
        %v1781 = vpack.c.b16 %v1573, %v1569
        %v1782 = vpack.c.b16 %v1574, %v1570
        %v1783 = vpack.c.b16 %v1575, %v1571
        %v1784 = vpack.c.b16 %v1580, %v1576
        %v1785 = vpack.c.b16 %v1581, %v1577
        %v1786 = vpack.c.b16 %v1582, %v1578
        %v1787 = vpack.c.b16 %v1583, %v1579
        %v1788 = vpack.c.b16 %v1588, %v1584
        %v1789 = vpack.c.b16 %v1589, %v1585
        %v1790 = vpack.c.b16 %v1590, %v1586
        %v1791 = vpack.c.b16 %v1591, %v1587
        %v1792 = vpack.c.b16 %v1596, %v1592
        %v1793 = vpack.c.b16 %v1597, %v1593
        %v1794 = vpack.c.b16 %v1598, %v1594
        %v1795 = vpack.c.b16 %v1599, %v1595
        %v1796 = vpack.c.b16 %v1604, %v1600
        %v1797 = vpack.c.b16 %v1605, %v1601
        %v1798 = vpack.c.b16 %v1606, %v1602
        %v1799 = vpack.c.b16 %v1607, %v1603
        %v1800 = vpack.c.b16 %v1612, %v1608
        %v1801 = vpack.c.b16 %v1613, %v1609
        %v1802 = vpack.c.b16 %v1614, %v1610
        %v1803 = vpack.c.b16 %v1615, %v1611
        %v1804 = vpack.c.b16 %v1620, %v1616
        %v1805 = vpack.c.b16 %v1621, %v1617
        %v1806 = vpack.c.b16 %v1622, %v1618
        %v1807 = vpack.c.b16 %v1623, %v1619
        %v1808 = vpack.c.b16 %v1628, %v1624
        %v1809 = vpack.c.b16 %v1629, %v1625
        %v1810 = vpack.c.b16 %v1630, %v1626
        %v1811 = vpack.c.b16 %v1631, %v1627
        %v1812 = vpack.c.b16 %v1636, %v1632
        %v1813 = vpack.c.b16 %v1637, %v1633
        %v1814 = vpack.c.b16 %v1638, %v1634
        %v1815 = vpack.c.b16 %v1639, %v1635
        %v1816 = vpack.c.b16 %v1644, %v1640
        %v1817 = vpack.c.b16 %v1645, %v1641
        %v1818 = vpack.c.b16 %v1646, %v1642
        %v1819 = vpack.c.b16 %v1647, %v1643
        %v1820 = vpack.c.b16 %v1652, %v1648
        %v1821 = vpack.c.b16 %v1653, %v1649
        %v1822 = vpack.c.b16 %v1654, %v1650
        %v1823 = vpack.c.b16 %v1655, %v1651
        %v1824 = vpack.c.b16 %v1660, %v1656
        %v1825 = vpack.c.b16 %v1661, %v1657
        %v1826 = vpack.c.b16 %v1662, %v1658
        %v1827 = vpack.c.b16 %v1663, %v1659
        %v1828 = vpack.c.b16 %v1668, %v1664
        %v1829 = vpack.c.b16 %v1669, %v1665
        %v1830 = vpack.c.b16 %v1670, %v1666
        %v1831 = vpack.c.b16 %v1671, %v1667
        %v1832 = vpack.c.b16 %v1676, %v1672
        %v1833 = vpack.c.b16 %v1677, %v1673
        %v1834 = vpack.c.b16 %v1678, %v1674
        %v1835 = vpack.c.b16 %v1679, %v1675
        %v1836 = vpack.c.b16 %v1684, %v1680
        %v1837 = vpack.c.b16 %v1685, %v1681
        %v1838 = vpack.c.b16 %v1686, %v1682
        %v1839 = vpack.c.b16 %v1687, %v1683
        %v1840 = vpack.c.b16 %v1692, %v1688
        %v1841 = vpack.c.b16 %v1693, %v1689
        %v1842 = vpack.c.b16 %v1694, %v1690
        %v1843 = vpack.c.b16 %v1695, %v1691
        %v1844 = vpack.c.b16 %v1700, %v1696
        %v1845 = vpack.c.b16 %v1701, %v1697
        %v1846 = vpack.c.b16 %v1702, %v1698
        %v1847 = vpack.c.b16 %v1703, %v1699
        %v1848 = vpack.c.b16 %v1708, %v1704
        %v1849 = vpack.c.b16 %v1709, %v1705
        %v1850 = vpack.c.b16 %v1710, %v1706
        %v1851 = vpack.c.b16 %v1711, %v1707
        %v1852 = vpack.c.b16 %v1716, %v1712
        %v1853 = vpack.c.b16 %v1717, %v1713
        %v1854 = vpack.c.b16 %v1718, %v1714
        %v1855 = vpack.c.b16 %v1719, %v1715
        %v1856 = vpack.c.b16 %v1724, %v1720
        %v1857 = vpack.c.b16 %v1725, %v1721
        %v1858 = vpack.c.b16 %v1726, %v1722
        %v1859 = vpack.c.b16 %v1727, %v1723
        %v1860 = vpack.c.b16 %v1732, %v1728
        %v1861 = vpack.c.b16 %v1733, %v1729
        %v1862 = vpack.c.b16 %v1734, %v1730
        %v1863 = vpack.c.b16 %v1735, %v1731
        %1992 = vmatprep.subr.bf16.mxu0 %v1765
        %1993 = vmatpush1.bf16.msra.mxu0 %v1764
        %1994 = vmatprep.subr.bf16.mxu0 %v1761
        %1995 = vmatpush1.bf16.msra.mxu0 %v1760
        %1996 = vmatprep.subr.bf16.mxu0 %v1757
        %1997 = vmatpush1.bf16.msra.mxu0 %v1756
        %1998 = vmatprep.subr.bf16.mxu0 %v1753
        %1999 = vmatpush1.bf16.msra.mxu0 %v1752
        %2000 = vmatprep.subr.bf16.mxu0 %v1749
        %2001 = vmatpush1.bf16.msra.mxu0 %v1748
        %2002 = vmatprep.subr.bf16.mxu0 %v1745
        %2003 = vmatpush1.bf16.msra.mxu0 %v1744
        %2004 = vmatprep.subr.bf16.mxu0 %v1741
        %2005 = vmatpush1.bf16.msra.mxu0 %v1740
        %2006 = vmatprep.subr.bf16.mxu0 %v1737
        %2007 = vmatpush1.bf16.msra.mxu0 %v1736
        %2008 = vmatprep.subr.bf16.mxu0 %v1797
        %2009 = vmatpush2.bf16.msra.mxu0 %v1796
        %2010 = vmatprep.subr.bf16.mxu0 %v1793
        %2011 = vmatpush2.bf16.msra.mxu0 %v1792
        %2012 = vmatprep.subr.bf16.mxu0 %v1789
        %2013 = vmatpush2.bf16.msra.mxu0 %v1788
        %2014 = vmatprep.subr.bf16.mxu0 %v1785
        %2015 = vmatpush2.bf16.msra.mxu0 %v1784
        %2016 = vmatprep.subr.bf16.mxu0 %v1781
        %2017 = vmatpush2.bf16.msra.mxu0 %v1780
        %2018 = vmatprep.subr.bf16.mxu0 %v1777
        %2019 = vmatpush2.bf16.msra.mxu0 %v1776
        %2020 = vmatprep.subr.bf16.mxu0 %v1773
        %2021 = vmatpush2.bf16.msra.mxu0 %v1772
        %2022 = vmatprep.subr.bf16.mxu0 %v1769
        %2023 = vmatpush2.bf16.msra.mxu0 %v1768
        %2024 = vmatprep.mubr.bf16.mxu0 %v1139
        %2025 = vmatmul.mubr.bf16.gmra.mxu0 %v1138
        %v2026 = vpop.f32.mrf.mxu0
        %v2027 = vadd.f32 %v1335, %v2026
        %v2028 = vpop.f32.mrf.mxu0
        %v2029 = vadd.f32 %v1339, %v2028
        %v2030 = vpop.f32.mrf.mxu0
        %v2031 = vadd.f32 %v1335, %v2030
        %v2032 = vpop.f32.mrf.mxu0
        %v2033 = vadd.f32 %v1339, %v2032
        %2034 = vmatprep.mubr.bf16.mxu0 %v1143
        %2035 = vmatmul.mubr.bf16.gmra.mxu0 %v1142
        %v2036 = vpop.f32.mrf.mxu0
        %v2037 = vadd.f32 %v1335, %v2036
        %v2038 = vpop.f32.mrf.mxu0
        %v2039 = vadd.f32 %v1339, %v2038
        %v2040 = vpop.f32.mrf.mxu0
        %v2041 = vadd.f32 %v1335, %v2040
        %v2042 = vpop.f32.mrf.mxu0
        %v2043 = vadd.f32 %v1339, %v2042
        %2044 = vmatprep.mubr.bf16.mxu0 %v1147
        %2045 = vmatmul.mubr.bf16.gmra.mxu0 %v1146
        %v2046 = vpop.f32.mrf.mxu0
        %v2047 = vadd.f32 %v1335, %v2046
        %v2048 = vpop.f32.mrf.mxu0
        %v2049 = vadd.f32 %v1339, %v2048
        %v2050 = vpop.f32.mrf.mxu0
        %v2051 = vadd.f32 %v1335, %v2050
        %v2052 = vpop.f32.mrf.mxu0
        %v2053 = vadd.f32 %v1339, %v2052
        %2054 = vmatprep.mubr.bf16.mxu0 %v1151
        %2055 = vmatmul.mubr.bf16.gmra.mxu0 %v1150
        %v2056 = vpop.f32.mrf.mxu0
        %v2057 = vadd.f32 %v1335, %v2056
        %v2058 = vpop.f32.mrf.mxu0
        %v2059 = vadd.f32 %v1339, %v2058
        %v2060 = vpop.f32.mrf.mxu0
        %v2061 = vadd.f32 %v1335, %v2060
        %v2062 = vpop.f32.mrf.mxu0
        %v2063 = vadd.f32 %v1339, %v2062
        %2064 = vmatprep.mubr.bf16.mxu0 %v1155
        %2065 = vmatmul.mubr.bf16.gmra.mxu0 %v1154
        %v2066 = vpop.f32.mrf.mxu0
        %v2067 = vadd.f32 %v1335, %v2066
        %v2068 = vpop.f32.mrf.mxu0
        %v2069 = vadd.f32 %v1339, %v2068
        %v2070 = vpop.f32.mrf.mxu0
        %v2071 = vadd.f32 %v1335, %v2070
        %v2072 = vpop.f32.mrf.mxu0
        %v2073 = vadd.f32 %v1339, %v2072
        %2074 = vmatprep.mubr.bf16.mxu0 %v1159
        %2075 = vmatmul.mubr.bf16.gmra.mxu0 %v1158
        %v2076 = vpop.f32.mrf.mxu0
        %v2077 = vadd.f32 %v1335, %v2076
        %v2078 = vpop.f32.mrf.mxu0
        %v2079 = vadd.f32 %v1339, %v2078
        %v2080 = vpop.f32.mrf.mxu0
        %v2081 = vadd.f32 %v1335, %v2080
        %v2082 = vpop.f32.mrf.mxu0
        %v2083 = vadd.f32 %v1339, %v2082
        %2084 = vmatprep.mubr.bf16.mxu0 %v1163
        %2085 = vmatmul.mubr.bf16.gmra.mxu0 %v1162
        %v2086 = vpop.f32.mrf.mxu0
        %v2087 = vadd.f32 %v1335, %v2086
        %v2088 = vpop.f32.mrf.mxu0
        %v2089 = vadd.f32 %v1339, %v2088
        %v2090 = vpop.f32.mrf.mxu0
        %v2091 = vadd.f32 %v1335, %v2090
        %v2092 = vpop.f32.mrf.mxu0
        %v2093 = vadd.f32 %v1339, %v2092
        %2094 = vmatprep.mubr.bf16.mxu0 %v1167
        %2095 = vmatmul.mubr.bf16.gmra.mxu0 %v1166
        %v2096 = vpop.f32.mrf.mxu0
        %v2097 = vadd.f32 %v1335, %v2096
        %v2098 = vpop.f32.mrf.mxu0
        %v2099 = vadd.f32 %v1339, %v2098
        %v2100 = vpop.f32.mrf.mxu0
        %v2101 = vadd.f32 %v1335, %v2100
        %v2102 = vpop.f32.mrf.mxu0
        %v2103 = vadd.f32 %v1339, %v2102
        %2104 = vmatprep.mubr.bf16.mxu0 %v1171
        %2105 = vmatmul.mubr.bf16.gmra.mxu0 %v1170
        %v2106 = vpop.f32.mrf.mxu0
        %v2107 = vadd.f32 %v1335, %v2106
        %v2108 = vpop.f32.mrf.mxu0
        %v2109 = vadd.f32 %v1339, %v2108
        %v2110 = vpop.f32.mrf.mxu0
        %v2111 = vadd.f32 %v1335, %v2110
        %v2112 = vpop.f32.mrf.mxu0
        %v2113 = vadd.f32 %v1339, %v2112
        %2114 = vmatprep.mubr.bf16.mxu0 %v1175
        %2115 = vmatmul.mubr.bf16.gmra.mxu0 %v1174
        %v2116 = vpop.f32.mrf.mxu0
        %v2117 = vadd.f32 %v1335, %v2116
        %v2118 = vpop.f32.mrf.mxu0
        %v2119 = vadd.f32 %v1339, %v2118
        %v2120 = vpop.f32.mrf.mxu0
        %v2121 = vadd.f32 %v1335, %v2120
        %v2122 = vpop.f32.mrf.mxu0
        %v2123 = vadd.f32 %v1339, %v2122
        %2124 = vmatprep.mubr.bf16.mxu0 %v1179
        %2125 = vmatmul.mubr.bf16.gmra.mxu0 %v1178
        %v2126 = vpop.f32.mrf.mxu0
        %v2127 = vadd.f32 %v1335, %v2126
        %v2128 = vpop.f32.mrf.mxu0
        %v2129 = vadd.f32 %v1339, %v2128
        %v2130 = vpop.f32.mrf.mxu0
        %v2131 = vadd.f32 %v1335, %v2130
        %v2132 = vpop.f32.mrf.mxu0
        %v2133 = vadd.f32 %v1339, %v2132
        %2134 = vmatprep.mubr.bf16.mxu0 %v1183
        %2135 = vmatmul.mubr.bf16.gmra.mxu0 %v1182
        %v2136 = vpop.f32.mrf.mxu0
        %v2137 = vadd.f32 %v1335, %v2136
        %v2138 = vpop.f32.mrf.mxu0
        %v2139 = vadd.f32 %v1339, %v2138
        %v2140 = vpop.f32.mrf.mxu0
        %v2141 = vadd.f32 %v1335, %v2140
        %v2142 = vpop.f32.mrf.mxu0
        %v2143 = vadd.f32 %v1339, %v2142
        %2144 = vmatprep.mubr.bf16.mxu0 %v1187
        %2145 = vmatmul.mubr.bf16.gmra.mxu0 %v1186
        %v2146 = vpop.f32.mrf.mxu0
        %v2147 = vadd.f32 %v1335, %v2146
        %v2148 = vpop.f32.mrf.mxu0
        %v2149 = vadd.f32 %v1339, %v2148
        %v2150 = vpop.f32.mrf.mxu0
        %v2151 = vadd.f32 %v1335, %v2150
        %v2152 = vpop.f32.mrf.mxu0
        %v2153 = vadd.f32 %v1339, %v2152
        %2154 = vmatprep.mubr.bf16.mxu0 %v1191
        %2155 = vmatmul.mubr.bf16.gmra.mxu0 %v1190
        %v2156 = vpop.f32.mrf.mxu0
        %v2157 = vadd.f32 %v1335, %v2156
        %v2158 = vpop.f32.mrf.mxu0
        %v2159 = vadd.f32 %v1339, %v2158
        %v2160 = vpop.f32.mrf.mxu0
        %v2161 = vadd.f32 %v1335, %v2160
        %v2162 = vpop.f32.mrf.mxu0
        %v2163 = vadd.f32 %v1339, %v2162
        %2164 = vmatprep.mubr.bf16.mxu0 %v1195
        %2165 = vmatmul.mubr.bf16.gmra.mxu0 %v1194
        %v2166 = vpop.f32.mrf.mxu0
        %v2167 = vadd.f32 %v1335, %v2166
        %v2168 = vpop.f32.mrf.mxu0
        %v2169 = vadd.f32 %v1339, %v2168
        %v2170 = vpop.f32.mrf.mxu0
        %v2171 = vadd.f32 %v1335, %v2170
        %v2172 = vpop.f32.mrf.mxu0
        %v2173 = vadd.f32 %v1339, %v2172
        %2174 = vmatprep.mubr.bf16.mxu0 %v1199
        %2175 = vmatmul.mubr.bf16.gmra.mxu0 %v1198
        %v2176 = vpop.f32.mrf.mxu0
        %v2177 = vadd.f32 %v1335, %v2176
        %v2178 = vpop.f32.mrf.mxu0
        %v2179 = vadd.f32 %v1339, %v2178
        %v2180 = vpop.f32.mrf.mxu0
        %v2181 = vadd.f32 %v1335, %v2180
        %v2182 = vpop.f32.mrf.mxu0
        %v2183 = vadd.f32 %v1339, %v2182
        %2184 = vdwg.mxu0
        %2185 = vmatprep.subr.bf16.mxu0 %v1829
        %2186 = vmatpush1.bf16.msra.mxu0 %v1828
        %2187 = vmatprep.subr.bf16.mxu0 %v1825
        %2188 = vmatpush1.bf16.msra.mxu0 %v1824
        %2189 = vmatprep.subr.bf16.mxu0 %v1821
        %2190 = vmatpush1.bf16.msra.mxu0 %v1820
        %2191 = vmatprep.subr.bf16.mxu0 %v1817
        %2192 = vmatpush1.bf16.msra.mxu0 %v1816
        %2193 = vmatprep.subr.bf16.mxu0 %v1813
        %2194 = vmatpush1.bf16.msra.mxu0 %v1812
        %2195 = vmatprep.subr.bf16.mxu0 %v1809
        %2196 = vmatpush1.bf16.msra.mxu0 %v1808
        %2197 = vmatprep.subr.bf16.mxu0 %v1805
        %2198 = vmatpush1.bf16.msra.mxu0 %v1804
        %2199 = vmatprep.subr.bf16.mxu0 %v1801
        %2200 = vmatpush1.bf16.msra.mxu0 %v1800
        %2201 = vmatprep.subr.bf16.mxu0 %v1861
        %2202 = vmatpush2.bf16.msra.mxu0 %v1860
        %2203 = vmatprep.subr.bf16.mxu0 %v1857
        %2204 = vmatpush2.bf16.msra.mxu0 %v1856
        %2205 = vmatprep.subr.bf16.mxu0 %v1853
        %2206 = vmatpush2.bf16.msra.mxu0 %v1852
        %2207 = vmatprep.subr.bf16.mxu0 %v1849
        %2208 = vmatpush2.bf16.msra.mxu0 %v1848
        %2209 = vmatprep.subr.bf16.mxu0 %v1845
        %2210 = vmatpush2.bf16.msra.mxu0 %v1844
        %2211 = vmatprep.subr.bf16.mxu0 %v1841
        %2212 = vmatpush2.bf16.msra.mxu0 %v1840
        %2213 = vmatprep.subr.bf16.mxu0 %v1837
        %2214 = vmatpush2.bf16.msra.mxu0 %v1836
        %2215 = vmatprep.subr.bf16.mxu0 %v1833
        %2216 = vmatpush2.bf16.msra.mxu0 %v1832
        %2217 = vmatprep.mubr.bf16.mxu0 %v1141
        %2218 = vmatmul.mubr.bf16.gmra.mxu0 %v1140
        %v2219 = vpop.f32.mrf.mxu0
        %v2220 = vadd.f32 %v2027, %v2219
        %v2221 = vpop.f32.mrf.mxu0
        %v2222 = vadd.f32 %v2029, %v2221
        %v2223 = vpop.f32.mrf.mxu0
        %v2224 = vadd.f32 %v2031, %v2223
        %v2225 = vpop.f32.mrf.mxu0
        %v2226 = vadd.f32 %v2033, %v2225
        %2227 = vmatprep.mubr.bf16.mxu0 %v1145
        %2228 = vmatmul.mubr.bf16.gmra.mxu0 %v1144
        %v2229 = vpop.f32.mrf.mxu0
        %v2230 = vadd.f32 %v2037, %v2229
        %v2231 = vpop.f32.mrf.mxu0
        %v2232 = vadd.f32 %v2039, %v2231
        %v2233 = vpop.f32.mrf.mxu0
        %v2234 = vadd.f32 %v2041, %v2233
        %v2235 = vpop.f32.mrf.mxu0
        %v2236 = vadd.f32 %v2043, %v2235
        %2237 = vmatprep.mubr.bf16.mxu0 %v1149
        %2238 = vmatmul.mubr.bf16.gmra.mxu0 %v1148
        %v2239 = vpop.f32.mrf.mxu0
        %v2240 = vadd.f32 %v2047, %v2239
        %v2241 = vpop.f32.mrf.mxu0
        %v2242 = vadd.f32 %v2049, %v2241
        %v2243 = vpop.f32.mrf.mxu0
        %v2244 = vadd.f32 %v2051, %v2243
        %v2245 = vpop.f32.mrf.mxu0
        %v2246 = vadd.f32 %v2053, %v2245
        %2247 = vmatprep.mubr.bf16.mxu0 %v1153
        %2248 = vmatmul.mubr.bf16.gmra.mxu0 %v1152
        %v2249 = vpop.f32.mrf.mxu0
        %v2250 = vadd.f32 %v2057, %v2249
        %v2251 = vpop.f32.mrf.mxu0
        %v2252 = vadd.f32 %v2059, %v2251
        %v2253 = vpop.f32.mrf.mxu0
        %v2254 = vadd.f32 %v2061, %v2253
        %v2255 = vpop.f32.mrf.mxu0
        %v2256 = vadd.f32 %v2063, %v2255
        %2257 = vmatprep.mubr.bf16.mxu0 %v1157
        %2258 = vmatmul.mubr.bf16.gmra.mxu0 %v1156
        %v2259 = vpop.f32.mrf.mxu0
        %v2260 = vadd.f32 %v2067, %v2259
        %v2261 = vpop.f32.mrf.mxu0
        %v2262 = vadd.f32 %v2069, %v2261
        %v2263 = vpop.f32.mrf.mxu0
        %v2264 = vadd.f32 %v2071, %v2263
        %v2265 = vpop.f32.mrf.mxu0
        %v2266 = vadd.f32 %v2073, %v2265
        %2267 = vmatprep.mubr.bf16.mxu0 %v1161
        %2268 = vmatmul.mubr.bf16.gmra.mxu0 %v1160
        %v2269 = vpop.f32.mrf.mxu0
        %v2270 = vadd.f32 %v2077, %v2269
        %v2271 = vpop.f32.mrf.mxu0
        %v2272 = vadd.f32 %v2079, %v2271
        %v2273 = vpop.f32.mrf.mxu0
        %v2274 = vadd.f32 %v2081, %v2273
        %v2275 = vpop.f32.mrf.mxu0
        %v2276 = vadd.f32 %v2083, %v2275
        %2277 = vmatprep.mubr.bf16.mxu0 %v1165
        %2278 = vmatmul.mubr.bf16.gmra.mxu0 %v1164
        %v2279 = vpop.f32.mrf.mxu0
        %v2280 = vadd.f32 %v2087, %v2279
        %v2281 = vpop.f32.mrf.mxu0
        %v2282 = vadd.f32 %v2089, %v2281
        %v2283 = vpop.f32.mrf.mxu0
        %v2284 = vadd.f32 %v2091, %v2283
        %v2285 = vpop.f32.mrf.mxu0
        %v2286 = vadd.f32 %v2093, %v2285
        %2287 = vmatprep.mubr.bf16.mxu0 %v1169
        %2288 = vmatmul.mubr.bf16.gmra.mxu0 %v1168
        %v2289 = vpop.f32.mrf.mxu0
        %v2290 = vadd.f32 %v2097, %v2289
        %v2291 = vpop.f32.mrf.mxu0
        %v2292 = vadd.f32 %v2099, %v2291
        %v2293 = vpop.f32.mrf.mxu0
        %v2294 = vadd.f32 %v2101, %v2293
        %v2295 = vpop.f32.mrf.mxu0
        %v2296 = vadd.f32 %v2103, %v2295
        %2297 = vmatprep.mubr.bf16.mxu0 %v1173
        %2298 = vmatmul.mubr.bf16.gmra.mxu0 %v1172
        %v2299 = vpop.f32.mrf.mxu0
        %v2300 = vadd.f32 %v2107, %v2299
        %v2301 = vpop.f32.mrf.mxu0
        %v2302 = vadd.f32 %v2109, %v2301
        %v2303 = vpop.f32.mrf.mxu0
        %v2304 = vadd.f32 %v2111, %v2303
        %v2305 = vpop.f32.mrf.mxu0
        %v2306 = vadd.f32 %v2113, %v2305
        %2307 = vmatprep.mubr.bf16.mxu0 %v1177
        %2308 = vmatmul.mubr.bf16.gmra.mxu0 %v1176
        %v2309 = vpop.f32.mrf.mxu0
        %v2310 = vadd.f32 %v2117, %v2309
        %v2311 = vpop.f32.mrf.mxu0
        %v2312 = vadd.f32 %v2119, %v2311
        %v2313 = vpop.f32.mrf.mxu0
        %v2314 = vadd.f32 %v2121, %v2313
        %v2315 = vpop.f32.mrf.mxu0
        %v2316 = vadd.f32 %v2123, %v2315
        %2317 = vmatprep.mubr.bf16.mxu0 %v1181
        %2318 = vmatmul.mubr.bf16.gmra.mxu0 %v1180
        %v2319 = vpop.f32.mrf.mxu0
        %v2320 = vadd.f32 %v2127, %v2319
        %v2321 = vpop.f32.mrf.mxu0
        %v2322 = vadd.f32 %v2129, %v2321
        %v2323 = vpop.f32.mrf.mxu0
        %v2324 = vadd.f32 %v2131, %v2323
        %v2325 = vpop.f32.mrf.mxu0
        %v2326 = vadd.f32 %v2133, %v2325
        %2327 = vmatprep.mubr.bf16.mxu0 %v1185
        %2328 = vmatmul.mubr.bf16.gmra.mxu0 %v1184
        %v2329 = vpop.f32.mrf.mxu0
        %v2330 = vadd.f32 %v2137, %v2329
        %v2331 = vpop.f32.mrf.mxu0
        %v2332 = vadd.f32 %v2139, %v2331
        %v2333 = vpop.f32.mrf.mxu0
        %v2334 = vadd.f32 %v2141, %v2333
        %v2335 = vpop.f32.mrf.mxu0
        %v2336 = vadd.f32 %v2143, %v2335
        %2337 = vmatprep.mubr.bf16.mxu0 %v1189
        %2338 = vmatmul.mubr.bf16.gmra.mxu0 %v1188
        %v2339 = vpop.f32.mrf.mxu0
        %v2340 = vadd.f32 %v2147, %v2339
        %v2341 = vpop.f32.mrf.mxu0
        %v2342 = vadd.f32 %v2149, %v2341
        %v2343 = vpop.f32.mrf.mxu0
        %v2344 = vadd.f32 %v2151, %v2343
        %v2345 = vpop.f32.mrf.mxu0
        %v2346 = vadd.f32 %v2153, %v2345
        %2347 = vmatprep.mubr.bf16.mxu0 %v1193
        %2348 = vmatmul.mubr.bf16.gmra.mxu0 %v1192
        %v2349 = vpop.f32.mrf.mxu0
        %v2350 = vadd.f32 %v2157, %v2349
        %v2351 = vpop.f32.mrf.mxu0
        %v2352 = vadd.f32 %v2159, %v2351
        %v2353 = vpop.f32.mrf.mxu0
        %v2354 = vadd.f32 %v2161, %v2353
        %v2355 = vpop.f32.mrf.mxu0
        %v2356 = vadd.f32 %v2163, %v2355
        %2357 = vmatprep.mubr.bf16.mxu0 %v1197
        %2358 = vmatmul.mubr.bf16.gmra.mxu0 %v1196
        %v2359 = vpop.f32.mrf.mxu0
        %v2360 = vadd.f32 %v2167, %v2359
        %v2361 = vpop.f32.mrf.mxu0
        %v2362 = vadd.f32 %v2169, %v2361
        %v2363 = vpop.f32.mrf.mxu0
        %v2364 = vadd.f32 %v2171, %v2363
        %v2365 = vpop.f32.mrf.mxu0
        %v2366 = vadd.f32 %v2173, %v2365
        %2367 = vmatprep.mubr.bf16.mxu0 %v1201
        %2368 = vmatmul.mubr.bf16.gmra.mxu0 %v1200
        %v2369 = vpop.f32.mrf.mxu0
        %v2370 = vadd.f32 %v2177, %v2369
        %v2371 = vpop.f32.mrf.mxu0
        %v2372 = vadd.f32 %v2179, %v2371
        %v2373 = vpop.f32.mrf.mxu0
        %v2374 = vadd.f32 %v2181, %v2373
        %v2375 = vpop.f32.mrf.mxu0
        %v2376 = vadd.f32 %v2183, %v2375
        %2377 = vdwg.mxu0
        %2378 = vmatprep.subr.bf16.mxu0 %v1767
        %2379 = vmatpush1.bf16.msra.mxu0 %v1766
        %2380 = vmatprep.subr.bf16.mxu0 %v1763
        %2381 = vmatpush1.bf16.msra.mxu0 %v1762
        %2382 = vmatprep.subr.bf16.mxu0 %v1759
        %2383 = vmatpush1.bf16.msra.mxu0 %v1758
        %2384 = vmatprep.subr.bf16.mxu0 %v1755
        %2385 = vmatpush1.bf16.msra.mxu0 %v1754
        %2386 = vmatprep.subr.bf16.mxu0 %v1751
        %2387 = vmatpush1.bf16.msra.mxu0 %v1750
        %2388 = vmatprep.subr.bf16.mxu0 %v1747
        %2389 = vmatpush1.bf16.msra.mxu0 %v1746
        %2390 = vmatprep.subr.bf16.mxu0 %v1743
        %2391 = vmatpush1.bf16.msra.mxu0 %v1742
        %2392 = vmatprep.subr.bf16.mxu0 %v1739
        %2393 = vmatpush1.bf16.msra.mxu0 %v1738
        %2394 = vmatprep.subr.bf16.mxu0 %v1799
        %2395 = vmatpush2.bf16.msra.mxu0 %v1798
        %2396 = vmatprep.subr.bf16.mxu0 %v1795
        %2397 = vmatpush2.bf16.msra.mxu0 %v1794
        %2398 = vmatprep.subr.bf16.mxu0 %v1791
        %2399 = vmatpush2.bf16.msra.mxu0 %v1790
        %2400 = vmatprep.subr.bf16.mxu0 %v1787
        %2401 = vmatpush2.bf16.msra.mxu0 %v1786
        %2402 = vmatprep.subr.bf16.mxu0 %v1783
        %2403 = vmatpush2.bf16.msra.mxu0 %v1782
        %2404 = vmatprep.subr.bf16.mxu0 %v1779
        %2405 = vmatpush2.bf16.msra.mxu0 %v1778
        %2406 = vmatprep.subr.bf16.mxu0 %v1775
        %2407 = vmatpush2.bf16.msra.mxu0 %v1774
        %2408 = vmatprep.subr.bf16.mxu0 %v1771
        %2409 = vmatpush2.bf16.msra.mxu0 %v1770
        %2410 = vmatprep.mubr.bf16.mxu0 %v1139
        %2411 = vmatmul.mubr.bf16.gmra.mxu0 %v1138
        %v2412 = vpop.f32.mrf.mxu0
        %v2413 = vadd.f32 %v1343, %v2412
        %v2414 = vpop.f32.mrf.mxu0
        %v2415 = vadd.f32 %v1347, %v2414
        %v2416 = vpop.f32.mrf.mxu0
        %v2417 = vadd.f32 %v1343, %v2416
        %v2418 = vpop.f32.mrf.mxu0
        %v2419 = vadd.f32 %v1347, %v2418
        %2420 = vmatprep.mubr.bf16.mxu0 %v1143
        %2421 = vmatmul.mubr.bf16.gmra.mxu0 %v1142
        %v2422 = vpop.f32.mrf.mxu0
        %v2423 = vadd.f32 %v1343, %v2422
        %v2424 = vpop.f32.mrf.mxu0
        %v2425 = vadd.f32 %v1347, %v2424
        %v2426 = vpop.f32.mrf.mxu0
        %v2427 = vadd.f32 %v1343, %v2426
        %v2428 = vpop.f32.mrf.mxu0
        %v2429 = vadd.f32 %v1347, %v2428
        %2430 = vmatprep.mubr.bf16.mxu0 %v1147
        %2431 = vmatmul.mubr.bf16.gmra.mxu0 %v1146
        %v2432 = vpop.f32.mrf.mxu0
        %v2433 = vadd.f32 %v1343, %v2432
        %v2434 = vpop.f32.mrf.mxu0
        %v2435 = vadd.f32 %v1347, %v2434
        %v2436 = vpop.f32.mrf.mxu0
        %v2437 = vadd.f32 %v1343, %v2436
        %v2438 = vpop.f32.mrf.mxu0
        %v2439 = vadd.f32 %v1347, %v2438
        %2440 = vmatprep.mubr.bf16.mxu0 %v1151
        %2441 = vmatmul.mubr.bf16.gmra.mxu0 %v1150
        %v2442 = vpop.f32.mrf.mxu0
        %v2443 = vadd.f32 %v1343, %v2442
        %v2444 = vpop.f32.mrf.mxu0
        %v2445 = vadd.f32 %v1347, %v2444
        %v2446 = vpop.f32.mrf.mxu0
        %v2447 = vadd.f32 %v1343, %v2446
        %v2448 = vpop.f32.mrf.mxu0
        %v2449 = vadd.f32 %v1347, %v2448
        %2450 = vmatprep.mubr.bf16.mxu0 %v1155
        %2451 = vmatmul.mubr.bf16.gmra.mxu0 %v1154
        %v2452 = vpop.f32.mrf.mxu0
        %v2453 = vadd.f32 %v1343, %v2452
        %v2454 = vpop.f32.mrf.mxu0
        %v2455 = vadd.f32 %v1347, %v2454
        %v2456 = vpop.f32.mrf.mxu0
        %v2457 = vadd.f32 %v1343, %v2456
        %v2458 = vpop.f32.mrf.mxu0
        %v2459 = vadd.f32 %v1347, %v2458
        %2460 = vmatprep.mubr.bf16.mxu0 %v1159
        %2461 = vmatmul.mubr.bf16.gmra.mxu0 %v1158
        %v2462 = vpop.f32.mrf.mxu0
        %v2463 = vadd.f32 %v1343, %v2462
        %v2464 = vpop.f32.mrf.mxu0
        %v2465 = vadd.f32 %v1347, %v2464
        %v2466 = vpop.f32.mrf.mxu0
        %v2467 = vadd.f32 %v1343, %v2466
        %v2468 = vpop.f32.mrf.mxu0
        %v2469 = vadd.f32 %v1347, %v2468
        %2470 = vmatprep.mubr.bf16.mxu0 %v1163
        %2471 = vmatmul.mubr.bf16.gmra.mxu0 %v1162
        %v2472 = vpop.f32.mrf.mxu0
        %v2473 = vadd.f32 %v1343, %v2472
        %v2474 = vpop.f32.mrf.mxu0
        %v2475 = vadd.f32 %v1347, %v2474
        %v2476 = vpop.f32.mrf.mxu0
        %v2477 = vadd.f32 %v1343, %v2476
        %v2478 = vpop.f32.mrf.mxu0
        %v2479 = vadd.f32 %v1347, %v2478
        %2480 = vmatprep.mubr.bf16.mxu0 %v1167
        %2481 = vmatmul.mubr.bf16.gmra.mxu0 %v1166
        %v2482 = vpop.f32.mrf.mxu0
        %v2483 = vadd.f32 %v1343, %v2482
        %v2484 = vpop.f32.mrf.mxu0
        %v2485 = vadd.f32 %v1347, %v2484
        %v2486 = vpop.f32.mrf.mxu0
        %v2487 = vadd.f32 %v1343, %v2486
        %v2488 = vpop.f32.mrf.mxu0
        %v2489 = vadd.f32 %v1347, %v2488
        %2490 = vmatprep.mubr.bf16.mxu0 %v1171
        %2491 = vmatmul.mubr.bf16.gmra.mxu0 %v1170
        %v2492 = vpop.f32.mrf.mxu0
        %v2493 = vadd.f32 %v1343, %v2492
        %v2494 = vpop.f32.mrf.mxu0
        %v2495 = vadd.f32 %v1347, %v2494
        %v2496 = vpop.f32.mrf.mxu0
        %v2497 = vadd.f32 %v1343, %v2496
        %v2498 = vpop.f32.mrf.mxu0
        %v2499 = vadd.f32 %v1347, %v2498
        %2500 = vmatprep.mubr.bf16.mxu0 %v1175
        %2501 = vmatmul.mubr.bf16.gmra.mxu0 %v1174
        %v2502 = vpop.f32.mrf.mxu0
        %v2503 = vadd.f32 %v1343, %v2502
        %v2504 = vpop.f32.mrf.mxu0
        %v2505 = vadd.f32 %v1347, %v2504
        %v2506 = vpop.f32.mrf.mxu0
        %v2507 = vadd.f32 %v1343, %v2506
        %v2508 = vpop.f32.mrf.mxu0
        %v2509 = vadd.f32 %v1347, %v2508
        %2510 = vmatprep.mubr.bf16.mxu0 %v1179
        %2511 = vmatmul.mubr.bf16.gmra.mxu0 %v1178
        %v2512 = vpop.f32.mrf.mxu0
        %v2513 = vadd.f32 %v1343, %v2512
        %v2514 = vpop.f32.mrf.mxu0
        %v2515 = vadd.f32 %v1347, %v2514
        %v2516 = vpop.f32.mrf.mxu0
        %v2517 = vadd.f32 %v1343, %v2516
        %v2518 = vpop.f32.mrf.mxu0
        %v2519 = vadd.f32 %v1347, %v2518
        %2520 = vmatprep.mubr.bf16.mxu0 %v1183
        %2521 = vmatmul.mubr.bf16.gmra.mxu0 %v1182
        %v2522 = vpop.f32.mrf.mxu0
        %v2523 = vadd.f32 %v1343, %v2522
        %v2524 = vpop.f32.mrf.mxu0
        %v2525 = vadd.f32 %v1347, %v2524
        %v2526 = vpop.f32.mrf.mxu0
        %v2527 = vadd.f32 %v1343, %v2526
        %v2528 = vpop.f32.mrf.mxu0
        %v2529 = vadd.f32 %v1347, %v2528
        %2530 = vmatprep.mubr.bf16.mxu0 %v1187
        %2531 = vmatmul.mubr.bf16.gmra.mxu0 %v1186
        %v2532 = vpop.f32.mrf.mxu0
        %v2533 = vadd.f32 %v1343, %v2532
        %v2534 = vpop.f32.mrf.mxu0
        %v2535 = vadd.f32 %v1347, %v2534
        %v2536 = vpop.f32.mrf.mxu0
        %v2537 = vadd.f32 %v1343, %v2536
        %v2538 = vpop.f32.mrf.mxu0
        %v2539 = vadd.f32 %v1347, %v2538
        %2540 = vmatprep.mubr.bf16.mxu0 %v1191
        %2541 = vmatmul.mubr.bf16.gmra.mxu0 %v1190
        %v2542 = vpop.f32.mrf.mxu0
        %v2543 = vadd.f32 %v1343, %v2542
        %v2544 = vpop.f32.mrf.mxu0
        %v2545 = vadd.f32 %v1347, %v2544
        %v2546 = vpop.f32.mrf.mxu0
        %v2547 = vadd.f32 %v1343, %v2546
        %v2548 = vpop.f32.mrf.mxu0
        %v2549 = vadd.f32 %v1347, %v2548
        %2550 = vmatprep.mubr.bf16.mxu0 %v1195
        %2551 = vmatmul.mubr.bf16.gmra.mxu0 %v1194
        %v2552 = vpop.f32.mrf.mxu0
        %v2553 = vadd.f32 %v1343, %v2552
        %v2554 = vpop.f32.mrf.mxu0
        %v2555 = vadd.f32 %v1347, %v2554
        %v2556 = vpop.f32.mrf.mxu0
        %v2557 = vadd.f32 %v1343, %v2556
        %v2558 = vpop.f32.mrf.mxu0
        %v2559 = vadd.f32 %v1347, %v2558
        %2560 = vmatprep.mubr.bf16.mxu0 %v1199
        %2561 = vmatmul.mubr.bf16.gmra.mxu0 %v1198
        %v2562 = vpop.f32.mrf.mxu0
        %v2563 = vadd.f32 %v1343, %v2562
        %v2564 = vpop.f32.mrf.mxu0
        %v2565 = vadd.f32 %v1347, %v2564
        %v2566 = vpop.f32.mrf.mxu0
        %v2567 = vadd.f32 %v1343, %v2566
        %v2568 = vpop.f32.mrf.mxu0
        %v2569 = vadd.f32 %v1347, %v2568
        %2570 = vdwg.mxu0
        %2571 = vmatprep.subr.bf16.mxu0 %v1831
        %2572 = vmatpush1.bf16.msra.mxu0 %v1830
        %2573 = vmatprep.subr.bf16.mxu0 %v1827
        %2574 = vmatpush1.bf16.msra.mxu0 %v1826
        %2575 = vmatprep.subr.bf16.mxu0 %v1823
        %2576 = vmatpush1.bf16.msra.mxu0 %v1822
        %2577 = vmatprep.subr.bf16.mxu0 %v1819
        %2578 = vmatpush1.bf16.msra.mxu0 %v1818
        %2579 = vmatprep.subr.bf16.mxu0 %v1815
        %2580 = vmatpush1.bf16.msra.mxu0 %v1814
        %2581 = vmatprep.subr.bf16.mxu0 %v1811
        %2582 = vmatpush1.bf16.msra.mxu0 %v1810
        %2583 = vmatprep.subr.bf16.mxu0 %v1807
        %2584 = vmatpush1.bf16.msra.mxu0 %v1806
        %2585 = vmatprep.subr.bf16.mxu0 %v1803
        %2586 = vmatpush1.bf16.msra.mxu0 %v1802
        %2587 = vmatprep.subr.bf16.mxu0 %v1863
        %2588 = vmatpush2.bf16.msra.mxu0 %v1862
        %2589 = vmatprep.subr.bf16.mxu0 %v1859
        %2590 = vmatpush2.bf16.msra.mxu0 %v1858
        %2591 = vmatprep.subr.bf16.mxu0 %v1855
        %2592 = vmatpush2.bf16.msra.mxu0 %v1854
        %2593 = vmatprep.subr.bf16.mxu0 %v1851
        %2594 = vmatpush2.bf16.msra.mxu0 %v1850
        %2595 = vmatprep.subr.bf16.mxu0 %v1847
        %2596 = vmatpush2.bf16.msra.mxu0 %v1846
        %2597 = vmatprep.subr.bf16.mxu0 %v1843
        %2598 = vmatpush2.bf16.msra.mxu0 %v1842
        %2599 = vmatprep.subr.bf16.mxu0 %v1839
        %2600 = vmatpush2.bf16.msra.mxu0 %v1838
        %2601 = vmatprep.subr.bf16.mxu0 %v1835
        %2602 = vmatpush2.bf16.msra.mxu0 %v1834
        %2603 = vmatprep.mubr.bf16.mxu0 %v1141
        %2604 = vmatmul.mubr.bf16.gmra.mxu0 %v1140
        %v2605 = vpop.f32.mrf.mxu0
        %v2606 = vadd.f32 %v2413, %v2605
        %v2607 = vpop.f32.mrf.mxu0
        %v2608 = vadd.f32 %v2415, %v2607
        %v2609 = vpop.f32.mrf.mxu0
        %v2610 = vadd.f32 %v2417, %v2609
        %v2611 = vpop.f32.mrf.mxu0
        %v2612 = vadd.f32 %v2419, %v2611
        %2613 = vmatprep.mubr.bf16.mxu0 %v1145
        %2614 = vmatmul.mubr.bf16.gmra.mxu0 %v1144
        %v2615 = vpop.f32.mrf.mxu0
        %v2616 = vadd.f32 %v2423, %v2615
        %v2617 = vpop.f32.mrf.mxu0
        %v2618 = vadd.f32 %v2425, %v2617
        %v2619 = vpop.f32.mrf.mxu0
        %v2620 = vadd.f32 %v2427, %v2619
        %v2621 = vpop.f32.mrf.mxu0
        %v2622 = vadd.f32 %v2429, %v2621
        %2623 = vmatprep.mubr.bf16.mxu0 %v1149
        %2624 = vmatmul.mubr.bf16.gmra.mxu0 %v1148
        %v2625 = vpop.f32.mrf.mxu0
        %v2626 = vadd.f32 %v2433, %v2625
        %v2627 = vpop.f32.mrf.mxu0
        %v2628 = vadd.f32 %v2435, %v2627
        %v2629 = vpop.f32.mrf.mxu0
        %v2630 = vadd.f32 %v2437, %v2629
        %v2631 = vpop.f32.mrf.mxu0
        %v2632 = vadd.f32 %v2439, %v2631
        %2633 = vmatprep.mubr.bf16.mxu0 %v1153
        %2634 = vmatmul.mubr.bf16.gmra.mxu0 %v1152
        %v2635 = vpop.f32.mrf.mxu0
        %v2636 = vadd.f32 %v2443, %v2635
        %v2637 = vpop.f32.mrf.mxu0
        %v2638 = vadd.f32 %v2445, %v2637
        %v2639 = vpop.f32.mrf.mxu0
        %v2640 = vadd.f32 %v2447, %v2639
        %v2641 = vpop.f32.mrf.mxu0
        %v2642 = vadd.f32 %v2449, %v2641
        %2643 = vmatprep.mubr.bf16.mxu0 %v1157
        %2644 = vmatmul.mubr.bf16.gmra.mxu0 %v1156
        %v2645 = vpop.f32.mrf.mxu0
        %v2646 = vadd.f32 %v2453, %v2645
        %v2647 = vpop.f32.mrf.mxu0
        %v2648 = vadd.f32 %v2455, %v2647
        %v2649 = vpop.f32.mrf.mxu0
        %v2650 = vadd.f32 %v2457, %v2649
        %v2651 = vpop.f32.mrf.mxu0
        %v2652 = vadd.f32 %v2459, %v2651
        %2653 = vmatprep.mubr.bf16.mxu0 %v1161
        %2654 = vmatmul.mubr.bf16.gmra.mxu0 %v1160
        %v2655 = vpop.f32.mrf.mxu0
        %v2656 = vadd.f32 %v2463, %v2655
        %v2657 = vpop.f32.mrf.mxu0
        %v2658 = vadd.f32 %v2465, %v2657
        %v2659 = vpop.f32.mrf.mxu0
        %v2660 = vadd.f32 %v2467, %v2659
        %v2661 = vpop.f32.mrf.mxu0
        %v2662 = vadd.f32 %v2469, %v2661
        %2663 = vmatprep.mubr.bf16.mxu0 %v1165
        %2664 = vmatmul.mubr.bf16.gmra.mxu0 %v1164
        %v2665 = vpop.f32.mrf.mxu0
        %v2666 = vadd.f32 %v2473, %v2665
        %v2667 = vpop.f32.mrf.mxu0
        %v2668 = vadd.f32 %v2475, %v2667
        %v2669 = vpop.f32.mrf.mxu0
        %v2670 = vadd.f32 %v2477, %v2669
        %v2671 = vpop.f32.mrf.mxu0
        %v2672 = vadd.f32 %v2479, %v2671
        %2673 = vmatprep.mubr.bf16.mxu0 %v1169
        %2674 = vmatmul.mubr.bf16.gmra.mxu0 %v1168
        %v2675 = vpop.f32.mrf.mxu0
        %v2676 = vadd.f32 %v2483, %v2675
        %v2677 = vpop.f32.mrf.mxu0
        %v2678 = vadd.f32 %v2485, %v2677
        %v2679 = vpop.f32.mrf.mxu0
        %v2680 = vadd.f32 %v2487, %v2679
        %v2681 = vpop.f32.mrf.mxu0
        %v2682 = vadd.f32 %v2489, %v2681
        %2683 = vmatprep.mubr.bf16.mxu0 %v1173
        %2684 = vmatmul.mubr.bf16.gmra.mxu0 %v1172
        %v2685 = vpop.f32.mrf.mxu0
        %v2686 = vadd.f32 %v2493, %v2685
        %v2687 = vpop.f32.mrf.mxu0
        %v2688 = vadd.f32 %v2495, %v2687
        %v2689 = vpop.f32.mrf.mxu0
        %v2690 = vadd.f32 %v2497, %v2689
        %v2691 = vpop.f32.mrf.mxu0
        %v2692 = vadd.f32 %v2499, %v2691
        %2693 = vmatprep.mubr.bf16.mxu0 %v1177
        %2694 = vmatmul.mubr.bf16.gmra.mxu0 %v1176
        %v2695 = vpop.f32.mrf.mxu0
        %v2696 = vadd.f32 %v2503, %v2695
        %v2697 = vpop.f32.mrf.mxu0
        %v2698 = vadd.f32 %v2505, %v2697
        %v2699 = vpop.f32.mrf.mxu0
        %v2700 = vadd.f32 %v2507, %v2699
        %v2701 = vpop.f32.mrf.mxu0
        %v2702 = vadd.f32 %v2509, %v2701
        %2703 = vmatprep.mubr.bf16.mxu0 %v1181
        %2704 = vmatmul.mubr.bf16.gmra.mxu0 %v1180
        %v2705 = vpop.f32.mrf.mxu0
        %v2706 = vadd.f32 %v2513, %v2705
        %v2707 = vpop.f32.mrf.mxu0
        %v2708 = vadd.f32 %v2515, %v2707
        %v2709 = vpop.f32.mrf.mxu0
        %v2710 = vadd.f32 %v2517, %v2709
        %v2711 = vpop.f32.mrf.mxu0
        %v2712 = vadd.f32 %v2519, %v2711
        %2713 = vmatprep.mubr.bf16.mxu0 %v1185
        %2714 = vmatmul.mubr.bf16.gmra.mxu0 %v1184
        %v2715 = vpop.f32.mrf.mxu0
        %v2716 = vadd.f32 %v2523, %v2715
        %v2717 = vpop.f32.mrf.mxu0
        %v2718 = vadd.f32 %v2525, %v2717
        %v2719 = vpop.f32.mrf.mxu0
        %v2720 = vadd.f32 %v2527, %v2719
        %v2721 = vpop.f32.mrf.mxu0
        %v2722 = vadd.f32 %v2529, %v2721
        %2723 = vmatprep.mubr.bf16.mxu0 %v1189
        %2724 = vmatmul.mubr.bf16.gmra.mxu0 %v1188
        %v2725 = vpop.f32.mrf.mxu0
        %v2726 = vadd.f32 %v2533, %v2725
        %v2727 = vpop.f32.mrf.mxu0
        %v2728 = vadd.f32 %v2535, %v2727
        %v2729 = vpop.f32.mrf.mxu0
        %v2730 = vadd.f32 %v2537, %v2729
        %v2731 = vpop.f32.mrf.mxu0
        %v2732 = vadd.f32 %v2539, %v2731
        %2733 = vmatprep.mubr.bf16.mxu0 %v1193
        %2734 = vmatmul.mubr.bf16.gmra.mxu0 %v1192
        %v2735 = vpop.f32.mrf.mxu0
        %v2736 = vadd.f32 %v2543, %v2735
        %v2737 = vpop.f32.mrf.mxu0
        %v2738 = vadd.f32 %v2545, %v2737
        %v2739 = vpop.f32.mrf.mxu0
        %v2740 = vadd.f32 %v2547, %v2739
        %v2741 = vpop.f32.mrf.mxu0
        %v2742 = vadd.f32 %v2549, %v2741
        %2743 = vmatprep.mubr.bf16.mxu0 %v1197
        %2744 = vmatmul.mubr.bf16.gmra.mxu0 %v1196
        %v2745 = vpop.f32.mrf.mxu0
        %v2746 = vadd.f32 %v2553, %v2745
        %v2747 = vpop.f32.mrf.mxu0
        %v2748 = vadd.f32 %v2555, %v2747
        %v2749 = vpop.f32.mrf.mxu0
        %v2750 = vadd.f32 %v2557, %v2749
        %v2751 = vpop.f32.mrf.mxu0
        %v2752 = vadd.f32 %v2559, %v2751
        %2753 = vmatprep.mubr.bf16.mxu0 %v1201
        %2754 = vmatmul.mubr.bf16.gmra.mxu0 %v1200
        %v2755 = vpop.f32.mrf.mxu0
        %v2756 = vadd.f32 %v2563, %v2755
        %v2757 = vpop.f32.mrf.mxu0
        %v2758 = vadd.f32 %v2565, %v2757
        %v2759 = vpop.f32.mrf.mxu0
        %v2760 = vadd.f32 %v2567, %v2759
        %v2761 = vpop.f32.mrf.mxu0
        %v2762 = vadd.f32 %v2569, %v2761
        %2763 = vdwg.mxu0
        %v2764 = vmax.f32 %v2220, %v2222
        %v2765 = vmax.f32 %v2764, %v2606
        %v2766 = vmax.f32 %v2765, %v2608
        %2767 = vmax.xlane.f32.xlu0 %v2766
        %v2768 = vpop.xlane.xlu0 %2767
        %v2769 = vmax.f32 %v2224, %v2226
        %v2770 = vmax.f32 %v2769, %v2610
        %v2771 = vmax.f32 %v2770, %v2612
        %2772 = vmax.xlane.f32.xlu0 %v2771
        %v2773 = vpop.xlane.xlu0 %2772
        %v2774 = vmax.f32 %v2230, %v2232
        %v2775 = vmax.f32 %v2774, %v2616
        %v2776 = vmax.f32 %v2775, %v2618
        %2777 = vmax.xlane.f32.xlu0 %v2776
        %v2778 = vpop.xlane.xlu0 %2777
        %v2779 = vmax.f32 %v2234, %v2236
        %v2780 = vmax.f32 %v2779, %v2620
        %v2781 = vmax.f32 %v2780, %v2622
        %2782 = vmax.xlane.f32.xlu0 %v2781
        %v2783 = vpop.xlane.xlu0 %2782
        %v2784 = vmax.f32 %v2240, %v2242
        %v2785 = vmax.f32 %v2784, %v2626
        %v2786 = vmax.f32 %v2785, %v2628
        %2787 = vmax.xlane.f32.xlu0 %v2786
        %v2788 = vpop.xlane.xlu0 %2787
        %v2789 = vmax.f32 %v2244, %v2246
        %v2790 = vmax.f32 %v2789, %v2630
        %v2791 = vmax.f32 %v2790, %v2632
        %2792 = vmax.xlane.f32.xlu0 %v2791
        %v2793 = vpop.xlane.xlu0 %2792
        %v2794 = vmax.f32 %v2250, %v2252
        %v2795 = vmax.f32 %v2794, %v2636
        %v2796 = vmax.f32 %v2795, %v2638
        %2797 = vmax.xlane.f32.xlu0 %v2796
        %v2798 = vpop.xlane.xlu0 %2797
        %v2799 = vmax.f32 %v2254, %v2256
        %v2800 = vmax.f32 %v2799, %v2640
        %v2801 = vmax.f32 %v2800, %v2642
        %2802 = vmax.xlane.f32.xlu0 %v2801
        %v2803 = vpop.xlane.xlu0 %2802
        %v2804 = vmax.f32 %v2260, %v2262
        %v2805 = vmax.f32 %v2804, %v2646
        %v2806 = vmax.f32 %v2805, %v2648
        %2807 = vmax.xlane.f32.xlu0 %v2806
        %v2808 = vpop.xlane.xlu0 %2807
        %v2809 = vmax.f32 %v2264, %v2266
        %v2810 = vmax.f32 %v2809, %v2650
        %v2811 = vmax.f32 %v2810, %v2652
        %2812 = vmax.xlane.f32.xlu0 %v2811
        %v2813 = vpop.xlane.xlu0 %2812
        %v2814 = vmax.f32 %v2270, %v2272
        %v2815 = vmax.f32 %v2814, %v2656
        %v2816 = vmax.f32 %v2815, %v2658
        %2817 = vmax.xlane.f32.xlu0 %v2816
        %v2818 = vpop.xlane.xlu0 %2817
        %v2819 = vmax.f32 %v2274, %v2276
        %v2820 = vmax.f32 %v2819, %v2660
        %v2821 = vmax.f32 %v2820, %v2662
        %2822 = vmax.xlane.f32.xlu0 %v2821
        %v2823 = vpop.xlane.xlu0 %2822
        %v2824 = vmax.f32 %v2280, %v2282
        %v2825 = vmax.f32 %v2824, %v2666
        %v2826 = vmax.f32 %v2825, %v2668
        %2827 = vmax.xlane.f32.xlu0 %v2826
        %v2828 = vpop.xlane.xlu0 %2827
        %v2829 = vmax.f32 %v2284, %v2286
        %v2830 = vmax.f32 %v2829, %v2670
        %v2831 = vmax.f32 %v2830, %v2672
        %2832 = vmax.xlane.f32.xlu0 %v2831
        %v2833 = vpop.xlane.xlu0 %2832
        %v2834 = vmax.f32 %v2290, %v2292
        %v2835 = vmax.f32 %v2834, %v2676
        %v2836 = vmax.f32 %v2835, %v2678
        %2837 = vmax.xlane.f32.xlu0 %v2836
        %v2838 = vpop.xlane.xlu0 %2837
        %v2839 = vmax.f32 %v2294, %v2296
        %v2840 = vmax.f32 %v2839, %v2680
        %v2841 = vmax.f32 %v2840, %v2682
        %2842 = vmax.xlane.f32.xlu0 %v2841
        %v2843 = vpop.xlane.xlu0 %2842
        %v2844 = vmax.f32 %v2300, %v2302
        %v2845 = vmax.f32 %v2844, %v2686
        %v2846 = vmax.f32 %v2845, %v2688
        %2847 = vmax.xlane.f32.xlu0 %v2846
        %v2848 = vpop.xlane.xlu0 %2847
        %v2849 = vmax.f32 %v2304, %v2306
        %v2850 = vmax.f32 %v2849, %v2690
        %v2851 = vmax.f32 %v2850, %v2692
        %2852 = vmax.xlane.f32.xlu0 %v2851
        %v2853 = vpop.xlane.xlu0 %2852
        %v2854 = vmax.f32 %v2310, %v2312
        %v2855 = vmax.f32 %v2854, %v2696
        %v2856 = vmax.f32 %v2855, %v2698
        %2857 = vmax.xlane.f32.xlu0 %v2856
        %v2858 = vpop.xlane.xlu0 %2857
        %v2859 = vmax.f32 %v2314, %v2316
        %v2860 = vmax.f32 %v2859, %v2700
        %v2861 = vmax.f32 %v2860, %v2702
        %2862 = vmax.xlane.f32.xlu0 %v2861
        %v2863 = vpop.xlane.xlu0 %2862
        %v2864 = vmax.f32 %v2320, %v2322
        %v2865 = vmax.f32 %v2864, %v2706
        %v2866 = vmax.f32 %v2865, %v2708
        %2867 = vmax.xlane.f32.xlu0 %v2866
        %v2868 = vpop.xlane.xlu0 %2867
        %v2869 = vmax.f32 %v2324, %v2326
        %v2870 = vmax.f32 %v2869, %v2710
        %v2871 = vmax.f32 %v2870, %v2712
        %2872 = vmax.xlane.f32.xlu0 %v2871
        %v2873 = vpop.xlane.xlu0 %2872
        %v2874 = vmax.f32 %v2330, %v2332
        %v2875 = vmax.f32 %v2874, %v2716
        %v2876 = vmax.f32 %v2875, %v2718
        %2877 = vmax.xlane.f32.xlu0 %v2876
        %v2878 = vpop.xlane.xlu0 %2877
        %v2879 = vmax.f32 %v2334, %v2336
        %v2880 = vmax.f32 %v2879, %v2720
        %v2881 = vmax.f32 %v2880, %v2722
        %2882 = vmax.xlane.f32.xlu0 %v2881
        %v2883 = vpop.xlane.xlu0 %2882
        %v2884 = vmax.f32 %v2340, %v2342
        %v2885 = vmax.f32 %v2884, %v2726
        %v2886 = vmax.f32 %v2885, %v2728
        %2887 = vmax.xlane.f32.xlu0 %v2886
        %v2888 = vpop.xlane.xlu0 %2887
        %v2889 = vmax.f32 %v2344, %v2346
        %v2890 = vmax.f32 %v2889, %v2730
        %v2891 = vmax.f32 %v2890, %v2732
        %2892 = vmax.xlane.f32.xlu0 %v2891
        %v2893 = vpop.xlane.xlu0 %2892
        %v2894 = vmax.f32 %v2350, %v2352
        %v2895 = vmax.f32 %v2894, %v2736
        %v2896 = vmax.f32 %v2895, %v2738
        %2897 = vmax.xlane.f32.xlu0 %v2896
        %v2898 = vpop.xlane.xlu0 %2897
        %v2899 = vmax.f32 %v2354, %v2356
        %v2900 = vmax.f32 %v2899, %v2740
        %v2901 = vmax.f32 %v2900, %v2742
        %2902 = vmax.xlane.f32.xlu0 %v2901
        %v2903 = vpop.xlane.xlu0 %2902
        %v2904 = vmax.f32 %v2360, %v2362
        %v2905 = vmax.f32 %v2904, %v2746
        %v2906 = vmax.f32 %v2905, %v2748
        %2907 = vmax.xlane.f32.xlu0 %v2906
        %v2908 = vpop.xlane.xlu0 %2907
        %v2909 = vmax.f32 %v2364, %v2366
        %v2910 = vmax.f32 %v2909, %v2750
        %v2911 = vmax.f32 %v2910, %v2752
        %2912 = vmax.xlane.f32.xlu0 %v2911
        %v2913 = vpop.xlane.xlu0 %2912
        %v2914 = vmax.f32 %v2370, %v2372
        %v2915 = vmax.f32 %v2914, %v2756
        %v2916 = vmax.f32 %v2915, %v2758
        %2917 = vmax.xlane.f32.xlu0 %v2916
        %v2918 = vpop.xlane.xlu0 %2917
        %v2919 = vmax.f32 %v2374, %v2376
        %v2920 = vmax.f32 %v2919, %v2760
        %v2921 = vmax.f32 %v2920, %v2762
        %2922 = vmax.xlane.f32.xlu0 %v2921
        %v2923 = vpop.xlane.xlu0 %2922
        %v2924 = vsub.f32 %v2220, %v2768
        %v2925 = vsub.f32 %v2222, %v2768
        %v2926 = vsub.f32 %v2606, %v2768
        %v2927 = vsub.f32 %v2608, %v2768
        %v2928 = vsub.f32 %v2224, %v2773
        %v2929 = vsub.f32 %v2226, %v2773
        %v2930 = vsub.f32 %v2610, %v2773
        %v2931 = vsub.f32 %v2612, %v2773
        %v2932 = vsub.f32 %v2230, %v2778
        %v2933 = vsub.f32 %v2232, %v2778
        %v2934 = vsub.f32 %v2616, %v2778
        %v2935 = vsub.f32 %v2618, %v2778
        %v2936 = vsub.f32 %v2234, %v2783
        %v2937 = vsub.f32 %v2236, %v2783
        %v2938 = vsub.f32 %v2620, %v2783
        %v2939 = vsub.f32 %v2622, %v2783
        %v2940 = vsub.f32 %v2240, %v2788
        %v2941 = vsub.f32 %v2242, %v2788
        %v2942 = vsub.f32 %v2626, %v2788
        %v2943 = vsub.f32 %v2628, %v2788
        %v2944 = vsub.f32 %v2244, %v2793
        %v2945 = vsub.f32 %v2246, %v2793
        %v2946 = vsub.f32 %v2630, %v2793
        %v2947 = vsub.f32 %v2632, %v2793
        %v2948 = vsub.f32 %v2250, %v2798
        %v2949 = vsub.f32 %v2252, %v2798
        %v2950 = vsub.f32 %v2636, %v2798
        %v2951 = vsub.f32 %v2638, %v2798
        %v2952 = vsub.f32 %v2254, %v2803
        %v2953 = vsub.f32 %v2256, %v2803
        %v2954 = vsub.f32 %v2640, %v2803
        %v2955 = vsub.f32 %v2642, %v2803
        %v2956 = vsub.f32 %v2260, %v2808
        %v2957 = vsub.f32 %v2262, %v2808
        %v2958 = vsub.f32 %v2646, %v2808
        %v2959 = vsub.f32 %v2648, %v2808
        %v2960 = vsub.f32 %v2264, %v2813
        %v2961 = vsub.f32 %v2266, %v2813
        %v2962 = vsub.f32 %v2650, %v2813
        %v2963 = vsub.f32 %v2652, %v2813
        %v2964 = vsub.f32 %v2270, %v2818
        %v2965 = vsub.f32 %v2272, %v2818
        %v2966 = vsub.f32 %v2656, %v2818
        %v2967 = vsub.f32 %v2658, %v2818
        %v2968 = vsub.f32 %v2274, %v2823
        %v2969 = vsub.f32 %v2276, %v2823
        %v2970 = vsub.f32 %v2660, %v2823
        %v2971 = vsub.f32 %v2662, %v2823
        %v2972 = vsub.f32 %v2280, %v2828
        %v2973 = vsub.f32 %v2282, %v2828
        %v2974 = vsub.f32 %v2666, %v2828
        %v2975 = vsub.f32 %v2668, %v2828
        %v2976 = vsub.f32 %v2284, %v2833
        %v2977 = vsub.f32 %v2286, %v2833
        %v2978 = vsub.f32 %v2670, %v2833
        %v2979 = vsub.f32 %v2672, %v2833
        %v2980 = vsub.f32 %v2290, %v2838
        %v2981 = vsub.f32 %v2292, %v2838
        %v2982 = vsub.f32 %v2676, %v2838
        %v2983 = vsub.f32 %v2678, %v2838
        %v2984 = vsub.f32 %v2294, %v2843
        %v2985 = vsub.f32 %v2296, %v2843
        %v2986 = vsub.f32 %v2680, %v2843
        %v2987 = vsub.f32 %v2682, %v2843
        %v2988 = vsub.f32 %v2300, %v2848
        %v2989 = vsub.f32 %v2302, %v2848
        %v2990 = vsub.f32 %v2686, %v2848
        %v2991 = vsub.f32 %v2688, %v2848
        %v2992 = vsub.f32 %v2304, %v2853
        %v2993 = vsub.f32 %v2306, %v2853
        %v2994 = vsub.f32 %v2690, %v2853
        %v2995 = vsub.f32 %v2692, %v2853
        %v2996 = vsub.f32 %v2310, %v2858
        %v2997 = vsub.f32 %v2312, %v2858
        %v2998 = vsub.f32 %v2696, %v2858
        %v2999 = vsub.f32 %v2698, %v2858
        %v3000 = vsub.f32 %v2314, %v2863
        %v3001 = vsub.f32 %v2316, %v2863
        %v3002 = vsub.f32 %v2700, %v2863
        %v3003 = vsub.f32 %v2702, %v2863
        %v3004 = vsub.f32 %v2320, %v2868
        %v3005 = vsub.f32 %v2322, %v2868
        %v3006 = vsub.f32 %v2706, %v2868
        %v3007 = vsub.f32 %v2708, %v2868
        %v3008 = vsub.f32 %v2324, %v2873
        %v3009 = vsub.f32 %v2326, %v2873
        %v3010 = vsub.f32 %v2710, %v2873
        %v3011 = vsub.f32 %v2712, %v2873
        %v3012 = vsub.f32 %v2330, %v2878
        %v3013 = vsub.f32 %v2332, %v2878
        %v3014 = vsub.f32 %v2716, %v2878
        %v3015 = vsub.f32 %v2718, %v2878
        %v3016 = vsub.f32 %v2334, %v2883
        %v3017 = vsub.f32 %v2336, %v2883
        %v3018 = vsub.f32 %v2720, %v2883
        %v3019 = vsub.f32 %v2722, %v2883
        %v3020 = vsub.f32 %v2340, %v2888
        %v3021 = vsub.f32 %v2342, %v2888
        %v3022 = vsub.f32 %v2726, %v2888
        %v3023 = vsub.f32 %v2728, %v2888
        %v3024 = vsub.f32 %v2344, %v2893
        %v3025 = vsub.f32 %v2346, %v2893
        %v3026 = vsub.f32 %v2730, %v2893
        %v3027 = vsub.f32 %v2732, %v2893
        %v3028 = vsub.f32 %v2350, %v2898
        %v3029 = vsub.f32 %v2352, %v2898
        %v3030 = vsub.f32 %v2736, %v2898
        %v3031 = vsub.f32 %v2738, %v2898
        %v3032 = vsub.f32 %v2354, %v2903
        %v3033 = vsub.f32 %v2356, %v2903
        %v3034 = vsub.f32 %v2740, %v2903
        %v3035 = vsub.f32 %v2742, %v2903
        %v3036 = vsub.f32 %v2360, %v2908
        %v3037 = vsub.f32 %v2362, %v2908
        %v3038 = vsub.f32 %v2746, %v2908
        %v3039 = vsub.f32 %v2748, %v2908
        %v3040 = vsub.f32 %v2364, %v2913
        %v3041 = vsub.f32 %v2366, %v2913
        %v3042 = vsub.f32 %v2750, %v2913
        %v3043 = vsub.f32 %v2752, %v2913
        %v3044 = vsub.f32 %v2370, %v2918
        %v3045 = vsub.f32 %v2372, %v2918
        %v3046 = vsub.f32 %v2756, %v2918
        %v3047 = vsub.f32 %v2758, %v2918
        %v3048 = vsub.f32 %v2374, %v2923
        %v3049 = vsub.f32 %v2376, %v2923
        %v3050 = vsub.f32 %v2760, %v2923
        %v3051 = vsub.f32 %v2762, %v2923
        %v3052 = vmul.f32 %v2924, 1.442695
        %v3053 = vpow.pop %v3052
        %v3054 = vmul.f32 %v2925, 1.442695
        %v3055 = vpow.pop %v3054
        %v3056 = vmul.f32 %v2926, 1.442695
        %v3057 = vpow.pop %v3056
        %v3058 = vmul.f32 %v2927, 1.442695
        %v3059 = vpow.pop %v3058
        %v3060 = vmul.f32 %v2928, 1.442695
        %v3061 = vpow.pop %v3060
        %v3062 = vmul.f32 %v2929, 1.442695
        %v3063 = vpow.pop %v3062
        %v3064 = vmul.f32 %v2930, 1.442695
        %v3065 = vpow.pop %v3064
        %v3066 = vmul.f32 %v2931, 1.442695
        %v3067 = vpow.pop %v3066
        %v3068 = vmul.f32 %v2932, 1.442695
        %v3069 = vpow.pop %v3068
        %v3070 = vmul.f32 %v2933, 1.442695
        %v3071 = vpow.pop %v3070
        %v3072 = vmul.f32 %v2934, 1.442695
        %v3073 = vpow.pop %v3072
        %v3074 = vmul.f32 %v2935, 1.442695
        %v3075 = vpow.pop %v3074
        %v3076 = vmul.f32 %v2936, 1.442695
        %v3077 = vpow.pop %v3076
        %v3078 = vmul.f32 %v2937, 1.442695
        %v3079 = vpow.pop %v3078
        %v3080 = vmul.f32 %v2938, 1.442695
        %v3081 = vpow.pop %v3080
        %v3082 = vmul.f32 %v2939, 1.442695
        %v3083 = vpow.pop %v3082
        %v3084 = vmul.f32 %v2940, 1.442695
        %v3085 = vpow.pop %v3084
        %v3086 = vmul.f32 %v2941, 1.442695
        %v3087 = vpow.pop %v3086
        %v3088 = vmul.f32 %v2942, 1.442695
        %v3089 = vpow.pop %v3088
        %v3090 = vmul.f32 %v2943, 1.442695
        %v3091 = vpow.pop %v3090
        %v3092 = vmul.f32 %v2944, 1.442695
        %v3093 = vpow.pop %v3092
        %v3094 = vmul.f32 %v2945, 1.442695
        %v3095 = vpow.pop %v3094
        %v3096 = vmul.f32 %v2946, 1.442695
        %v3097 = vpow.pop %v3096
        %v3098 = vmul.f32 %v2947, 1.442695
        %v3099 = vpow.pop %v3098
        %v3100 = vmul.f32 %v2948, 1.442695
        %v3101 = vpow.pop %v3100
        %v3102 = vmul.f32 %v2949, 1.442695
        %v3103 = vpow.pop %v3102
        %v3104 = vmul.f32 %v2950, 1.442695
        %v3105 = vpow.pop %v3104
        %v3106 = vmul.f32 %v2951, 1.442695
        %v3107 = vpow.pop %v3106
        %v3108 = vmul.f32 %v2952, 1.442695
        %v3109 = vpow.pop %v3108
        %v3110 = vmul.f32 %v2953, 1.442695
        %v3111 = vpow.pop %v3110
        %v3112 = vmul.f32 %v2954, 1.442695
        %v3113 = vpow.pop %v3112
        %v3114 = vmul.f32 %v2955, 1.442695
        %v3115 = vpow.pop %v3114
        %v3116 = vmul.f32 %v2956, 1.442695
        %v3117 = vpow.pop %v3116
        %v3118 = vmul.f32 %v2957, 1.442695
        %v3119 = vpow.pop %v3118
        %v3120 = vmul.f32 %v2958, 1.442695
        %v3121 = vpow.pop %v3120
        %v3122 = vmul.f32 %v2959, 1.442695
        %v3123 = vpow.pop %v3122
        %v3124 = vmul.f32 %v2960, 1.442695
        %v3125 = vpow.pop %v3124
        %v3126 = vmul.f32 %v2961, 1.442695
        %v3127 = vpow.pop %v3126
        %v3128 = vmul.f32 %v2962, 1.442695
        %v3129 = vpow.pop %v3128
        %v3130 = vmul.f32 %v2963, 1.442695
        %v3131 = vpow.pop %v3130
        %v3132 = vmul.f32 %v2964, 1.442695
        %v3133 = vpow.pop %v3132
        %v3134 = vmul.f32 %v2965, 1.442695
        %v3135 = vpow.pop %v3134
        %v3136 = vmul.f32 %v2966, 1.442695
        %v3137 = vpow.pop %v3136
        %v3138 = vmul.f32 %v2967, 1.442695
        %v3139 = vpow.pop %v3138
        %v3140 = vmul.f32 %v2968, 1.442695
        %v3141 = vpow.pop %v3140
        %v3142 = vmul.f32 %v2969, 1.442695
        %v3143 = vpow.pop %v3142
        %v3144 = vmul.f32 %v2970, 1.442695
        %v3145 = vpow.pop %v3144
        %v3146 = vmul.f32 %v2971, 1.442695
        %v3147 = vpow.pop %v3146
        %v3148 = vmul.f32 %v2972, 1.442695
        %v3149 = vpow.pop %v3148
        %v3150 = vmul.f32 %v2973, 1.442695
        %v3151 = vpow.pop %v3150
        %v3152 = vmul.f32 %v2974, 1.442695
        %v3153 = vpow.pop %v3152
        %v3154 = vmul.f32 %v2975, 1.442695
        %v3155 = vpow.pop %v3154
        %v3156 = vmul.f32 %v2976, 1.442695
        %v3157 = vpow.pop %v3156
        %v3158 = vmul.f32 %v2977, 1.442695
        %v3159 = vpow.pop %v3158
        %v3160 = vmul.f32 %v2978, 1.442695
        %v3161 = vpow.pop %v3160
        %v3162 = vmul.f32 %v2979, 1.442695
        %v3163 = vpow.pop %v3162
        %v3164 = vmul.f32 %v2980, 1.442695
        %v3165 = vpow.pop %v3164
        %v3166 = vmul.f32 %v2981, 1.442695
        %v3167 = vpow.pop %v3166
        %v3168 = vmul.f32 %v2982, 1.442695
        %v3169 = vpow.pop %v3168
        %v3170 = vmul.f32 %v2983, 1.442695
        %v3171 = vpow.pop %v3170
        %v3172 = vmul.f32 %v2984, 1.442695
        %v3173 = vpow.pop %v3172
        %v3174 = vmul.f32 %v2985, 1.442695
        %v3175 = vpow.pop %v3174
        %v3176 = vmul.f32 %v2986, 1.442695
        %v3177 = vpow.pop %v3176
        %v3178 = vmul.f32 %v2987, 1.442695
        %v3179 = vpow.pop %v3178
        %v3180 = vmul.f32 %v2988, 1.442695
        %v3181 = vpow.pop %v3180
        %v3182 = vmul.f32 %v2989, 1.442695
        %v3183 = vpow.pop %v3182
        %v3184 = vmul.f32 %v2990, 1.442695
        %v3185 = vpow.pop %v3184
        %v3186 = vmul.f32 %v2991, 1.442695
        %v3187 = vpow.pop %v3186
        %v3188 = vmul.f32 %v2992, 1.442695
        %v3189 = vpow.pop %v3188
        %v3190 = vmul.f32 %v2993, 1.442695
        %v3191 = vpow.pop %v3190
        %v3192 = vmul.f32 %v2994, 1.442695
        %v3193 = vpow.pop %v3192
        %v3194 = vmul.f32 %v2995, 1.442695
        %v3195 = vpow.pop %v3194
        %v3196 = vmul.f32 %v2996, 1.442695
        %v3197 = vpow.pop %v3196
        %v3198 = vmul.f32 %v2997, 1.442695
        %v3199 = vpow.pop %v3198
        %v3200 = vmul.f32 %v2998, 1.442695
        %v3201 = vpow.pop %v3200
        %v3202 = vmul.f32 %v2999, 1.442695
        %v3203 = vpow.pop %v3202
        %v3204 = vmul.f32 %v3000, 1.442695
        %v3205 = vpow.pop %v3204
        %v3206 = vmul.f32 %v3001, 1.442695
        %v3207 = vpow.pop %v3206
        %v3208 = vmul.f32 %v3002, 1.442695
        %v3209 = vpow.pop %v3208
        %v3210 = vmul.f32 %v3003, 1.442695
        %v3211 = vpow.pop %v3210
        %v3212 = vmul.f32 %v3004, 1.442695
        %v3213 = vpow.pop %v3212
        %v3214 = vmul.f32 %v3005, 1.442695
        %v3215 = vpow.pop %v3214
        %v3216 = vmul.f32 %v3006, 1.442695
        %v3217 = vpow.pop %v3216
        %v3218 = vmul.f32 %v3007, 1.442695
        %v3219 = vpow.pop %v3218
        %v3220 = vmul.f32 %v3008, 1.442695
        %v3221 = vpow.pop %v3220
        %v3222 = vmul.f32 %v3009, 1.442695
        %v3223 = vpow.pop %v3222
        %v3224 = vmul.f32 %v3010, 1.442695
        %v3225 = vpow.pop %v3224
        %v3226 = vmul.f32 %v3011, 1.442695
        %v3227 = vpow.pop %v3226
        %v3228 = vmul.f32 %v3012, 1.442695
        %v3229 = vpow.pop %v3228
        %v3230 = vmul.f32 %v3013, 1.442695
        %v3231 = vpow.pop %v3230
        %v3232 = vmul.f32 %v3014, 1.442695
        %v3233 = vpow.pop %v3232
        %v3234 = vmul.f32 %v3015, 1.442695
        %v3235 = vpow.pop %v3234
        %v3236 = vmul.f32 %v3016, 1.442695
        %v3237 = vpow.pop %v3236
        %v3238 = vmul.f32 %v3017, 1.442695
        %v3239 = vpow.pop %v3238
        %v3240 = vmul.f32 %v3018, 1.442695
        %v3241 = vpow.pop %v3240
        %v3242 = vmul.f32 %v3019, 1.442695
        %v3243 = vpow.pop %v3242
        %v3244 = vmul.f32 %v3020, 1.442695
        %v3245 = vpow.pop %v3244
        %v3246 = vmul.f32 %v3021, 1.442695
        %v3247 = vpow.pop %v3246
        %v3248 = vmul.f32 %v3022, 1.442695
        %v3249 = vpow.pop %v3248
        %v3250 = vmul.f32 %v3023, 1.442695
        %v3251 = vpow.pop %v3250
        %v3252 = vmul.f32 %v3024, 1.442695
        %v3253 = vpow.pop %v3252
        %v3254 = vmul.f32 %v3025, 1.442695
        %v3255 = vpow.pop %v3254
        %v3256 = vmul.f32 %v3026, 1.442695
        %v3257 = vpow.pop %v3256
        %v3258 = vmul.f32 %v3027, 1.442695
        %v3259 = vpow.pop %v3258
        %v3260 = vmul.f32 %v3028, 1.442695
        %v3261 = vpow.pop %v3260
        %v3262 = vmul.f32 %v3029, 1.442695
        %v3263 = vpow.pop %v3262
        %v3264 = vmul.f32 %v3030, 1.442695
        %v3265 = vpow.pop %v3264
        %v3266 = vmul.f32 %v3031, 1.442695
        %v3267 = vpow.pop %v3266
        %v3268 = vmul.f32 %v3032, 1.442695
        %v3269 = vpow.pop %v3268
        %v3270 = vmul.f32 %v3033, 1.442695
        %v3271 = vpow.pop %v3270
        %v3272 = vmul.f32 %v3034, 1.442695
        %v3273 = vpow.pop %v3272
        %v3274 = vmul.f32 %v3035, 1.442695
        %v3275 = vpow.pop %v3274
        %v3276 = vmul.f32 %v3036, 1.442695
        %v3277 = vpow.pop %v3276
        %v3278 = vmul.f32 %v3037, 1.442695
        %v3279 = vpow.pop %v3278
        %v3280 = vmul.f32 %v3038, 1.442695
        %v3281 = vpow.pop %v3280
        %v3282 = vmul.f32 %v3039, 1.442695
        %v3283 = vpow.pop %v3282
        %v3284 = vmul.f32 %v3040, 1.442695
        %v3285 = vpow.pop %v3284
        %v3286 = vmul.f32 %v3041, 1.442695
        %v3287 = vpow.pop %v3286
        %v3288 = vmul.f32 %v3042, 1.442695
        %v3289 = vpow.pop %v3288
        %v3290 = vmul.f32 %v3043, 1.442695
        %v3291 = vpow.pop %v3290
        %v3292 = vmul.f32 %v3044, 1.442695
        %v3293 = vpow.pop %v3292
        %v3294 = vmul.f32 %v3045, 1.442695
        %v3295 = vpow.pop %v3294
        %v3296 = vmul.f32 %v3046, 1.442695
        %v3297 = vpow.pop %v3296
        %v3298 = vmul.f32 %v3047, 1.442695
        %v3299 = vpow.pop %v3298
        %v3300 = vmul.f32 %v3048, 1.442695
        %v3301 = vpow.pop %v3300
        %v3302 = vmul.f32 %v3049, 1.442695
        %v3303 = vpow.pop %v3302
        %v3304 = vmul.f32 %v3050, 1.442695
        %v3305 = vpow.pop %v3304
        %v3306 = vmul.f32 %v3051, 1.442695
        %v3307 = vpow.pop %v3306
        %v3308 = vadd.f32 %v3053, %v3055
        %v3309 = vadd.f32 %v3308, %v3057
        %v3310 = vadd.f32 %v3309, %v3059
        %3311 = vadd.xlane.f32.xlu0 %v3310
        %v3312 = vpop.xlane.xlu0 %3311
        %v3313 = vadd.f32 %v3061, %v3063
        %v3314 = vadd.f32 %v3313, %v3065
        %v3315 = vadd.f32 %v3314, %v3067
        %3316 = vadd.xlane.f32.xlu0 %v3315
        %v3317 = vpop.xlane.xlu0 %3316
        %v3318 = vadd.f32 %v3069, %v3071
        %v3319 = vadd.f32 %v3318, %v3073
        %v3320 = vadd.f32 %v3319, %v3075
        %3321 = vadd.xlane.f32.xlu0 %v3320
        %v3322 = vpop.xlane.xlu0 %3321
        %v3323 = vadd.f32 %v3077, %v3079
        %v3324 = vadd.f32 %v3323, %v3081
        %v3325 = vadd.f32 %v3324, %v3083
        %3326 = vadd.xlane.f32.xlu0 %v3325
        %v3327 = vpop.xlane.xlu0 %3326
        %v3328 = vadd.f32 %v3085, %v3087
        %v3329 = vadd.f32 %v3328, %v3089
        %v3330 = vadd.f32 %v3329, %v3091
        %3331 = vadd.xlane.f32.xlu0 %v3330
        %v3332 = vpop.xlane.xlu0 %3331
        %v3333 = vadd.f32 %v3093, %v3095
        %v3334 = vadd.f32 %v3333, %v3097
        %v3335 = vadd.f32 %v3334, %v3099
        %3336 = vadd.xlane.f32.xlu0 %v3335
        %v3337 = vpop.xlane.xlu0 %3336
        %v3338 = vadd.f32 %v3101, %v3103
        %v3339 = vadd.f32 %v3338, %v3105
        %v3340 = vadd.f32 %v3339, %v3107
        %3341 = vadd.xlane.f32.xlu0 %v3340
        %v3342 = vpop.xlane.xlu0 %3341
        %v3343 = vadd.f32 %v3109, %v3111
        %v3344 = vadd.f32 %v3343, %v3113
        %v3345 = vadd.f32 %v3344, %v3115
        %3346 = vadd.xlane.f32.xlu0 %v3345
        %v3347 = vpop.xlane.xlu0 %3346
        %v3348 = vadd.f32 %v3117, %v3119
        %v3349 = vadd.f32 %v3348, %v3121
        %v3350 = vadd.f32 %v3349, %v3123
        %3351 = vadd.xlane.f32.xlu0 %v3350
        %v3352 = vpop.xlane.xlu0 %3351
        %v3353 = vadd.f32 %v3125, %v3127
        %v3354 = vadd.f32 %v3353, %v3129
        %v3355 = vadd.f32 %v3354, %v3131
        %3356 = vadd.xlane.f32.xlu0 %v3355
        %v3357 = vpop.xlane.xlu0 %3356
        %v3358 = vadd.f32 %v3133, %v3135
        %v3359 = vadd.f32 %v3358, %v3137
        %v3360 = vadd.f32 %v3359, %v3139
        %3361 = vadd.xlane.f32.xlu0 %v3360
        %v3362 = vpop.xlane.xlu0 %3361
        %v3363 = vadd.f32 %v3141, %v3143
        %v3364 = vadd.f32 %v3363, %v3145
        %v3365 = vadd.f32 %v3364, %v3147
        %3366 = vadd.xlane.f32.xlu0 %v3365
        %v3367 = vpop.xlane.xlu0 %3366
        %v3368 = vadd.f32 %v3149, %v3151
        %v3369 = vadd.f32 %v3368, %v3153
        %v3370 = vadd.f32 %v3369, %v3155
        %3371 = vadd.xlane.f32.xlu0 %v3370
        %v3372 = vpop.xlane.xlu0 %3371
        %v3373 = vadd.f32 %v3157, %v3159
        %v3374 = vadd.f32 %v3373, %v3161
        %v3375 = vadd.f32 %v3374, %v3163
        %3376 = vadd.xlane.f32.xlu0 %v3375
        %v3377 = vpop.xlane.xlu0 %3376
        %v3378 = vadd.f32 %v3165, %v3167
        %v3379 = vadd.f32 %v3378, %v3169
        %v3380 = vadd.f32 %v3379, %v3171
        %3381 = vadd.xlane.f32.xlu0 %v3380
        %v3382 = vpop.xlane.xlu0 %3381
        %v3383 = vadd.f32 %v3173, %v3175
        %v3384 = vadd.f32 %v3383, %v3177
        %v3385 = vadd.f32 %v3384, %v3179
        %3386 = vadd.xlane.f32.xlu0 %v3385
        %v3387 = vpop.xlane.xlu0 %3386
        %v3388 = vadd.f32 %v3181, %v3183
        %v3389 = vadd.f32 %v3388, %v3185
        %v3390 = vadd.f32 %v3389, %v3187
        %3391 = vadd.xlane.f32.xlu0 %v3390
        %v3392 = vpop.xlane.xlu0 %3391
        %v3393 = vadd.f32 %v3189, %v3191
        %v3394 = vadd.f32 %v3393, %v3193
        %v3395 = vadd.f32 %v3394, %v3195
        %3396 = vadd.xlane.f32.xlu0 %v3395
        %v3397 = vpop.xlane.xlu0 %3396
        %v3398 = vadd.f32 %v3197, %v3199
        %v3399 = vadd.f32 %v3398, %v3201
        %v3400 = vadd.f32 %v3399, %v3203
        %3401 = vadd.xlane.f32.xlu0 %v3400
        %v3402 = vpop.xlane.xlu0 %3401
        %v3403 = vadd.f32 %v3205, %v3207
        %v3404 = vadd.f32 %v3403, %v3209
        %v3405 = vadd.f32 %v3404, %v3211
        %3406 = vadd.xlane.f32.xlu0 %v3405
        %v3407 = vpop.xlane.xlu0 %3406
        %v3408 = vadd.f32 %v3213, %v3215
        %v3409 = vadd.f32 %v3408, %v3217
        %v3410 = vadd.f32 %v3409, %v3219
        %3411 = vadd.xlane.f32.xlu0 %v3410
        %v3412 = vpop.xlane.xlu0 %3411
        %v3413 = vadd.f32 %v3221, %v3223
        %v3414 = vadd.f32 %v3413, %v3225
        %v3415 = vadd.f32 %v3414, %v3227
        %3416 = vadd.xlane.f32.xlu0 %v3415
        %v3417 = vpop.xlane.xlu0 %3416
        %v3418 = vadd.f32 %v3229, %v3231
        %v3419 = vadd.f32 %v3418, %v3233
        %v3420 = vadd.f32 %v3419, %v3235
        %3421 = vadd.xlane.f32.xlu0 %v3420
        %v3422 = vpop.xlane.xlu0 %3421
        %v3423 = vadd.f32 %v3237, %v3239
        %v3424 = vadd.f32 %v3423, %v3241
        %v3425 = vadd.f32 %v3424, %v3243
        %3426 = vadd.xlane.f32.xlu0 %v3425
        %v3427 = vpop.xlane.xlu0 %3426
        %v3428 = vadd.f32 %v3245, %v3247
        %v3429 = vadd.f32 %v3428, %v3249
        %v3430 = vadd.f32 %v3429, %v3251
        %3431 = vadd.xlane.f32.xlu0 %v3430
        %v3432 = vpop.xlane.xlu0 %3431
        %v3433 = vadd.f32 %v3253, %v3255
        %v3434 = vadd.f32 %v3433, %v3257
        %v3435 = vadd.f32 %v3434, %v3259
        %3436 = vadd.xlane.f32.xlu0 %v3435
        %v3437 = vpop.xlane.xlu0 %3436
        %v3438 = vadd.f32 %v3261, %v3263
        %v3439 = vadd.f32 %v3438, %v3265
        %v3440 = vadd.f32 %v3439, %v3267
        %3441 = vadd.xlane.f32.xlu0 %v3440
        %v3442 = vpop.xlane.xlu0 %3441
        %v3443 = vadd.f32 %v3269, %v3271
        %v3444 = vadd.f32 %v3443, %v3273
        %v3445 = vadd.f32 %v3444, %v3275
        %3446 = vadd.xlane.f32.xlu0 %v3445
        %v3447 = vpop.xlane.xlu0 %3446
        %v3448 = vadd.f32 %v3277, %v3279
        %v3449 = vadd.f32 %v3448, %v3281
        %v3450 = vadd.f32 %v3449, %v3283
        %3451 = vadd.xlane.f32.xlu0 %v3450
        %v3452 = vpop.xlane.xlu0 %3451
        %v3453 = vadd.f32 %v3285, %v3287
        %v3454 = vadd.f32 %v3453, %v3289
        %v3455 = vadd.f32 %v3454, %v3291
        %3456 = vadd.xlane.f32.xlu0 %v3455
        %v3457 = vpop.xlane.xlu0 %3456
        %v3458 = vadd.f32 %v3293, %v3295
        %v3459 = vadd.f32 %v3458, %v3297
        %v3460 = vadd.f32 %v3459, %v3299
        %3461 = vadd.xlane.f32.xlu0 %v3460
        %v3462 = vpop.xlane.xlu0 %3461
        %v3463 = vadd.f32 %v3301, %v3303
        %v3464 = vadd.f32 %v3463, %v3305
        %v3465 = vadd.f32 %v3464, %v3307
        %3466 = vadd.xlane.f32.xlu0 %v3465
        %v3467 = vpop.xlane.xlu0 %3466
        %v3468 = vrcp.pop %v3312
        %v3469 = vrcp.pop %v3317
        %v3470 = vrcp.pop %v3322
        %v3471 = vrcp.pop %v3327
        %v3472 = vrcp.pop %v3332
        %v3473 = vrcp.pop %v3337
        %v3474 = vrcp.pop %v3342
        %v3475 = vrcp.pop %v3347
        %v3476 = vrcp.pop %v3352
        %v3477 = vrcp.pop %v3357
        %v3478 = vrcp.pop %v3362
        %v3479 = vrcp.pop %v3367
        %v3480 = vrcp.pop %v3372
        %v3481 = vrcp.pop %v3377
        %v3482 = vrcp.pop %v3382
        %v3483 = vrcp.pop %v3387
        %v3484 = vrcp.pop %v3392
        %v3485 = vrcp.pop %v3397
        %v3486 = vrcp.pop %v3402
        %v3487 = vrcp.pop %v3407
        %v3488 = vrcp.pop %v3412
        %v3489 = vrcp.pop %v3417
        %v3490 = vrcp.pop %v3422
        %v3491 = vrcp.pop %v3427
        %v3492 = vrcp.pop %v3432
        %v3493 = vrcp.pop %v3437
        %v3494 = vrcp.pop %v3442
        %v3495 = vrcp.pop %v3447
        %v3496 = vrcp.pop %v3452
        %v3497 = vrcp.pop %v3457
        %v3498 = vrcp.pop %v3462
        %v3499 = vrcp.pop %v3467
        %v3500 = vmul.f32 %v3053, %v3468
        %v3501 = vmul.f32 %v3055, %v3468
        %v3502 = vmul.f32 %v3057, %v3468
        %v3503 = vmul.f32 %v3059, %v3468
        %v3504 = vmul.f32 %v3061, %v3469
        %v3505 = vmul.f32 %v3063, %v3469
        %v3506 = vmul.f32 %v3065, %v3469
        %v3507 = vmul.f32 %v3067, %v3469
        %v3508 = vmul.f32 %v3069, %v3470
        %v3509 = vmul.f32 %v3071, %v3470
        %v3510 = vmul.f32 %v3073, %v3470
        %v3511 = vmul.f32 %v3075, %v3470
        %v3512 = vmul.f32 %v3077, %v3471
        %v3513 = vmul.f32 %v3079, %v3471
        %v3514 = vmul.f32 %v3081, %v3471
        %v3515 = vmul.f32 %v3083, %v3471
        %v3516 = vmul.f32 %v3085, %v3472
        %v3517 = vmul.f32 %v3087, %v3472
        %v3518 = vmul.f32 %v3089, %v3472
        %v3519 = vmul.f32 %v3091, %v3472
        %v3520 = vmul.f32 %v3093, %v3473
        %v3521 = vmul.f32 %v3095, %v3473
        %v3522 = vmul.f32 %v3097, %v3473
        %v3523 = vmul.f32 %v3099, %v3473
        %v3524 = vmul.f32 %v3101, %v3474
        %v3525 = vmul.f32 %v3103, %v3474
        %v3526 = vmul.f32 %v3105, %v3474
        %v3527 = vmul.f32 %v3107, %v3474
        %v3528 = vmul.f32 %v3109, %v3475
        %v3529 = vmul.f32 %v3111, %v3475
        %v3530 = vmul.f32 %v3113, %v3475
        %v3531 = vmul.f32 %v3115, %v3475
        %v3532 = vmul.f32 %v3117, %v3476
        %v3533 = vmul.f32 %v3119, %v3476
        %v3534 = vmul.f32 %v3121, %v3476
        %v3535 = vmul.f32 %v3123, %v3476
        %v3536 = vmul.f32 %v3125, %v3477
        %v3537 = vmul.f32 %v3127, %v3477
        %v3538 = vmul.f32 %v3129, %v3477
        %v3539 = vmul.f32 %v3131, %v3477
        %v3540 = vmul.f32 %v3133, %v3478
        %v3541 = vmul.f32 %v3135, %v3478
        %v3542 = vmul.f32 %v3137, %v3478
        %v3543 = vmul.f32 %v3139, %v3478
        %v3544 = vmul.f32 %v3141, %v3479
        %v3545 = vmul.f32 %v3143, %v3479
        %v3546 = vmul.f32 %v3145, %v3479
        %v3547 = vmul.f32 %v3147, %v3479
        %v3548 = vmul.f32 %v3149, %v3480
        %v3549 = vmul.f32 %v3151, %v3480
        %v3550 = vmul.f32 %v3153, %v3480
        %v3551 = vmul.f32 %v3155, %v3480
        %v3552 = vmul.f32 %v3157, %v3481
        %v3553 = vmul.f32 %v3159, %v3481
        %v3554 = vmul.f32 %v3161, %v3481
        %v3555 = vmul.f32 %v3163, %v3481
        %v3556 = vmul.f32 %v3165, %v3482
        %v3557 = vmul.f32 %v3167, %v3482
        %v3558 = vmul.f32 %v3169, %v3482
        %v3559 = vmul.f32 %v3171, %v3482
        %v3560 = vmul.f32 %v3173, %v3483
        %v3561 = vmul.f32 %v3175, %v3483
        %v3562 = vmul.f32 %v3177, %v3483
        %v3563 = vmul.f32 %v3179, %v3483
        %v3564 = vmul.f32 %v3181, %v3484
        %v3565 = vmul.f32 %v3183, %v3484
        %v3566 = vmul.f32 %v3185, %v3484
        %v3567 = vmul.f32 %v3187, %v3484
        %v3568 = vmul.f32 %v3189, %v3485
        %v3569 = vmul.f32 %v3191, %v3485
        %v3570 = vmul.f32 %v3193, %v3485
        %v3571 = vmul.f32 %v3195, %v3485
        %v3572 = vmul.f32 %v3197, %v3486
        %v3573 = vmul.f32 %v3199, %v3486
        %v3574 = vmul.f32 %v3201, %v3486
        %v3575 = vmul.f32 %v3203, %v3486
        %v3576 = vmul.f32 %v3205, %v3487
        %v3577 = vmul.f32 %v3207, %v3487
        %v3578 = vmul.f32 %v3209, %v3487
        %v3579 = vmul.f32 %v3211, %v3487
        %v3580 = vmul.f32 %v3213, %v3488
        %v3581 = vmul.f32 %v3215, %v3488
        %v3582 = vmul.f32 %v3217, %v3488
        %v3583 = vmul.f32 %v3219, %v3488
        %v3584 = vmul.f32 %v3221, %v3489
        %v3585 = vmul.f32 %v3223, %v3489
        %v3586 = vmul.f32 %v3225, %v3489
        %v3587 = vmul.f32 %v3227, %v3489
        %v3588 = vmul.f32 %v3229, %v3490
        %v3589 = vmul.f32 %v3231, %v3490
        %v3590 = vmul.f32 %v3233, %v3490
        %v3591 = vmul.f32 %v3235, %v3490
        %v3592 = vmul.f32 %v3237, %v3491
        %v3593 = vmul.f32 %v3239, %v3491
        %v3594 = vmul.f32 %v3241, %v3491
        %v3595 = vmul.f32 %v3243, %v3491
        %v3596 = vmul.f32 %v3245, %v3492
        %v3597 = vmul.f32 %v3247, %v3492
        %v3598 = vmul.f32 %v3249, %v3492
        %v3599 = vmul.f32 %v3251, %v3492
        %v3600 = vmul.f32 %v3253, %v3493
        %v3601 = vmul.f32 %v3255, %v3493
        %v3602 = vmul.f32 %v3257, %v3493
        %v3603 = vmul.f32 %v3259, %v3493
        %v3604 = vmul.f32 %v3261, %v3494
        %v3605 = vmul.f32 %v3263, %v3494
        %v3606 = vmul.f32 %v3265, %v3494
        %v3607 = vmul.f32 %v3267, %v3494
        %v3608 = vmul.f32 %v3269, %v3495
        %v3609 = vmul.f32 %v3271, %v3495
        %v3610 = vmul.f32 %v3273, %v3495
        %v3611 = vmul.f32 %v3275, %v3495
        %v3612 = vmul.f32 %v3277, %v3496
        %v3613 = vmul.f32 %v3279, %v3496
        %v3614 = vmul.f32 %v3281, %v3496
        %v3615 = vmul.f32 %v3283, %v3496
        %v3616 = vmul.f32 %v3285, %v3497
        %v3617 = vmul.f32 %v3287, %v3497
        %v3618 = vmul.f32 %v3289, %v3497
        %v3619 = vmul.f32 %v3291, %v3497
        %v3620 = vmul.f32 %v3293, %v3498
        %v3621 = vmul.f32 %v3295, %v3498
        %v3622 = vmul.f32 %v3297, %v3498
        %v3623 = vmul.f32 %v3299, %v3498
        %v3624 = vmul.f32 %v3301, %v3499
        %v3625 = vmul.f32 %v3303, %v3499
        %v3626 = vmul.f32 %v3305, %v3499
        %v3627 = vmul.f32 %v3307, %v3499
        %v3628 = vmul.f32 %v3500, %v882
        %v3629 = vmul.f32 %v3501, %v883
        %v3630 = vmul.f32 %v3502, %v884
        %v3631 = vmul.f32 %v3503, %v885
        %v3632 = vmul.f32 %v3504, %v886
        %v3633 = vmul.f32 %v3505, %v887
        %v3634 = vmul.f32 %v3506, %v888
        %v3635 = vmul.f32 %v3507, %v889
        %v3636 = vmul.f32 %v3508, %v890
        %v3637 = vmul.f32 %v3509, %v891
        %v3638 = vmul.f32 %v3510, %v892
        %v3639 = vmul.f32 %v3511, %v893
        %v3640 = vmul.f32 %v3512, %v894
        %v3641 = vmul.f32 %v3513, %v895
        %v3642 = vmul.f32 %v3514, %v896
        %v3643 = vmul.f32 %v3515, %v897
        %v3644 = vmul.f32 %v3516, %v898
        %v3645 = vmul.f32 %v3517, %v899
        %v3646 = vmul.f32 %v3518, %v900
        %v3647 = vmul.f32 %v3519, %v901
        %v3648 = vmul.f32 %v3520, %v902
        %v3649 = vmul.f32 %v3521, %v903
        %v3650 = vmul.f32 %v3522, %v904
        %v3651 = vmul.f32 %v3523, %v905
        %v3652 = vmul.f32 %v3524, %v906
        %v3653 = vmul.f32 %v3525, %v907
        %v3654 = vmul.f32 %v3526, %v908
        %v3655 = vmul.f32 %v3527, %v909
        %v3656 = vmul.f32 %v3528, %v910
        %v3657 = vmul.f32 %v3529, %v911
        %v3658 = vmul.f32 %v3530, %v912
        %v3659 = vmul.f32 %v3531, %v913
        %v3660 = vmul.f32 %v3532, %v914
        %v3661 = vmul.f32 %v3533, %v915
        %v3662 = vmul.f32 %v3534, %v916
        %v3663 = vmul.f32 %v3535, %v917
        %v3664 = vmul.f32 %v3536, %v918
        %v3665 = vmul.f32 %v3537, %v919
        %v3666 = vmul.f32 %v3538, %v920
        %v3667 = vmul.f32 %v3539, %v921
        %v3668 = vmul.f32 %v3540, %v922
        %v3669 = vmul.f32 %v3541, %v923
        %v3670 = vmul.f32 %v3542, %v924
        %v3671 = vmul.f32 %v3543, %v925
        %v3672 = vmul.f32 %v3544, %v926
        %v3673 = vmul.f32 %v3545, %v927
        %v3674 = vmul.f32 %v3546, %v928
        %v3675 = vmul.f32 %v3547, %v929
        %v3676 = vmul.f32 %v3548, %v930
        %v3677 = vmul.f32 %v3549, %v931
        %v3678 = vmul.f32 %v3550, %v932
        %v3679 = vmul.f32 %v3551, %v933
        %v3680 = vmul.f32 %v3552, %v934
        %v3681 = vmul.f32 %v3553, %v935
        %v3682 = vmul.f32 %v3554, %v936
        %v3683 = vmul.f32 %v3555, %v937
        %v3684 = vmul.f32 %v3556, %v938
        %v3685 = vmul.f32 %v3557, %v939
        %v3686 = vmul.f32 %v3558, %v940
        %v3687 = vmul.f32 %v3559, %v941
        %v3688 = vmul.f32 %v3560, %v942
        %v3689 = vmul.f32 %v3561, %v943
        %v3690 = vmul.f32 %v3562, %v944
        %v3691 = vmul.f32 %v3563, %v945
        %v3692 = vmul.f32 %v3564, %v946
        %v3693 = vmul.f32 %v3565, %v947
        %v3694 = vmul.f32 %v3566, %v948
        %v3695 = vmul.f32 %v3567, %v949
        %v3696 = vmul.f32 %v3568, %v950
        %v3697 = vmul.f32 %v3569, %v951
        %v3698 = vmul.f32 %v3570, %v952
        %v3699 = vmul.f32 %v3571, %v953
        %v3700 = vmul.f32 %v3572, %v954
        %v3701 = vmul.f32 %v3573, %v955
        %v3702 = vmul.f32 %v3574, %v956
        %v3703 = vmul.f32 %v3575, %v957
        %v3704 = vmul.f32 %v3576, %v958
        %v3705 = vmul.f32 %v3577, %v959
        %v3706 = vmul.f32 %v3578, %v960
        %v3707 = vmul.f32 %v3579, %v961
        %v3708 = vmul.f32 %v3580, %v962
        %v3709 = vmul.f32 %v3581, %v963
        %v3710 = vmul.f32 %v3582, %v964
        %v3711 = vmul.f32 %v3583, %v965
        %v3712 = vmul.f32 %v3584, %v966
        %v3713 = vmul.f32 %v3585, %v967
        %v3714 = vmul.f32 %v3586, %v968
        %v3715 = vmul.f32 %v3587, %v969
        %v3716 = vmul.f32 %v3588, %v970
        %v3717 = vmul.f32 %v3589, %v971
        %v3718 = vmul.f32 %v3590, %v972
        %v3719 = vmul.f32 %v3591, %v973
        %v3720 = vmul.f32 %v3592, %v974
        %v3721 = vmul.f32 %v3593, %v975
        %v3722 = vmul.f32 %v3594, %v976
        %v3723 = vmul.f32 %v3595, %v977
        %v3724 = vmul.f32 %v3596, %v978
        %v3725 = vmul.f32 %v3597, %v979
        %v3726 = vmul.f32 %v3598, %v980
        %v3727 = vmul.f32 %v3599, %v981
        %v3728 = vmul.f32 %v3600, %v982
        %v3729 = vmul.f32 %v3601, %v983
        %v3730 = vmul.f32 %v3602, %v984
        %v3731 = vmul.f32 %v3603, %v985
        %v3732 = vmul.f32 %v3604, %v986
        %v3733 = vmul.f32 %v3605, %v987
        %v3734 = vmul.f32 %v3606, %v988
        %v3735 = vmul.f32 %v3607, %v989
        %v3736 = vmul.f32 %v3608, %v990
        %v3737 = vmul.f32 %v3609, %v991
        %v3738 = vmul.f32 %v3610, %v992
        %v3739 = vmul.f32 %v3611, %v993
        %v3740 = vmul.f32 %v3612, %v994
        %v3741 = vmul.f32 %v3613, %v995
        %v3742 = vmul.f32 %v3614, %v996
        %v3743 = vmul.f32 %v3615, %v997
        %v3744 = vmul.f32 %v3616, %v998
        %v3745 = vmul.f32 %v3617, %v999
        %v3746 = vmul.f32 %v3618, %v1000
        %v3747 = vmul.f32 %v3619, %v1001
        %v3748 = vmul.f32 %v3620, %v1002
        %v3749 = vmul.f32 %v3621, %v1003
        %v3750 = vmul.f32 %v3622, %v1004
        %v3751 = vmul.f32 %v3623, %v1005
        %v3752 = vmul.f32 %v3624, %v1006
        %v3753 = vmul.f32 %v3625, %v1007
        %v3754 = vmul.f32 %v3626, %v1008
        %v3755 = vmul.f32 %v3627, %v1009
        %v3756 = vld [vmem:[%s4] sm:$0xff]
        %v3757 = vld [vmem:[%s4 + $0x8] sm:$0xff]
        %v3758 = vld [vmem:[%s4 + $0x10] sm:$0xff]
        %v3759 = vld [vmem:[%s4 + $0x18] sm:$0xff]
        %v3760 = vld [vmem:[%s4 + $0x20] sm:$0xff]
        %v3761 = vld [vmem:[%s4 + $0x28] sm:$0xff]
        %v3762 = vld [vmem:[%s4 + $0x30] sm:$0xff]
        %v3763 = vld [vmem:[%s4 + $0x38] sm:$0xff]
        %v3764 = vld [vmem:[%s4 + $0x40] sm:$0xff]
        %v3765 = vld [vmem:[%s4 + $0x48] sm:$0xff]
        %v3766 = vld [vmem:[%s4 + $0x50] sm:$0xff]
        %v3767 = vld [vmem:[%s4 + $0x58] sm:$0xff]
        %v3768 = vld [vmem:[%s4 + $0x60] sm:$0xff]
        %v3769 = vld [vmem:[%s4 + $0x68] sm:$0xff]
        %v3770 = vld [vmem:[%s4 + $0x70] sm:$0xff]
        %v3771 = vld [vmem:[%s4 + $0x78] sm:$0xff]
        %v3772 = vld [vmem:[%s4 + $0x80] sm:$0xff]
        %v3773 = vld [vmem:[%s4 + $0x88] sm:$0xff]
        %v3774 = vld [vmem:[%s4 + $0x90] sm:$0xff]
        %v3775 = vld [vmem:[%s4 + $0x98] sm:$0xff]
        %v3776 = vld [vmem:[%s4 + $0xa0] sm:$0xff]
        %v3777 = vld [vmem:[%s4 + $0xa8] sm:$0xff]
        %v3778 = vld [vmem:[%s4 + $0xb0] sm:$0xff]
        %v3779 = vld [vmem:[%s4 + $0xb8] sm:$0xff]
        %v3780 = vld [vmem:[%s4 + $0xc0] sm:$0xff]
        %v3781 = vld [vmem:[%s4 + $0xc8] sm:$0xff]
        %v3782 = vld [vmem:[%s4 + $0xd0] sm:$0xff]
        %v3783 = vld [vmem:[%s4 + $0xd8] sm:$0xff]
        %v3784 = vld [vmem:[%s4 + $0xe0] sm:$0xff]
        %v3785 = vld [vmem:[%s4 + $0xe8] sm:$0xff]
        %v3786 = vld [vmem:[%s4 + $0xf0] sm:$0xff]
        %v3787 = vld [vmem:[%s4 + $0xf8] sm:$0xff]
        %v3788 = vld [vmem:[%s4 + $0x100] sm:$0xff]
        %v3789 = vld [vmem:[%s4 + $0x108] sm:$0xff]
        %v3790 = vld [vmem:[%s4 + $0x110] sm:$0xff]
        %v3791 = vld [vmem:[%s4 + $0x118] sm:$0xff]
        %v3792 = vld [vmem:[%s4 + $0x120] sm:$0xff]
        %v3793 = vld [vmem:[%s4 + $0x128] sm:$0xff]
        %v3794 = vld [vmem:[%s4 + $0x130] sm:$0xff]
        %v3795 = vld [vmem:[%s4 + $0x138] sm:$0xff]
        %v3796 = vld [vmem:[%s4 + $0x140] sm:$0xff]
        %v3797 = vld [vmem:[%s4 + $0x148] sm:$0xff]
        %v3798 = vld [vmem:[%s4 + $0x150] sm:$0xff]
        %v3799 = vld [vmem:[%s4 + $0x158] sm:$0xff]
        %v3800 = vld [vmem:[%s4 + $0x160] sm:$0xff]
        %v3801 = vld [vmem:[%s4 + $0x168] sm:$0xff]
        %v3802 = vld [vmem:[%s4 + $0x170] sm:$0xff]
        %v3803 = vld [vmem:[%s4 + $0x178] sm:$0xff]
        %v3804 = vld [vmem:[%s4 + $0x180] sm:$0xff]
        %v3805 = vld [vmem:[%s4 + $0x188] sm:$0xff]
        %v3806 = vld [vmem:[%s4 + $0x190] sm:$0xff]
        %v3807 = vld [vmem:[%s4 + $0x198] sm:$0xff]
        %v3808 = vld [vmem:[%s4 + $0x1a0] sm:$0xff]
        %v3809 = vld [vmem:[%s4 + $0x1a8] sm:$0xff]
        %v3810 = vld [vmem:[%s4 + $0x1b0] sm:$0xff]
        %v3811 = vld [vmem:[%s4 + $0x1b8] sm:$0xff]
        %v3812 = vld [vmem:[%s4 + $0x1c0] sm:$0xff]
        %v3813 = vld [vmem:[%s4 + $0x1c8] sm:$0xff]
        %v3814 = vld [vmem:[%s4 + $0x1d0] sm:$0xff]
        %v3815 = vld [vmem:[%s4 + $0x1d8] sm:$0xff]
        %v3816 = vld [vmem:[%s4 + $0x1e0] sm:$0xff]
        %v3817 = vld [vmem:[%s4 + $0x1e8] sm:$0xff]
        %v3818 = vld [vmem:[%s4 + $0x1f0] sm:$0xff]
        %v3819 = vld [vmem:[%s4 + $0x1f8] sm:$0xff]
        %v3820 = vld [vmem:[%s5] sm:$0x1]
        %v3822 = vlaneseq
        %v3823 = vshrl.u32 %v3822, 7
        %v3824 = vsub.s32 0, %v3823
        %v3825 = vrot.slane %v3820, %v3824
        %3827 = vmatprep.subr.mxu0 0.0
        %3828 = vmatpush1.msra.mxu0 %v3771
        %3829 = vmatprep.subr.mxu0 0.0
        %3830 = vmatpush1.msra.mxu0 %v3770
        %3831 = vmatprep.subr.mxu0 0.0
        %3832 = vmatpush1.msra.mxu0 %v3769
        %3833 = vmatprep.subr.mxu0 0.0
        %3834 = vmatpush1.msra.mxu0 %v3768
        %3835 = vmatprep.subr.mxu0 0.0
        %3836 = vmatpush1.msra.mxu0 %v3767
        %3837 = vmatprep.subr.mxu0 0.0
        %3838 = vmatpush1.msra.mxu0 %v3766
        %3839 = vmatprep.subr.mxu0 0.0
        %3840 = vmatpush1.msra.mxu0 %v3765
        %3841 = vmatprep.subr.mxu0 0.0
        %3842 = vmatpush1.msra.mxu0 %v3764
        %3843 = vmatprep.subr.mxu0 0.0
        %3844 = vmatpush1.msra.mxu0 %v3763
        %3845 = vmatprep.subr.mxu0 0.0
        %3846 = vmatpush1.msra.mxu0 %v3762
        %3847 = vmatprep.subr.mxu0 0.0
        %3848 = vmatpush1.msra.mxu0 %v3761
        %3849 = vmatprep.subr.mxu0 0.0
        %3850 = vmatpush1.msra.mxu0 %v3760
        %3851 = vmatprep.subr.mxu0 0.0
        %3852 = vmatpush1.msra.mxu0 %v3759
        %3853 = vmatprep.subr.mxu0 0.0
        %3854 = vmatpush1.msra.mxu0 %v3758
        %3855 = vmatprep.subr.mxu0 0.0
        %3856 = vmatpush1.msra.mxu0 %v3757
        %3857 = vmatprep.subr.mxu0 0.0
        %3858 = vmatpush1.msra.mxu0 %v3756
        %3859 = vmatprep.subr.mxu0 0.0
        %3860 = vmatpush2.msra.mxu0 %v3787
        %3861 = vmatprep.subr.mxu0 0.0
        %3862 = vmatpush2.msra.mxu0 %v3786
        %3863 = vmatprep.subr.mxu0 0.0
        %3864 = vmatpush2.msra.mxu0 %v3785
        %3865 = vmatprep.subr.mxu0 0.0
        %3866 = vmatpush2.msra.mxu0 %v3784
        %3867 = vmatprep.subr.mxu0 0.0
        %3868 = vmatpush2.msra.mxu0 %v3783
        %3869 = vmatprep.subr.mxu0 0.0
        %3870 = vmatpush2.msra.mxu0 %v3782
        %3871 = vmatprep.subr.mxu0 0.0
        %3872 = vmatpush2.msra.mxu0 %v3781
        %3873 = vmatprep.subr.mxu0 0.0
        %3874 = vmatpush2.msra.mxu0 %v3780
        %3875 = vmatprep.subr.mxu0 0.0
        %3876 = vmatpush2.msra.mxu0 %v3779
        %3877 = vmatprep.subr.mxu0 0.0
        %3878 = vmatpush2.msra.mxu0 %v3778
        %3879 = vmatprep.subr.mxu0 0.0
        %3880 = vmatpush2.msra.mxu0 %v3777
        %3881 = vmatprep.subr.mxu0 0.0
        %3882 = vmatpush2.msra.mxu0 %v3776
        %3883 = vmatprep.subr.mxu0 0.0
        %3884 = vmatpush2.msra.mxu0 %v3775
        %3885 = vmatprep.subr.mxu0 0.0
        %3886 = vmatpush2.msra.mxu0 %v3774
        %3887 = vmatprep.subr.mxu0 0.0
        %3888 = vmatpush2.msra.mxu0 %v3773
        %3889 = vmatprep.subr.mxu0 0.0
        %3890 = vmatpush2.msra.mxu0 %v3772
        %3891 = vmatprep.mubr.f32.mxu0 %v3629
        %3892 = vmatmul.mubr.f32.gmra.mxu0 %v3628
        %v3893 = vpop.f32.mrf.mxu0
        %v3894 = vadd.f32 %v3825, %v3893
        %v3895 = vpop.f32.mrf.mxu0
        %3896 = vmatprep.mubr.f32.mxu0 %v3633
        %3897 = vmatmul.mubr.f32.gmra.mxu0 %v3632
        %v3898 = vpop.f32.mrf.mxu0
        %v3899 = vadd.f32 %v3825, %v3898
        %v3900 = vpop.f32.mrf.mxu0
        %3901 = vmatprep.mubr.f32.mxu0 %v3637
        %3902 = vmatmul.mubr.f32.gmra.mxu0 %v3636
        %v3903 = vpop.f32.mrf.mxu0
        %v3904 = vadd.f32 %v3825, %v3903
        %v3905 = vpop.f32.mrf.mxu0
        %3906 = vmatprep.mubr.f32.mxu0 %v3641
        %3907 = vmatmul.mubr.f32.gmra.mxu0 %v3640
        %v3908 = vpop.f32.mrf.mxu0
        %v3909 = vadd.f32 %v3825, %v3908
        %v3910 = vpop.f32.mrf.mxu0
        %3911 = vmatprep.mubr.f32.mxu0 %v3645
        %3912 = vmatmul.mubr.f32.gmra.mxu0 %v3644
        %v3913 = vpop.f32.mrf.mxu0
        %v3914 = vadd.f32 %v3825, %v3913
        %v3915 = vpop.f32.mrf.mxu0
        %3916 = vmatprep.mubr.f32.mxu0 %v3649
        %3917 = vmatmul.mubr.f32.gmra.mxu0 %v3648
        %v3918 = vpop.f32.mrf.mxu0
        %v3919 = vadd.f32 %v3825, %v3918
        %v3920 = vpop.f32.mrf.mxu0
        %3921 = vmatprep.mubr.f32.mxu0 %v3653
        %3922 = vmatmul.mubr.f32.gmra.mxu0 %v3652
        %v3923 = vpop.f32.mrf.mxu0
        %v3924 = vadd.f32 %v3825, %v3923
        %v3925 = vpop.f32.mrf.mxu0
        %3926 = vmatprep.mubr.f32.mxu0 %v3657
        %3927 = vmatmul.mubr.f32.gmra.mxu0 %v3656
        %v3928 = vpop.f32.mrf.mxu0
        %v3929 = vadd.f32 %v3825, %v3928
        %v3930 = vpop.f32.mrf.mxu0
        %3931 = vmatprep.mubr.f32.mxu0 %v3661
        %3932 = vmatmul.mubr.f32.gmra.mxu0 %v3660
        %v3933 = vpop.f32.mrf.mxu0
        %v3934 = vadd.f32 %v3825, %v3933
        %v3935 = vpop.f32.mrf.mxu0
        %3936 = vmatprep.mubr.f32.mxu0 %v3665
        %3937 = vmatmul.mubr.f32.gmra.mxu0 %v3664
        %v3938 = vpop.f32.mrf.mxu0
        %v3939 = vadd.f32 %v3825, %v3938
        %v3940 = vpop.f32.mrf.mxu0
        %3941 = vmatprep.mubr.f32.mxu0 %v3669
        %3942 = vmatmul.mubr.f32.gmra.mxu0 %v3668
        %v3943 = vpop.f32.mrf.mxu0
        %v3944 = vadd.f32 %v3825, %v3943
        %v3945 = vpop.f32.mrf.mxu0
        %3946 = vmatprep.mubr.f32.mxu0 %v3673
        %3947 = vmatmul.mubr.f32.gmra.mxu0 %v3672
        %v3948 = vpop.f32.mrf.mxu0
        %v3949 = vadd.f32 %v3825, %v3948
        %v3950 = vpop.f32.mrf.mxu0
        %3951 = vmatprep.mubr.f32.mxu0 %v3677
        %3952 = vmatmul.mubr.f32.gmra.mxu0 %v3676
        %v3953 = vpop.f32.mrf.mxu0
        %v3954 = vadd.f32 %v3825, %v3953
        %v3955 = vpop.f32.mrf.mxu0
        %3956 = vmatprep.mubr.f32.mxu0 %v3681
        %3957 = vmatmul.mubr.f32.gmra.mxu0 %v3680
        %v3958 = vpop.f32.mrf.mxu0
        %v3959 = vadd.f32 %v3825, %v3958
        %v3960 = vpop.f32.mrf.mxu0
        %3961 = vmatprep.mubr.f32.mxu0 %v3685
        %3962 = vmatmul.mubr.f32.gmra.mxu0 %v3684
        %v3963 = vpop.f32.mrf.mxu0
        %v3964 = vadd.f32 %v3825, %v3963
        %v3965 = vpop.f32.mrf.mxu0
        %3966 = vmatprep.mubr.f32.mxu0 %v3689
        %3967 = vmatmul.mubr.f32.gmra.mxu0 %v3688
        %v3968 = vpop.f32.mrf.mxu0
        %v3969 = vadd.f32 %v3825, %v3968
        %v3970 = vpop.f32.mrf.mxu0
        %3971 = vmatprep.mubr.f32.mxu0 %v3693
        %3972 = vmatmul.mubr.f32.gmra.mxu0 %v3692
        %v3973 = vpop.f32.mrf.mxu0
        %v3974 = vadd.f32 %v3825, %v3973
        %v3975 = vpop.f32.mrf.mxu0
        %3976 = vmatprep.mubr.f32.mxu0 %v3697
        %3977 = vmatmul.mubr.f32.gmra.mxu0 %v3696
        %v3978 = vpop.f32.mrf.mxu0
        %v3979 = vadd.f32 %v3825, %v3978
        %v3980 = vpop.f32.mrf.mxu0
        %3981 = vmatprep.mubr.f32.mxu0 %v3701
        %3982 = vmatmul.mubr.f32.gmra.mxu0 %v3700
        %v3983 = vpop.f32.mrf.mxu0
        %v3984 = vadd.f32 %v3825, %v3983
        %v3985 = vpop.f32.mrf.mxu0
        %3986 = vmatprep.mubr.f32.mxu0 %v3705
        %3987 = vmatmul.mubr.f32.gmra.mxu0 %v3704
        %v3988 = vpop.f32.mrf.mxu0
        %v3989 = vadd.f32 %v3825, %v3988
        %v3990 = vpop.f32.mrf.mxu0
        %3991 = vmatprep.mubr.f32.mxu0 %v3709
        %3992 = vmatmul.mubr.f32.gmra.mxu0 %v3708
        %v3993 = vpop.f32.mrf.mxu0
        %v3994 = vadd.f32 %v3825, %v3993
        %v3995 = vpop.f32.mrf.mxu0
        %3996 = vmatprep.mubr.f32.mxu0 %v3713
        %3997 = vmatmul.mubr.f32.gmra.mxu0 %v3712
        %v3998 = vpop.f32.mrf.mxu0
        %v3999 = vadd.f32 %v3825, %v3998
        %v4000 = vpop.f32.mrf.mxu0
        %4001 = vmatprep.mubr.f32.mxu0 %v3717
        %4002 = vmatmul.mubr.f32.gmra.mxu0 %v3716
        %v4003 = vpop.f32.mrf.mxu0
        %v4004 = vadd.f32 %v3825, %v4003
        %v4005 = vpop.f32.mrf.mxu0
        %4006 = vmatprep.mubr.f32.mxu0 %v3721
        %4007 = vmatmul.mubr.f32.gmra.mxu0 %v3720
        %v4008 = vpop.f32.mrf.mxu0
        %v4009 = vadd.f32 %v3825, %v4008
        %v4010 = vpop.f32.mrf.mxu0
        %4011 = vmatprep.mubr.f32.mxu0 %v3725
        %4012 = vmatmul.mubr.f32.gmra.mxu0 %v3724
        %v4013 = vpop.f32.mrf.mxu0
        %v4014 = vadd.f32 %v3825, %v4013
        %v4015 = vpop.f32.mrf.mxu0
        %4016 = vmatprep.mubr.f32.mxu0 %v3729
        %4017 = vmatmul.mubr.f32.gmra.mxu0 %v3728
        %v4018 = vpop.f32.mrf.mxu0
        %v4019 = vadd.f32 %v3825, %v4018
        %v4020 = vpop.f32.mrf.mxu0
        %4021 = vmatprep.mubr.f32.mxu0 %v3733
        %4022 = vmatmul.mubr.f32.gmra.mxu0 %v3732
        %v4023 = vpop.f32.mrf.mxu0
        %v4024 = vadd.f32 %v3825, %v4023
        %v4025 = vpop.f32.mrf.mxu0
        %4026 = vmatprep.mubr.f32.mxu0 %v3737
        %4027 = vmatmul.mubr.f32.gmra.mxu0 %v3736
        %v4028 = vpop.f32.mrf.mxu0
        %v4029 = vadd.f32 %v3825, %v4028
        %v4030 = vpop.f32.mrf.mxu0
        %4031 = vmatprep.mubr.f32.mxu0 %v3741
        %4032 = vmatmul.mubr.f32.gmra.mxu0 %v3740
        %v4033 = vpop.f32.mrf.mxu0
        %v4034 = vadd.f32 %v3825, %v4033
        %v4035 = vpop.f32.mrf.mxu0
        %4036 = vmatprep.mubr.f32.mxu0 %v3745
        %4037 = vmatmul.mubr.f32.gmra.mxu0 %v3744
        %v4038 = vpop.f32.mrf.mxu0
        %v4039 = vadd.f32 %v3825, %v4038
        %v4040 = vpop.f32.mrf.mxu0
        %4041 = vmatprep.mubr.f32.mxu0 %v3749
        %4042 = vmatmul.mubr.f32.gmra.mxu0 %v3748
        %v4043 = vpop.f32.mrf.mxu0
        %v4044 = vadd.f32 %v3825, %v4043
        %v4045 = vpop.f32.mrf.mxu0
        %4046 = vmatprep.mubr.f32.mxu0 %v3753
        %4047 = vmatmul.mubr.f32.gmra.mxu0 %v3752
        %v4048 = vpop.f32.mrf.mxu0
        %v4049 = vadd.f32 %v3825, %v4048
        %v4050 = vpop.f32.mrf.mxu0
        %4051 = vdwg.mxu0
        %4052 = vmatprep.subr.mxu0 0.0
        %4053 = vmatpush1.msra.mxu0 %v3803
        %4054 = vmatprep.subr.mxu0 0.0
        %4055 = vmatpush1.msra.mxu0 %v3802
        %4056 = vmatprep.subr.mxu0 0.0
        %4057 = vmatpush1.msra.mxu0 %v3801
        %4058 = vmatprep.subr.mxu0 0.0
        %4059 = vmatpush1.msra.mxu0 %v3800
        %4060 = vmatprep.subr.mxu0 0.0
        %4061 = vmatpush1.msra.mxu0 %v3799
        %4062 = vmatprep.subr.mxu0 0.0
        %4063 = vmatpush1.msra.mxu0 %v3798
        %4064 = vmatprep.subr.mxu0 0.0
        %4065 = vmatpush1.msra.mxu0 %v3797
        %4066 = vmatprep.subr.mxu0 0.0
        %4067 = vmatpush1.msra.mxu0 %v3796
        %4068 = vmatprep.subr.mxu0 0.0
        %4069 = vmatpush1.msra.mxu0 %v3795
        %4070 = vmatprep.subr.mxu0 0.0
        %4071 = vmatpush1.msra.mxu0 %v3794
        %4072 = vmatprep.subr.mxu0 0.0
        %4073 = vmatpush1.msra.mxu0 %v3793
        %4074 = vmatprep.subr.mxu0 0.0
        %4075 = vmatpush1.msra.mxu0 %v3792
        %4076 = vmatprep.subr.mxu0 0.0
        %4077 = vmatpush1.msra.mxu0 %v3791
        %4078 = vmatprep.subr.mxu0 0.0
        %4079 = vmatpush1.msra.mxu0 %v3790
        %4080 = vmatprep.subr.mxu0 0.0
        %4081 = vmatpush1.msra.mxu0 %v3789
        %4082 = vmatprep.subr.mxu0 0.0
        %4083 = vmatpush1.msra.mxu0 %v3788
        %4084 = vmatprep.subr.mxu0 0.0
        %4085 = vmatpush2.msra.mxu0 %v3819
        %4086 = vmatprep.subr.mxu0 0.0
        %4087 = vmatpush2.msra.mxu0 %v3818
        %4088 = vmatprep.subr.mxu0 0.0
        %4089 = vmatpush2.msra.mxu0 %v3817
        %4090 = vmatprep.subr.mxu0 0.0
        %4091 = vmatpush2.msra.mxu0 %v3816
        %4092 = vmatprep.subr.mxu0 0.0
        %4093 = vmatpush2.msra.mxu0 %v3815
        %4094 = vmatprep.subr.mxu0 0.0
        %4095 = vmatpush2.msra.mxu0 %v3814
        %4096 = vmatprep.subr.mxu0 0.0
        %4097 = vmatpush2.msra.mxu0 %v3813
        %4098 = vmatprep.subr.mxu0 0.0
        %4099 = vmatpush2.msra.mxu0 %v3812
        %4100 = vmatprep.subr.mxu0 0.0
        %4101 = vmatpush2.msra.mxu0 %v3811
        %4102 = vmatprep.subr.mxu0 0.0
        %4103 = vmatpush2.msra.mxu0 %v3810
        %4104 = vmatprep.subr.mxu0 0.0
        %4105 = vmatpush2.msra.mxu0 %v3809
        %4106 = vmatprep.subr.mxu0 0.0
        %4107 = vmatpush2.msra.mxu0 %v3808
        %4108 = vmatprep.subr.mxu0 0.0
        %4109 = vmatpush2.msra.mxu0 %v3807
        %4110 = vmatprep.subr.mxu0 0.0
        %4111 = vmatpush2.msra.mxu0 %v3806
        %4112 = vmatprep.subr.mxu0 0.0
        %4113 = vmatpush2.msra.mxu0 %v3805
        %4114 = vmatprep.subr.mxu0 0.0
        %4115 = vmatpush2.msra.mxu0 %v3804
        %4116 = vmatprep.mubr.f32.mxu0 %v3631
        %4117 = vmatmul.mubr.f32.gmra.mxu0 %v3630
        %v4118 = vpop.f32.mrf.mxu0
        %v4119 = vadd.f32 %v3894, %v4118
        %v4120 = vpop.f32.mrf.mxu0
        %4121 = vmatprep.mubr.f32.mxu0 %v3635
        %4122 = vmatmul.mubr.f32.gmra.mxu0 %v3634
        %v4123 = vpop.f32.mrf.mxu0
        %v4124 = vadd.f32 %v3899, %v4123
        %v4125 = vpop.f32.mrf.mxu0
        %4126 = vmatprep.mubr.f32.mxu0 %v3639
        %4127 = vmatmul.mubr.f32.gmra.mxu0 %v3638
        %v4128 = vpop.f32.mrf.mxu0
        %v4129 = vadd.f32 %v3904, %v4128
        %v4130 = vpop.f32.mrf.mxu0
        %4131 = vmatprep.mubr.f32.mxu0 %v3643
        %4132 = vmatmul.mubr.f32.gmra.mxu0 %v3642
        %v4133 = vpop.f32.mrf.mxu0
        %v4134 = vadd.f32 %v3909, %v4133
        %v4135 = vpop.f32.mrf.mxu0
        %4136 = vmatprep.mubr.f32.mxu0 %v3647
        %4137 = vmatmul.mubr.f32.gmra.mxu0 %v3646
        %v4138 = vpop.f32.mrf.mxu0
        %v4139 = vadd.f32 %v3914, %v4138
        %v4140 = vpop.f32.mrf.mxu0
        %4141 = vmatprep.mubr.f32.mxu0 %v3651
        %4142 = vmatmul.mubr.f32.gmra.mxu0 %v3650
        %v4143 = vpop.f32.mrf.mxu0
        %v4144 = vadd.f32 %v3919, %v4143
        %v4145 = vpop.f32.mrf.mxu0
        %4146 = vmatprep.mubr.f32.mxu0 %v3655
        %4147 = vmatmul.mubr.f32.gmra.mxu0 %v3654
        %v4148 = vpop.f32.mrf.mxu0
        %v4149 = vadd.f32 %v3924, %v4148
        %v4150 = vpop.f32.mrf.mxu0
        %4151 = vmatprep.mubr.f32.mxu0 %v3659
        %4152 = vmatmul.mubr.f32.gmra.mxu0 %v3658
        %v4153 = vpop.f32.mrf.mxu0
        %v4154 = vadd.f32 %v3929, %v4153
        %v4155 = vpop.f32.mrf.mxu0
        %4156 = vmatprep.mubr.f32.mxu0 %v3663
        %4157 = vmatmul.mubr.f32.gmra.mxu0 %v3662
        %v4158 = vpop.f32.mrf.mxu0
        %v4159 = vadd.f32 %v3934, %v4158
        %v4160 = vpop.f32.mrf.mxu0
        %4161 = vmatprep.mubr.f32.mxu0 %v3667
        %4162 = vmatmul.mubr.f32.gmra.mxu0 %v3666
        %v4163 = vpop.f32.mrf.mxu0
        %v4164 = vadd.f32 %v3939, %v4163
        %v4165 = vpop.f32.mrf.mxu0
        %4166 = vmatprep.mubr.f32.mxu0 %v3671
        %4167 = vmatmul.mubr.f32.gmra.mxu0 %v3670
        %v4168 = vpop.f32.mrf.mxu0
        %v4169 = vadd.f32 %v3944, %v4168
        %v4170 = vpop.f32.mrf.mxu0
        %4171 = vmatprep.mubr.f32.mxu0 %v3675
        %4172 = vmatmul.mubr.f32.gmra.mxu0 %v3674
        %v4173 = vpop.f32.mrf.mxu0
        %v4174 = vadd.f32 %v3949, %v4173
        %v4175 = vpop.f32.mrf.mxu0
        %4176 = vmatprep.mubr.f32.mxu0 %v3679
        %4177 = vmatmul.mubr.f32.gmra.mxu0 %v3678
        %v4178 = vpop.f32.mrf.mxu0
        %v4179 = vadd.f32 %v3954, %v4178
        %v4180 = vpop.f32.mrf.mxu0
        %4181 = vmatprep.mubr.f32.mxu0 %v3683
        %4182 = vmatmul.mubr.f32.gmra.mxu0 %v3682
        %v4183 = vpop.f32.mrf.mxu0
        %v4184 = vadd.f32 %v3959, %v4183
        %v4185 = vpop.f32.mrf.mxu0
        %4186 = vmatprep.mubr.f32.mxu0 %v3687
        %4187 = vmatmul.mubr.f32.gmra.mxu0 %v3686
        %v4188 = vpop.f32.mrf.mxu0
        %v4189 = vadd.f32 %v3964, %v4188
        %v4190 = vpop.f32.mrf.mxu0
        %4191 = vmatprep.mubr.f32.mxu0 %v3691
        %4192 = vmatmul.mubr.f32.gmra.mxu0 %v3690
        %v4193 = vpop.f32.mrf.mxu0
        %v4194 = vadd.f32 %v3969, %v4193
        %v4195 = vpop.f32.mrf.mxu0
        %4196 = vmatprep.mubr.f32.mxu0 %v3695
        %4197 = vmatmul.mubr.f32.gmra.mxu0 %v3694
        %v4198 = vpop.f32.mrf.mxu0
        %v4199 = vadd.f32 %v3974, %v4198
        %v4200 = vpop.f32.mrf.mxu0
        %4201 = vmatprep.mubr.f32.mxu0 %v3699
        %4202 = vmatmul.mubr.f32.gmra.mxu0 %v3698
        %v4203 = vpop.f32.mrf.mxu0
        %v4204 = vadd.f32 %v3979, %v4203
        %v4205 = vpop.f32.mrf.mxu0
        %4206 = vmatprep.mubr.f32.mxu0 %v3703
        %4207 = vmatmul.mubr.f32.gmra.mxu0 %v3702
        %v4208 = vpop.f32.mrf.mxu0
        %v4209 = vadd.f32 %v3984, %v4208
        %v4210 = vpop.f32.mrf.mxu0
        %4211 = vmatprep.mubr.f32.mxu0 %v3707
        %4212 = vmatmul.mubr.f32.gmra.mxu0 %v3706
        %v4213 = vpop.f32.mrf.mxu0
        %v4214 = vadd.f32 %v3989, %v4213
        %v4215 = vpop.f32.mrf.mxu0
        %4216 = vmatprep.mubr.f32.mxu0 %v3711
        %4217 = vmatmul.mubr.f32.gmra.mxu0 %v3710
        %v4218 = vpop.f32.mrf.mxu0
        %v4219 = vadd.f32 %v3994, %v4218
        %v4220 = vpop.f32.mrf.mxu0
        %4221 = vmatprep.mubr.f32.mxu0 %v3715
        %4222 = vmatmul.mubr.f32.gmra.mxu0 %v3714
        %v4223 = vpop.f32.mrf.mxu0
        %v4224 = vadd.f32 %v3999, %v4223
        %v4225 = vpop.f32.mrf.mxu0
        %4226 = vmatprep.mubr.f32.mxu0 %v3719
        %4227 = vmatmul.mubr.f32.gmra.mxu0 %v3718
        %v4228 = vpop.f32.mrf.mxu0
        %v4229 = vadd.f32 %v4004, %v4228
        %v4230 = vpop.f32.mrf.mxu0
        %4231 = vmatprep.mubr.f32.mxu0 %v3723
        %4232 = vmatmul.mubr.f32.gmra.mxu0 %v3722
        %v4233 = vpop.f32.mrf.mxu0
        %v4234 = vadd.f32 %v4009, %v4233
        %v4235 = vpop.f32.mrf.mxu0
        %4236 = vmatprep.mubr.f32.mxu0 %v3727
        %4237 = vmatmul.mubr.f32.gmra.mxu0 %v3726
        %v4238 = vpop.f32.mrf.mxu0
        %v4239 = vadd.f32 %v4014, %v4238
        %v4240 = vpop.f32.mrf.mxu0
        %4241 = vmatprep.mubr.f32.mxu0 %v3731
        %4242 = vmatmul.mubr.f32.gmra.mxu0 %v3730
        %v4243 = vpop.f32.mrf.mxu0
        %v4244 = vadd.f32 %v4019, %v4243
        %v4245 = vpop.f32.mrf.mxu0
        %4246 = vmatprep.mubr.f32.mxu0 %v3735
        %4247 = vmatmul.mubr.f32.gmra.mxu0 %v3734
        %v4248 = vpop.f32.mrf.mxu0
        %v4249 = vadd.f32 %v4024, %v4248
        %v4250 = vpop.f32.mrf.mxu0
        %4251 = vmatprep.mubr.f32.mxu0 %v3739
        %4252 = vmatmul.mubr.f32.gmra.mxu0 %v3738
        %v4253 = vpop.f32.mrf.mxu0
        %v4254 = vadd.f32 %v4029, %v4253
        %v4255 = vpop.f32.mrf.mxu0
        %4256 = vmatprep.mubr.f32.mxu0 %v3743
        %4257 = vmatmul.mubr.f32.gmra.mxu0 %v3742
        %v4258 = vpop.f32.mrf.mxu0
        %v4259 = vadd.f32 %v4034, %v4258
        %v4260 = vpop.f32.mrf.mxu0
        %4261 = vmatprep.mubr.f32.mxu0 %v3747
        %4262 = vmatmul.mubr.f32.gmra.mxu0 %v3746
        %v4263 = vpop.f32.mrf.mxu0
        %v4264 = vadd.f32 %v4039, %v4263
        %v4265 = vpop.f32.mrf.mxu0
        %4266 = vmatprep.mubr.f32.mxu0 %v3751
        %4267 = vmatmul.mubr.f32.gmra.mxu0 %v3750
        %v4268 = vpop.f32.mrf.mxu0
        %v4269 = vadd.f32 %v4044, %v4268
        %v4270 = vpop.f32.mrf.mxu0
        %4271 = vmatprep.mubr.f32.mxu0 %v3755
        %4272 = vmatmul.mubr.f32.gmra.mxu0 %v3754
        %v4273 = vpop.f32.mrf.mxu0
        %v4274 = vadd.f32 %v4049, %v4273
        %v4275 = vpop.f32.mrf.mxu0
        %4276 = vdwg.mxu0
        %v4277 = vtanh.pop %v4119
        %v4278 = vtanh.pop %v4124
        %v4279 = vtanh.pop %v4129
        %v4280 = vtanh.pop %v4134
        %v4281 = vtanh.pop %v4139
        %v4282 = vtanh.pop %v4144
        %v4283 = vtanh.pop %v4149
        %v4284 = vtanh.pop %v4154
        %v4285 = vtanh.pop %v4159
        %v4286 = vtanh.pop %v4164
        %v4287 = vtanh.pop %v4169
        %v4288 = vtanh.pop %v4174
        %v4289 = vtanh.pop %v4179
        %v4290 = vtanh.pop %v4184
        %v4291 = vtanh.pop %v4189
        %v4292 = vtanh.pop %v4194
        %v4293 = vtanh.pop %v4199
        %v4294 = vtanh.pop %v4204
        %v4295 = vtanh.pop %v4209
        %v4296 = vtanh.pop %v4214
        %v4297 = vtanh.pop %v4219
        %v4298 = vtanh.pop %v4224
        %v4299 = vtanh.pop %v4229
        %v4300 = vtanh.pop %v4234
        %v4301 = vtanh.pop %v4239
        %v4302 = vtanh.pop %v4244
        %v4303 = vtanh.pop %v4249
        %v4304 = vtanh.pop %v4254
        %v4305 = vtanh.pop %v4259
        %v4306 = vtanh.pop %v4264
        %v4307 = vtanh.pop %v4269
        %v4308 = vtanh.pop %v4274
        %v4309 = vld [vmem:[%s6] sm:$0x1]
        %v4311 = vlaneseq
        %v4312 = vshrl.u32 %v4311, 7
        %v4313 = vsub.s32 0, %v4312
        %v4314 = vrot.slane %v4309, %v4313
        %v4316 = vmul.f32 %v4277, %v4314
        %v4317 = vmul.f32 %v4278, %v4314
        %v4318 = vmul.f32 %v4279, %v4314
        %v4319 = vmul.f32 %v4280, %v4314
        %v4320 = vmul.f32 %v4281, %v4314
        %v4321 = vmul.f32 %v4282, %v4314
        %v4322 = vmul.f32 %v4283, %v4314
        %v4323 = vmul.f32 %v4284, %v4314
        %v4324 = vmul.f32 %v4285, %v4314
        %v4325 = vmul.f32 %v4286, %v4314
        %v4326 = vmul.f32 %v4287, %v4314
        %v4327 = vmul.f32 %v4288, %v4314
        %v4328 = vmul.f32 %v4289, %v4314
        %v4329 = vmul.f32 %v4290, %v4314
        %v4330 = vmul.f32 %v4291, %v4314
        %v4331 = vmul.f32 %v4292, %v4314
        %v4332 = vmul.f32 %v4293, %v4314
        %v4333 = vmul.f32 %v4294, %v4314
        %v4334 = vmul.f32 %v4295, %v4314
        %v4335 = vmul.f32 %v4296, %v4314
        %v4336 = vmul.f32 %v4297, %v4314
        %v4337 = vmul.f32 %v4298, %v4314
        %v4338 = vmul.f32 %v4299, %v4314
        %v4339 = vmul.f32 %v4300, %v4314
        %v4340 = vmul.f32 %v4301, %v4314
        %v4341 = vmul.f32 %v4302, %v4314
        %v4342 = vmul.f32 %v4303, %v4314
        %v4343 = vmul.f32 %v4304, %v4314
        %v4344 = vmul.f32 %v4305, %v4314
        %v4345 = vmul.f32 %v4306, %v4314
        %v4346 = vmul.f32 %v4307, %v4314
        %v4347 = vmul.f32 %v4308, %v4314
        %vm4348 = vcmask 80896
        %v4349 = vsel %vm4348, %v4316, 0.0
        %4350 = vadd.xlane.f32.xlu0 %v4349
        %v4351 = vpop.xlane.xlu0 %4350
        %v4352 = vsel %vm4348, %v4317, 0.0
        %4353 = vadd.xlane.f32.xlu0 %v4352
        %v4354 = vpop.xlane.xlu0 %4353
        %v4355 = vsel %vm4348, %v4318, 0.0
        %4356 = vadd.xlane.f32.xlu0 %v4355
        %v4357 = vpop.xlane.xlu0 %4356
        %v4358 = vsel %vm4348, %v4319, 0.0
        %4359 = vadd.xlane.f32.xlu0 %v4358
        %v4360 = vpop.xlane.xlu0 %4359
        %v4361 = vsel %vm4348, %v4320, 0.0
        %4362 = vadd.xlane.f32.xlu0 %v4361
        %v4363 = vpop.xlane.xlu0 %4362
        %v4364 = vsel %vm4348, %v4321, 0.0
        %4365 = vadd.xlane.f32.xlu0 %v4364
        %v4366 = vpop.xlane.xlu0 %4365
        %v4367 = vsel %vm4348, %v4322, 0.0
        %4368 = vadd.xlane.f32.xlu0 %v4367
        %v4369 = vpop.xlane.xlu0 %4368
        %v4370 = vsel %vm4348, %v4323, 0.0
        %4371 = vadd.xlane.f32.xlu0 %v4370
        %v4372 = vpop.xlane.xlu0 %4371
        %v4373 = vsel %vm4348, %v4324, 0.0
        %4374 = vadd.xlane.f32.xlu0 %v4373
        %v4375 = vpop.xlane.xlu0 %4374
        %v4376 = vsel %vm4348, %v4325, 0.0
        %4377 = vadd.xlane.f32.xlu0 %v4376
        %v4378 = vpop.xlane.xlu0 %4377
        %v4379 = vsel %vm4348, %v4326, 0.0
        %4380 = vadd.xlane.f32.xlu0 %v4379
        %v4381 = vpop.xlane.xlu0 %4380
        %v4382 = vsel %vm4348, %v4327, 0.0
        %4383 = vadd.xlane.f32.xlu0 %v4382
        %v4384 = vpop.xlane.xlu0 %4383
        %v4385 = vsel %vm4348, %v4328, 0.0
        %4386 = vadd.xlane.f32.xlu0 %v4385
        %v4387 = vpop.xlane.xlu0 %4386
        %v4388 = vsel %vm4348, %v4329, 0.0
        %4389 = vadd.xlane.f32.xlu0 %v4388
        %v4390 = vpop.xlane.xlu0 %4389
        %v4391 = vsel %vm4348, %v4330, 0.0
        %4392 = vadd.xlane.f32.xlu0 %v4391
        %v4393 = vpop.xlane.xlu0 %4392
        %v4394 = vsel %vm4348, %v4331, 0.0
        %4395 = vadd.xlane.f32.xlu0 %v4394
        %v4396 = vpop.xlane.xlu0 %4395
        %v4397 = vsel %vm4348, %v4332, 0.0
        %4398 = vadd.xlane.f32.xlu0 %v4397
        %v4399 = vpop.xlane.xlu0 %4398
        %v4400 = vsel %vm4348, %v4333, 0.0
        %4401 = vadd.xlane.f32.xlu0 %v4400
        %v4402 = vpop.xlane.xlu0 %4401
        %v4403 = vsel %vm4348, %v4334, 0.0
        %4404 = vadd.xlane.f32.xlu0 %v4403
        %v4405 = vpop.xlane.xlu0 %4404
        %v4406 = vsel %vm4348, %v4335, 0.0
        %4407 = vadd.xlane.f32.xlu0 %v4406
        %v4408 = vpop.xlane.xlu0 %4407
        %v4409 = vsel %vm4348, %v4336, 0.0
        %4410 = vadd.xlane.f32.xlu0 %v4409
        %v4411 = vpop.xlane.xlu0 %4410
        %v4412 = vsel %vm4348, %v4337, 0.0
        %4413 = vadd.xlane.f32.xlu0 %v4412
        %v4414 = vpop.xlane.xlu0 %4413
        %v4415 = vsel %vm4348, %v4338, 0.0
        %4416 = vadd.xlane.f32.xlu0 %v4415
        %v4417 = vpop.xlane.xlu0 %4416
        %v4418 = vsel %vm4348, %v4339, 0.0
        %4419 = vadd.xlane.f32.xlu0 %v4418
        %v4420 = vpop.xlane.xlu0 %4419
        %v4421 = vsel %vm4348, %v4340, 0.0
        %4422 = vadd.xlane.f32.xlu0 %v4421
        %v4423 = vpop.xlane.xlu0 %4422
        %v4424 = vsel %vm4348, %v4341, 0.0
        %4425 = vadd.xlane.f32.xlu0 %v4424
        %v4426 = vpop.xlane.xlu0 %4425
        %v4427 = vsel %vm4348, %v4342, 0.0
        %4428 = vadd.xlane.f32.xlu0 %v4427
        %v4429 = vpop.xlane.xlu0 %4428
        %v4430 = vsel %vm4348, %v4343, 0.0
        %4431 = vadd.xlane.f32.xlu0 %v4430
        %v4432 = vpop.xlane.xlu0 %4431
        %v4433 = vsel %vm4348, %v4344, 0.0
        %4434 = vadd.xlane.f32.xlu0 %v4433
        %v4435 = vpop.xlane.xlu0 %4434
        %v4436 = vsel %vm4348, %v4345, 0.0
        %4437 = vadd.xlane.f32.xlu0 %v4436
        %v4438 = vpop.xlane.xlu0 %4437
        %v4439 = vsel %vm4348, %v4346, 0.0
        %4440 = vadd.xlane.f32.xlu0 %v4439
        %v4441 = vpop.xlane.xlu0 %4440
        %v4442 = vsel %vm4348, %v4347, 0.0
        %4443 = vadd.xlane.f32.xlu0 %v4442
        %v4444 = vpop.xlane.xlu0 %4443
        %v4445 = vld [vmem:[#allocation2] sm:$0x1]
        %v4447 = vlaneseq
        %v4448 = vshrl.u32 %v4447, 7
        %v4449 = vsub.s32 0, %v4448
        %v4450 = vrot.slane %v4445, %v4449
        %v4452 = vadd.f32 %v4351, %v4450
        %v4453 = vadd.f32 %v4354, %v4450
        %v4454 = vadd.f32 %v4357, %v4450
        %v4455 = vadd.f32 %v4360, %v4450
        %v4456 = vadd.f32 %v4363, %v4450
        %v4457 = vadd.f32 %v4366, %v4450
        %v4458 = vadd.f32 %v4369, %v4450
        %v4459 = vadd.f32 %v4372, %v4450
        %v4460 = vadd.f32 %v4375, %v4450
        %v4461 = vadd.f32 %v4378, %v4450
        %v4462 = vadd.f32 %v4381, %v4450
        %v4463 = vadd.f32 %v4384, %v4450
        %v4464 = vadd.f32 %v4387, %v4450
        %v4465 = vadd.f32 %v4390, %v4450
        %v4466 = vadd.f32 %v4393, %v4450
        %v4467 = vadd.f32 %v4396, %v4450
        %v4468 = vadd.f32 %v4399, %v4450
        %v4469 = vadd.f32 %v4402, %v4450
        %v4470 = vadd.f32 %v4405, %v4450
        %v4471 = vadd.f32 %v4408, %v4450
        %v4472 = vadd.f32 %v4411, %v4450
        %v4473 = vadd.f32 %v4414, %v4450
        %v4474 = vadd.f32 %v4417, %v4450
        %v4475 = vadd.f32 %v4420, %v4450
        %v4476 = vadd.f32 %v4423, %v4450
        %v4477 = vadd.f32 %v4426, %v4450
        %v4478 = vadd.f32 %v4429, %v4450
        %v4479 = vadd.f32 %v4432, %v4450
        %v4480 = vadd.f32 %v4435, %v4450
        %v4481 = vadd.f32 %v4438, %v4450
        %v4482 = vadd.f32 %v4441, %v4450
        %v4483 = vadd.f32 %v4444, %v4450
        %vm4484 = vcmask 7168
        %4485 = vst.msk [vmem:[%s880] sm:$0xff] %vm4484, %v4452
        %4486 = vst.msk [vmem:[%s880 + $0x8] sm:$0xff] %vm4484, %v4453
        %4487 = vst.msk [vmem:[%s880 + $0x10] sm:$0xff] %vm4484, %v4454
        %4488 = vst.msk [vmem:[%s880 + $0x18] sm:$0xff] %vm4484, %v4455
        %4489 = vst.msk [vmem:[%s880 + $0x20] sm:$0xff] %vm4484, %v4456
        %4490 = vst.msk [vmem:[%s880 + $0x28] sm:$0xff] %vm4484, %v4457
        %4491 = vst.msk [vmem:[%s880 + $0x30] sm:$0xff] %vm4484, %v4458
        %4492 = vst.msk [vmem:[%s880 + $0x38] sm:$0xff] %vm4484, %v4459
        %4493 = vst.msk [vmem:[%s880 + $0x40] sm:$0xff] %vm4484, %v4460
        %4494 = vst.msk [vmem:[%s880 + $0x48] sm:$0xff] %vm4484, %v4461
        %4495 = vst.msk [vmem:[%s880 + $0x50] sm:$0xff] %vm4484, %v4462
        %4496 = vst.msk [vmem:[%s880 + $0x58] sm:$0xff] %vm4484, %v4463
        %4497 = vst.msk [vmem:[%s880 + $0x60] sm:$0xff] %vm4484, %v4464
        %4498 = vst.msk [vmem:[%s880 + $0x68] sm:$0xff] %vm4484, %v4465
        %4499 = vst.msk [vmem:[%s880 + $0x70] sm:$0xff] %vm4484, %v4466
        %4500 = vst.msk [vmem:[%s880 + $0x78] sm:$0xff] %vm4484, %v4467
        %4501 = vst.msk [vmem:[%s880 + $0x80] sm:$0xff] %vm4484, %v4468
        %4502 = vst.msk [vmem:[%s880 + $0x88] sm:$0xff] %vm4484, %v4469
        %4503 = vst.msk [vmem:[%s880 + $0x90] sm:$0xff] %vm4484, %v4470
        %4504 = vst.msk [vmem:[%s880 + $0x98] sm:$0xff] %vm4484, %v4471
        %4505 = vst.msk [vmem:[%s880 + $0xa0] sm:$0xff] %vm4484, %v4472
        %4506 = vst.msk [vmem:[%s880 + $0xa8] sm:$0xff] %vm4484, %v4473
        %4507 = vst.msk [vmem:[%s880 + $0xb0] sm:$0xff] %vm4484, %v4474
        %4508 = vst.msk [vmem:[%s880 + $0xb8] sm:$0xff] %vm4484, %v4475
        %4509 = vst.msk [vmem:[%s880 + $0xc0] sm:$0xff] %vm4484, %v4476
        %4510 = vst.msk [vmem:[%s880 + $0xc8] sm:$0xff] %vm4484, %v4477
        %4511 = vst.msk [vmem:[%s880 + $0xd0] sm:$0xff] %vm4484, %v4478
        %4512 = vst.msk [vmem:[%s880 + $0xd8] sm:$0xff] %vm4484, %v4479
        %4513 = vst.msk [vmem:[%s880 + $0xe0] sm:$0xff] %vm4484, %v4480
        %4514 = vst.msk [vmem:[%s880 + $0xe8] sm:$0xff] %vm4484, %v4481
        %4515 = vst.msk [vmem:[%s880 + $0xf0] sm:$0xff] %vm4484, %v4482
        %4516 = vst.msk [vmem:[%s880 + $0xf8] sm:$0xff] %vm4484, %v4483
        %s4517 = smul.u32 32, %s21
        %p4518 = scmp.lt.s32.totalorder %s4517, 95
        %s4519 = scalar_select %p4518, %s4517, 95
        %s4520 = smul.addr %s4519, 8
        %s4521 = scalar_lea.vmem %s8, %s4520
        // Predicated region
        $region99: #{masked_model1_forward.1} parent=89 // pred_check
          %p4522 = pneg %p217
        $region100: #{masked_model1_forward.1} parent=89 // pred_check_branch
          %4524 = sbr.rel (%p4522) target = $region102
        $region101: #{masked_model1_forward.1} parent=89 // pred_region
          %s4525 = smul.u32 32, %s21
        $region102: #{masked_model1_forward.1} parent=89 // pred_fallthru
          _
      $region90: #{masked_model1_forward.1} parent=5 // pred_fallthru
        _
      %p4526 = scmp.le.s32.totalorder 2, %s16
      // Predicated region
      $region103: #{masked_model1_forward.1} parent=5 // pred_check
        %p4527 = pneg %p4526
      $region104: #{masked_model1_forward.1} parent=5 // pred_check_branch
        %4529 = sbr.rel (%p4527) target = $region106
      $region105: #{masked_model1_forward.1} parent=5 // pred_region
        %s4530 = ssub.s32 %s16, 2
        // Predicated region
        $region107: #{masked_model1_forward.1} parent=105 // pred_check
          %p4531 = pneg %p223
        $region108: #{masked_model1_forward.1} parent=105 // pred_check_branch
          %4533 = sbr.rel (%p4531) target = $region110
        $region109: #{masked_model1_forward.1} parent=105 // pred_region
          %s4534 = smul.u32 32, %s22
          %p4535 = scmp.lt.s32.totalorder %s4534, 95
          %s4536 = scalar_select %p4535, %s4534, 95
          %s4537 = smul.addr %s4536, 8
          %s4538 = scalar_lea.vmem %s8, %s4537
        $region110: #{masked_model1_forward.1} parent=105 // pred_fallthru
          _
      $region106: #{masked_model1_forward.1} parent=5 // pred_fallthru
        _
    $region6: #{masked_model1_forward.1} parent=1 // loop_footer
      %s20 = sadd.s32 1, %s16
    $region7: #{masked_model1_forward.1} parent=1 // loop_footer_branch
      %15 = sbr.rel target = $region3
    $region8: #{masked_model1_forward.1} parent=1 // loop_exit
      _

</llo_original>
